<compile_context>
chip_gen: v5e
topology: v5e:2x2
jax: 0.10.0
libtpu: 0.0.40
codegen_flags: <defaults>
</compile_context>

<pallas_src>
import jax
import jax.numpy as jnp
from jax.experimental import pallas as pl
from jax.experimental.pallas import tpu as pltpu

n_embd = 256                       # fixed by the reference module
num_heads = 4
head_size = n_embd // num_heads    # 64


def mha_fused_kernel(x_ref, wqkv_ref, wp_ref, bp_ref, o_ref, qkv_ref, cat_ref):
    """One batch element: fused QKV proj + H causal heads + output proj."""
    T = x_ref.shape[1]

    # Fused, lane-dense QKV projection: (T, 256) @ (256, 768), bf16 on the MXU.
    # The 1/sqrt(head_size) scale is pre-folded into the Q columns of wqkv.
    x = x_ref[0].astype(jnp.bfloat16)
    qkv = jnp.dot(x, wqkv_ref[...], preferred_element_type=jnp.float32)
    qkv_ref[...] = qkv.astype(jnp.bfloat16)      # park in VMEM, bound live ranges

    # Causal mask, built once and reused by every head.
    row = jax.lax.broadcasted_iota(jnp.int32, (T, T), 0)
    col = jax.lax.broadcasted_iota(jnp.int32, (T, T), 1)
    causal = row >= col

    # num_heads is small and static: fully unrolled head loop. Each head writes
    # its normalized output into the concat scratch; the output projection is
    # then a single lane-dense K=256 matmul (no K=64 MXU under-fill).
    for h in range(num_heads):
        lo, hi = h * head_size, (h + 1) * head_size
        qh = qkv_ref[:, lo:hi]                               # (T, hs) bf16
        kh = qkv_ref[:, n_embd + lo:n_embd + hi]
        vh = qkv_ref[:, 2 * n_embd + lo:2 * n_embd + hi]

        # q @ k^T without materializing k.T (contract last dims on the MXU).
        s = jax.lax.dot_general(
            qh, kh, dimension_numbers=(((1,), (1,)), ((), ())),
            preferred_element_type=jnp.float32)              # (T, T) f32
        s = jnp.where(causal, s, -1e30)                      # finite mask value

        # Numerically stable softmax in f32; exact reciprocal applied to the
        # small (T, hs) head output instead of dividing the (T, T) prob tile.
        s = s - jnp.max(s, axis=-1, keepdims=True)
        p = jnp.exp(s)
        l = jnp.sum(p, axis=-1, keepdims=True)               # (T, 1)
        head_out = jnp.dot(p.astype(jnp.bfloat16), vh,
                           preferred_element_type=jnp.float32)   # (T, hs)
        cat_ref[:, lo:hi] = (head_out * (1.0 / l)).astype(jnp.bfloat16)

    # Output projection: one (T, 256) @ (256, 256) bf16 matmul + bias.
    out = jnp.dot(cat_ref[...], wp_ref[...], preferred_element_type=jnp.float32)
    o_ref[0] = (out + bp_ref[...]).astype(o_ref.dtype)
    # TODO(synk): training-mode dropout (attention-prob & output dropout) not implemented.


def multi_head_attention(x, wqkv_bf16, wp_bf16, bp):
    B, T, C = x.shape
    return pl.pallas_call(
        mha_fused_kernel,
        out_shape=jax.ShapeDtypeStruct((B, T, n_embd), x.dtype),
        grid=(B,),
        in_specs=[
            pl.BlockSpec((1, T, C), lambda b: (b, 0, 0)),
            pl.BlockSpec((C, 3 * C), lambda b: (0, 0)),      # weights stay VMEM-resident
            pl.BlockSpec((C, n_embd), lambda b: (0, 0)),
            pl.BlockSpec((1, n_embd), lambda b: (0, 0)),
        ],
        out_specs=pl.BlockSpec((1, T, n_embd), lambda b: (b, 0, 0)),
        scratch_shapes=[
            pltpu.VMEM((T, 3 * n_embd), jnp.bfloat16),       # qkv activations
            pltpu.VMEM((T, n_embd), jnp.bfloat16),           # per-head concat buffer
        ],
        compiler_params=pltpu.CompilerParams(
            dimension_semantics=("parallel",)),
    )(x, wqkv_bf16, wp_bf16, bp)


def reference(x, wq, wk, wv, wp, bp):
    """Plain-JAX f32 reference reproducing the PyTorch forward (eval mode)."""
    B, T, C = x.shape
    mask = jnp.tril(jnp.ones((T, T), dtype=bool))
    outs = []
    for h in range(num_heads):
        q = x @ wq[h].T          # PyTorch nn.Linear: x @ W^T
        k = x @ wk[h].T
        v = x @ wv[h].T
        wei = jnp.einsum("btd,bsd->bts", q, k) * (head_size ** -0.5)
        wei = jnp.where(mask[None], wei, -jnp.inf)
        wei = jax.nn.softmax(wei, axis=-1)
        outs.append(wei @ v)
    out = jnp.concatenate(outs, axis=-1)                     # (B, T, n_embd)
    return out @ wp + bp


if __name__ == "__main__":
    B, T = 2, 128          # T <= block_size (192) as in the reference module
    key = jax.random.PRNGKey(0)
    kx, kq, kk, kv, kp, kb = jax.random.split(key, 6)

    std = n_embd ** -0.5
    x = jax.random.normal(kx, (B, T, n_embd), dtype=jnp.float32)

    # PyTorch Linear weights are (out_features, in_features) = (head_size, n_embd).
    wq = std * jax.random.normal(kq, (num_heads, head_size, n_embd), jnp.float32)
    wk = std * jax.random.normal(kk, (num_heads, head_size, n_embd), jnp.float32)
    wv = std * jax.random.normal(kv, (num_heads, head_size, n_embd), jnp.float32)
    wp = std * jax.random.normal(kp, (n_embd, n_embd), jnp.float32)   # proj.weight^T
    bp = std * jax.random.normal(kb, (1, n_embd), jnp.float32)        # proj.bias

    def pack(w):   # (H, hs, C) -> (C, H*hs): transposed, head-major along features
        return jnp.transpose(w, (2, 0, 1)).reshape(n_embd, num_heads * head_size)

    scale = head_size ** -0.5
    wqkv = jnp.concatenate([pack(wq) * scale, pack(wk), pack(wv)], axis=1)  # (256, 768)
    wqkv_bf16 = wqkv.astype(jnp.bfloat16)
    wp_bf16 = wp.astype(jnp.bfloat16)

    out = multi_head_attention(x, wqkv_bf16, wp_bf16, bp)
    out = jax.block_until_ready(out)

    ref = reference(x, wq, wk, wv, wp, bp)
    assert out.shape == (B, T, n_embd)
    # Tolerance covers bf16 MXU operands (f32 accumulation) vs. the f32 reference.
    assert jnp.allclose(out, ref, rtol=2e-2, atol=1e-2), "mismatch vs reference"

    print("KERNEL_OK")
</pallas_src>

<mosaic_0001>
module attributes {stable_mosaic.version = 11 : i64} {
  func.func @mha_fused_kernel(%arg0: i32, %arg1: memref<1x128x256xf32, #tpu.memory_space<vmem>>, %arg2: memref<256x768xbf16, #tpu.memory_space<vmem>>, %arg3: memref<256x256xbf16, #tpu.memory_space<vmem>>, %arg4: memref<1x256xf32, #tpu.memory_space<vmem>>, %arg5: memref<1x128x256xf32, #tpu.memory_space<vmem>>, %arg6: memref<128x768xbf16, #tpu.memory_space<vmem>>, %arg7: memref<128x256xbf16, #tpu.memory_space<vmem>>) attributes {dimension_semantics = [#tpu.dimension_semantics<parallel>], iteration_bounds = array<i64: 2>, scalar_prefetch = 0 : i64, scratch_operands = 2 : i64, tpu.core_type = #tpu.core_type<tc>, window_params = [{transform_indices = @transform_0, window_bounds = array<i64: 1, 128, 256>}, {pipeline_mode = #tpu.pipeline_mode<synchronous>, transform_indices = @transform_1, window_bounds = array<i64: 256, 768>}, {pipeline_mode = #tpu.pipeline_mode<synchronous>, transform_indices = @transform_2, window_bounds = array<i64: 256, 256>}, {pipeline_mode = #tpu.pipeline_mode<synchronous>, transform_indices = @transform_3, window_bounds = array<i64: 1, 256>}, {transform_indices = @transform_4, window_bounds = array<i64: 1, 128, 256>}]} {
    %c0 = arith.constant 0 : index
    %c0_0 = arith.constant 0 : index
    %c0_1 = arith.constant 0 : index
    %0 = vector.load %arg1[%c0, %c0_0, %c0_1] : memref<1x128x256xf32, #tpu.memory_space<vmem>>, vector<1x128x256xf32>
    %1 = vector.shape_cast %0 : vector<1x128x256xf32> to vector<128x256xf32>
    %2 = arith.truncf %1 : vector<128x256xf32> to vector<128x256xbf16>
    %c0_2 = arith.constant 0 : index
    %c0_3 = arith.constant 0 : index
    %3 = vector.load %arg2[%c0_2, %c0_3] : memref<256x768xbf16, #tpu.memory_space<vmem>>, vector<256x768xbf16>
    %cst = arith.constant dense<0.000000e+00> : vector<128x768xf32>
    %4 = tpu.matmul %2, %3, %cst {dimension_numbers = #tpu.dot_dimension_numbers<[1], [0], [0], [1], [0, 0, 1, 1], [], []>} : vector<128x256xbf16>, vector<256x768xbf16>, vector<128x768xf32> -> vector<128x768xf32>
    %5 = arith.truncf %4 : vector<128x768xf32> to vector<128x768xbf16>
    %c0_4 = arith.constant 0 : index
    %c0_5 = arith.constant 0 : index
    %6 = vector.load %arg6[%c0_4, %c0_5] : memref<128x768xbf16, #tpu.memory_space<vmem>>, vector<128x768xbf16>
    tpu.vector_store %arg6[%c0_4, %c0_5], %5 {strides = array<i32>} : memref<128x768xbf16, #tpu.memory_space<vmem>>, vector<128x768xbf16>,
    %7 = tpu.iota {dimensions = array<i32: 0>} : vector<128x128xi32>
    %8 = tpu.iota {dimensions = array<i32: 1>} : vector<128x128xi32>
    %9 = arith.cmpi sge, %7, %8 : vector<128x128xi32>
    %c0_6 = arith.constant 0 : index
    %c0_7 = arith.constant 0 : index
    %10 = vector.load %arg6[%c0_6, %c0_7] : memref<128x768xbf16, #tpu.memory_space<vmem>>, vector<128x64xbf16>
    %c0_8 = arith.constant 0 : index
    %c256 = arith.constant 256 : index
    %11 = vector.load %arg6[%c0_8, %c256] : memref<128x768xbf16, #tpu.memory_space<vmem>>, vector<128x64xbf16>
    %c0_9 = arith.constant 0 : index
    %c512 = arith.constant 512 : index
    %12 = vector.load %arg6[%c0_9, %c512] : memref<128x768xbf16, #tpu.memory_space<vmem>>, vector<128x64xbf16>
    %cst_10 = arith.constant dense<0.000000e+00> : vector<128x128xf32>
    %13 = tpu.matmul %10, %11, %cst_10 {dimension_numbers = #tpu.dot_dimension_numbers<[1], [1], [0], [0], [0, 0, 1, 0], [], []>} : vector<128x64xbf16>, vector<128x64xbf16>, vector<128x128xf32> -> vector<128x128xf32>
    %cst_11 = arith.constant -1.000000e+30 : f32
    %14 = vector.broadcast %cst_11 : f32 to vector<128x128xf32>
    %15 = arith.select %9, %13, %14 : vector<128x128xi1>, vector<128x128xf32>
    %cst_12 = arith.constant dense<0xFF800000> : vector<128xf32>
    %16 = vector.multi_reduction <maximumf>, %15, %cst_12 [1] : vector<128x128xf32> to vector<128xf32>
    %17 = vector.shape_cast %16 : vector<128xf32> to vector<128x1xf32>
    %18 = vector.broadcast %17 : vector<128x1xf32> to vector<128x128xf32>
    %19 = arith.subf %15, %18 : vector<128x128xf32>
    %20 = math.exp %19 : vector<128x128xf32>
    %cst_13 = arith.constant dense<0.000000e+00> : vector<128xf32>
    %21 = vector.multi_reduction <add>, %20, %cst_13 [1] : vector<128x128xf32> to vector<128xf32>
    %22 = vector.shape_cast %21 : vector<128xf32> to vector<128x1xf32>
    %23 = arith.truncf %20 : vector<128x128xf32> to vector<128x128xbf16>
    %cst_14 = arith.constant dense<0.000000e+00> : vector<128x64xf32>
    %24 = tpu.matmul %23, %12, %cst_14 {dimension_numbers = #tpu.dot_dimension_numbers<[1], [0], [0], [1], [0, 0, 1, 1], [], []>} : vector<128x128xbf16>, vector<128x64xbf16>, vector<128x64xf32> -> vector<128x64xf32>
    %cst_15 = arith.constant 1.000000e+00 : f32
    %25 = vector.broadcast %cst_15 : f32 to vector<128x1xf32>
    %26 = arith.divf %25, %22 : vector<128x1xf32>
    %27 = vector.broadcast %26 : vector<128x1xf32> to vector<128x64xf32>
    %28 = arith.mulf %24, %27 : vector<128x64xf32>
    %29 = arith.truncf %28 : vector<128x64xf32> to vector<128x64xbf16>
    %c0_16 = arith.constant 0 : index
    %c0_17 = arith.constant 0 : index
    %30 = vector.load %arg7[%c0_16, %c0_17] : memref<128x256xbf16, #tpu.memory_space<vmem>>, vector<128x64xbf16>
    tpu.vector_store %arg7[%c0_16, %c0_17], %29 {strides = array<i32>} : memref<128x256xbf16, #tpu.memory_space<vmem>>, vector<128x64xbf16>,
    %c0_18 = arith.constant 0 : index
    %c64 = arith.constant 64 : index
    %31 = vector.load %arg6[%c0_18, %c64] : memref<128x768xbf16, #tpu.memory_space<vmem>>, vector<128x64xbf16>
    %c0_19 = arith.constant 0 : index
    %c320 = arith.constant 320 : index
    %32 = vector.load %arg6[%c0_19, %c320] : memref<128x768xbf16, #tpu.memory_space<vmem>>, vector<128x64xbf16>
    %c0_20 = arith.constant 0 : index
    %c576 = arith.constant 576 : index
    %33 = vector.load %arg6[%c0_20, %c576] : memref<128x768xbf16, #tpu.memory_space<vmem>>, vector<128x64xbf16>
    %cst_21 = arith.constant dense<0.000000e+00> : vector<128x128xf32>
    %34 = tpu.matmul %31, %32, %cst_21 {dimension_numbers = #tpu.dot_dimension_numbers<[1], [1], [0], [0], [0, 0, 1, 0], [], []>} : vector<128x64xbf16>, vector<128x64xbf16>, vector<128x128xf32> -> vector<128x128xf32>
    %cst_22 = arith.constant -1.000000e+30 : f32
    %35 = vector.broadcast %cst_22 : f32 to vector<128x128xf32>
    %36 = arith.select %9, %34, %35 : vector<128x128xi1>, vector<128x128xf32>
    %cst_23 = arith.constant dense<0xFF800000> : vector<128xf32>
    %37 = vector.multi_reduction <maximumf>, %36, %cst_23 [1] : vector<128x128xf32> to vector<128xf32>
    %38 = vector.shape_cast %37 : vector<128xf32> to vector<128x1xf32>
    %39 = vector.broadcast %38 : vector<128x1xf32> to vector<128x128xf32>
    %40 = arith.subf %36, %39 : vector<128x128xf32>
    %41 = math.exp %40 : vector<128x128xf32>
    %cst_24 = arith.constant dense<0.000000e+00> : vector<128xf32>
    %42 = vector.multi_reduction <add>, %41, %cst_24 [1] : vector<128x128xf32> to vector<128xf32>
    %43 = vector.shape_cast %42 : vector<128xf32> to vector<128x1xf32>
    %44 = arith.truncf %41 : vector<128x128xf32> to vector<128x128xbf16>
    %cst_25 = arith.constant dense<0.000000e+00> : vector<128x64xf32>
    %45 = tpu.matmul %44, %33, %cst_25 {dimension_numbers = #tpu.dot_dimension_numbers<[1], [0], [0], [1], [0, 0, 1, 1], [], []>} : vector<128x128xbf16>, vector<128x64xbf16>, vector<128x64xf32> -> vector<128x64xf32>
    %cst_26 = arith.constant 1.000000e+00 : f32
    %46 = vector.broadcast %cst_26 : f32 to vector<128x1xf32>
    %47 = arith.divf %46, %43 : vector<128x1xf32>
    %48 = vector.broadcast %47 : vector<128x1xf32> to vector<128x64xf32>
    %49 = arith.mulf %45, %48 : vector<128x64xf32>
    %50 = arith.truncf %49 : vector<128x64xf32> to vector<128x64xbf16>
    %c0_27 = arith.constant 0 : index
    %c64_28 = arith.constant 64 : index
    %51 = vector.load %arg7[%c0_27, %c64_28] : memref<128x256xbf16, #tpu.memory_space<vmem>>, vector<128x64xbf16>
    tpu.vector_store %arg7[%c0_27, %c64_28], %50 {strides = array<i32>} : memref<128x256xbf16, #tpu.memory_space<vmem>>, vector<128x64xbf16>,
    %c0_29 = arith.constant 0 : index
    %c128 = arith.constant 128 : index
    %52 = vector.load %arg6[%c0_29, %c128] : memref<128x768xbf16, #tpu.memory_space<vmem>>, vector<128x64xbf16>
    %c0_30 = arith.constant 0 : index
    %c384 = arith.constant 384 : index
    %53 = vector.load %arg6[%c0_30, %c384] : memref<128x768xbf16, #tpu.memory_space<vmem>>, vector<128x64xbf16>
    %c0_31 = arith.constant 0 : index
    %c640 = arith.constant 640 : index
    %54 = vector.load %arg6[%c0_31, %c640] : memref<128x768xbf16, #tpu.memory_space<vmem>>, vector<128x64xbf16>
    %cst_32 = arith.constant dense<0.000000e+00> : vector<128x128xf32>
    %55 = tpu.matmul %52, %53, %cst_32 {dimension_numbers = #tpu.dot_dimension_numbers<[1], [1], [0], [0], [0, 0, 1, 0], [], []>} : vector<128x64xbf16>, vector<128x64xbf16>, vector<128x128xf32> -> vector<128x128xf32>
    %cst_33 = arith.constant -1.000000e+30 : f32
    %56 = vector.broadcast %cst_33 : f32 to vector<128x128xf32>
    %57 = arith.select %9, %55, %56 : vector<128x128xi1>, vector<128x128xf32>
    %cst_34 = arith.constant dense<0xFF800000> : vector<128xf32>
    %58 = vector.multi_reduction <maximumf>, %57, %cst_34 [1] : vector<128x128xf32> to vector<128xf32>
    %59 = vector.shape_cast %58 : vector<128xf32> to vector<128x1xf32>
    %60 = vector.broadcast %59 : vector<128x1xf32> to vector<128x128xf32>
    %61 = arith.subf %57, %60 : vector<128x128xf32>
    %62 = math.exp %61 : vector<128x128xf32>
    %cst_35 = arith.constant dense<0.000000e+00> : vector<128xf32>
    %63 = vector.multi_reduction <add>, %62, %cst_35 [1] : vector<128x128xf32> to vector<128xf32>
    %64 = vector.shape_cast %63 : vector<128xf32> to vector<128x1xf32>
    %65 = arith.truncf %62 : vector<128x128xf32> to vector<128x128xbf16>
    %cst_36 = arith.constant dense<0.000000e+00> : vector<128x64xf32>
    %66 = tpu.matmul %65, %54, %cst_36 {dimension_numbers = #tpu.dot_dimension_numbers<[1], [0], [0], [1], [0, 0, 1, 1], [], []>} : vector<128x128xbf16>, vector<128x64xbf16>, vector<128x64xf32> -> vector<128x64xf32>
    %cst_37 = arith.constant 1.000000e+00 : f32
    %67 = vector.broadcast %cst_37 : f32 to vector<128x1xf32>
    %68 = arith.divf %67, %64 : vector<128x1xf32>
    %69 = vector.broadcast %68 : vector<128x1xf32> to vector<128x64xf32>
    %70 = arith.mulf %66, %69 : vector<128x64xf32>
    %71 = arith.truncf %70 : vector<128x64xf32> to vector<128x64xbf16>
    %c0_38 = arith.constant 0 : index
    %c128_39 = arith.constant 128 : index
    %72 = vector.load %arg7[%c0_38, %c128_39] : memref<128x256xbf16, #tpu.memory_space<vmem>>, vector<128x64xbf16>
    tpu.vector_store %arg7[%c0_38, %c128_39], %71 {strides = array<i32>} : memref<128x256xbf16, #tpu.memory_space<vmem>>, vector<128x64xbf16>,
    %c0_40 = arith.constant 0 : index
    %c192 = arith.constant 192 : index
    %73 = vector.load %arg6[%c0_40, %c192] : memref<128x768xbf16, #tpu.memory_space<vmem>>, vector<128x64xbf16>
    %c0_41 = arith.constant 0 : index
    %c448 = arith.constant 448 : index
    %74 = vector.load %arg6[%c0_41, %c448] : memref<128x768xbf16, #tpu.memory_space<vmem>>, vector<128x64xbf16>
    %c0_42 = arith.constant 0 : index
    %c704 = arith.constant 704 : index
    %75 = vector.load %arg6[%c0_42, %c704] : memref<128x768xbf16, #tpu.memory_space<vmem>>, vector<128x64xbf16>
    %cst_43 = arith.constant dense<0.000000e+00> : vector<128x128xf32>
    %76 = tpu.matmul %73, %74, %cst_43 {dimension_numbers = #tpu.dot_dimension_numbers<[1], [1], [0], [0], [0, 0, 1, 0], [], []>} : vector<128x64xbf16>, vector<128x64xbf16>, vector<128x128xf32> -> vector<128x128xf32>
    %cst_44 = arith.constant -1.000000e+30 : f32
    %77 = vector.broadcast %cst_44 : f32 to vector<128x128xf32>
    %78 = arith.select %9, %76, %77 : vector<128x128xi1>, vector<128x128xf32>
    %cst_45 = arith.constant dense<0xFF800000> : vector<128xf32>
    %79 = vector.multi_reduction <maximumf>, %78, %cst_45 [1] : vector<128x128xf32> to vector<128xf32>
    %80 = vector.shape_cast %79 : vector<128xf32> to vector<128x1xf32>
    %81 = vector.broadcast %80 : vector<128x1xf32> to vector<128x128xf32>
    %82 = arith.subf %78, %81 : vector<128x128xf32>
    %83 = math.exp %82 : vector<128x128xf32>
    %cst_46 = arith.constant dense<0.000000e+00> : vector<128xf32>
    %84 = vector.multi_reduction <add>, %83, %cst_46 [1] : vector<128x128xf32> to vector<128xf32>
    %85 = vector.shape_cast %84 : vector<128xf32> to vector<128x1xf32>
    %86 = arith.truncf %83 : vector<128x128xf32> to vector<128x128xbf16>
    %cst_47 = arith.constant dense<0.000000e+00> : vector<128x64xf32>
    %87 = tpu.matmul %86, %75, %cst_47 {dimension_numbers = #tpu.dot_dimension_numbers<[1], [0], [0], [1], [0, 0, 1, 1], [], []>} : vector<128x128xbf16>, vector<128x64xbf16>, vector<128x64xf32> -> vector<128x64xf32>
    %cst_48 = arith.constant 1.000000e+00 : f32
    %88 = vector.broadcast %cst_48 : f32 to vector<128x1xf32>
    %89 = arith.divf %88, %85 : vector<128x1xf32>
    %90 = vector.broadcast %89 : vector<128x1xf32> to vector<128x64xf32>
    %91 = arith.mulf %87, %90 : vector<128x64xf32>
    %92 = arith.truncf %91 : vector<128x64xf32> to vector<128x64xbf16>
    %c0_49 = arith.constant 0 : index
    %c192_50 = arith.constant 192 : index
    %93 = vector.load %arg7[%c0_49, %c192_50] : memref<128x256xbf16, #tpu.memory_space<vmem>>, vector<128x64xbf16>
    tpu.vector_store %arg7[%c0_49, %c192_50], %92 {strides = array<i32>} : memref<128x256xbf16, #tpu.memory_space<vmem>>, vector<128x64xbf16>,
    %c0_51 = arith.constant 0 : index
    %c0_52 = arith.constant 0 : index
    %94 = vector.load %arg7[%c0_51, %c0_52] : memref<128x256xbf16, #tpu.memory_space<vmem>>, vector<128x256xbf16>
    %c0_53 = arith.constant 0 : index
    %c0_54 = arith.constant 0 : index
    %95 = vector.load %arg3[%c0_53, %c0_54] : memref<256x256xbf16, #tpu.memory_space<vmem>>, vector<256x256xbf16>
    %cst_55 = arith.constant dense<0.000000e+00> : vector<128x256xf32>
    %96 = tpu.matmul %94, %95, %cst_55 {dimension_numbers = #tpu.dot_dimension_numbers<[1], [0], [0], [1], [0, 0, 1, 1], [], []>} : vector<128x256xbf16>, vector<256x256xbf16>, vector<128x256xf32> -> vector<128x256xf32>
    %c0_56 = arith.constant 0 : index
    %c0_57 = arith.constant 0 : index
    %97 = vector.load %arg4[%c0_56, %c0_57] : memref<1x256xf32, #tpu.memory_space<vmem>>, vector<1x256xf32>
    %98 = vector.broadcast %97 : vector<1x256xf32> to vector<128x256xf32>
    %99 = arith.addf %96, %98 : vector<128x256xf32>
    %c0_58 = arith.constant 0 : index
    %c0_59 = arith.constant 0 : index
    %c0_60 = arith.constant 0 : index
    %100 = vector.load %arg5[%c0_58, %c0_59, %c0_60] : memref<1x128x256xf32, #tpu.memory_space<vmem>>, vector<1x128x256xf32>
    %101 = vector.shape_cast %100 : vector<1x128x256xf32> to vector<128x256xf32>
    %102 = vector.shape_cast %99 : vector<128x256xf32> to vector<1x128x256xf32>
    tpu.vector_store %arg5[%c0_58, %c0_59, %c0_60], %102 {strides = array<i32>} : memref<1x128x256xf32, #tpu.memory_space<vmem>>, vector<1x128x256xf32>,
    return
  }
  func.func @transform_0(%arg0: i32) -> (i32, i32, i32) {
    %c0_i32 = arith.constant 0 : i32
    %c0_i32_0 = arith.constant 0 : i32
    %c0_i32_1 = arith.constant 0 : i32
    return %arg0, %c0_i32, %c0_i32_0 : i32, i32, i32
  }
  func.func @transform_1(%arg0: i32) -> (i32, i32) {
    %c0_i32 = arith.constant 0 : i32
    %c0_i32_0 = arith.constant 0 : i32
    %c0_i32_1 = arith.constant 0 : i32
    return %c0_i32, %c0_i32_0 : i32, i32
  }
  func.func @transform_2(%arg0: i32) -> (i32, i32) {
    %c0_i32 = arith.constant 0 : i32
    %c0_i32_0 = arith.constant 0 : i32
    %c0_i32_1 = arith.constant 0 : i32
    return %c0_i32, %c0_i32_0 : i32, i32
  }
  func.func @transform_3(%arg0: i32) -> (i32, i32) {
    %c0_i32 = arith.constant 0 : i32
    %c0_i32_0 = arith.constant 0 : i32
    %c0_i32_1 = arith.constant 0 : i32
    return %c0_i32, %c0_i32_0 : i32, i32
  }
  func.func @transform_4(%arg0: i32) -> (i32, i32, i32) {
    %c0_i32 = arith.constant 0 : i32
    %c0_i32_0 = arith.constant 0 : i32
    %c0_i32_1 = arith.constant 0 : i32
    return %arg0, %c0_i32, %c0_i32_0 : i32, i32, i32
  }
}

</mosaic_0001>

<llo_original>
// kernel: tpu_custom_call.1
$region0: #{tpu_custom_call.1}
  #allocation0 [shape = 'u32[]', space=smem, size = 0x4, offset = 0x4, fixed_abs, tag = 'smem constant byte address 0x4 - core index']
  #allocation1 [shape = 'u32[72,128]{1,0:T(1,128)}', space=vmem, size = 0x9000, scoped, tag = 'internal scratch']
  #allocation2 [shape = 'bf16[128,768]{1,0:T(8,128)(2,1)}', space=vmem, size = 0x30000, scoped, tag = 'scratch operand']
  #allocation3 [shape = 'bf16[128,256]{1,0:T(8,128)(2,1)}', space=vmem, size = 0x10000, scoped, tag = 'scratch operand']
  %s0 = inlined_call_operand.hbm [shape: f32[2,128,256], index: 0, kind: input, shape index: {}]
  %s1 = inlined_call_operand.hbm [shape: bf16[256,768], index: 1, kind: input, shape index: {}]
  %s2 = inlined_call_operand.hbm [shape: bf16[256,256], index: 2, kind: input, shape index: {}]
  %s3 = inlined_call_operand.vmem [shape: f32[1,256], index: 3, kind: input, shape index: {}]
  %s4 = inlined_call_operand.hbm [shape: f32[2,128,256], index: 4, kind: output, shape index: {}]
  %s5 = sld [smem:[#allocation0]]
  $region61: #{tpu_custom_call.1} parent=0
    _
  %s7 = ssub.s32 1, %s5
  %s8 = scalar_select 0, %s7, %s5
  $region1: #{tpu_custom_call.1} parent=0
    #allocation4 [shape = 'u8[262144]{0}', space=vmem, size = 0x40000, scoped, tag = 'input window, operand 0']
    #allocation5 [shape = 's32[2]{0}', space=sflag, size = 0x8, scoped, tag = 'scoped memory for tpu_custom_call.1']
    #allocation6 [shape = 's32[2]{0}', space=sflag, size = 0x8, scoped, tag = 'scoped memory for tpu_custom_call.1']
    #allocation7 [shape = 'u8[393216]{0}', space=vmem, size = 0x60000, scoped, tag = 'input window, operand 1, single buffered']
    #allocation8 [shape = 's32[1]{0}', space=sflag, size = 0x4, scoped, tag = 'scoped memory for tpu_custom_call.1']
    #allocation9 [shape = 'u8[131072]{0}', space=vmem, size = 0x20000, scoped, tag = 'input window, operand 2, single buffered']
    #allocation10 [shape = 'u8[262144]{0}', space=vmem, size = 0x40000, scoped, tag = 'output window, operand 0']
    %9 = vsyncpa [#allocation5], 0
    %s10 = scalar_lea.sflag [#allocation5], 1
    %11 = vsyncpa %s10, 0
    %12 = vsyncpa [#allocation8], 0
    %13 = vsyncpa [#allocation6], 0
    %s14 = scalar_lea.sflag [#allocation6], 1
    %15 = vsyncpa %s14, 0
    loop: start=0, step=1, limit=4
    $region2: #{tpu_custom_call.1} parent=1 // loop_pre_header
      _
    $region3: #{tpu_custom_call.1} parent=1 // loop_header
      %s17 = sphi 0, %s21
      %p18 = scmp.ge.s32.totalorder %s17, 4
      %s27 = sphi 0, %s29
      %s30 = sphi 0, %s27
      %s31 = sphi 0, %s30
      %s47 = sphi 0, %s31
      %s51 = sphi 0, %s51
      %s53 = sphi 0, %s51
      %s54 = sphi 0, %s53
      %s68 = sphi 0, %s54
      %s72 = sphi 0, %s72
      %s74 = sphi 0, %s72
      %s75 = sphi 0, %s74
      %s89 = sphi 0, %s75
      %s93 = sphi 0, %s93
      %s95 = sphi 0, %s93
      %s96 = sphi 0, %s95
      %s110 = sphi 0, %s96
      %s116 = sphi 0, %s118
      %s119 = sphi 0, %s116
      %s120 = sphi 0, %s119
      %s136 = sphi 0, %s120
    $region4: #{tpu_custom_call.1} parent=1 // loop_header_branch
      %20 = sbr.rel (%p18) target = $region8
    $region5: #{tpu_custom_call.1} parent=1 // loop_body
      %s22 = ssub.s32 %s17, 1
      %s23 = ssub.s32 %s17, 2
      %s24 = sadd.s32 %s17, 1
      %s25 = ssub.s32 %s17, %s24
      %p26 = scmp.eq.s32.totalorder %s25, 0
      %s28 = sadd.s32 %s27, 1
      %s29 = scalar_select %p26, %s27, %s28
      %p32 = pneg %p26
      %p33 = scmp.eq.s32.totalorder %s17, 1
      %p34 = por %p32, %p33
      %p35 = scmp.ne.s32.totalorder %s27, %s30
      %p36 = scmp.eq.s32.totalorder %s17, 0
      %p37 = por %p35, %p36
      %p38 = scmp.ne.s32.totalorder %s27, %s30
      %p39 = scmp.eq.s32.totalorder %s22, 1
      %p40 = por %p38, %p39
      %p41 = scmp.ne.s32.totalorder %s30, %s31
      %p42 = scmp.eq.s32.totalorder %s22, 0
      %p43 = por %p41, %p42
      %p44 = scmp.ne.s32.totalorder %s30, %s31
      %p45 = scmp.eq.s32.totalorder %s23, 1
      %p46 = por %p44, %p45
      %p48 = scmp.ne.s32.totalorder %s31, %s47
      %p49 = scmp.eq.s32.totalorder %s23, 0
      %p50 = por %p48, %p49
      %s52 = sadd.s32 %s51, 1
      %p55 = scmp.eq.s32.totalorder %s17, 1
      %p56 = scmp.ne.s32.totalorder %s51, %s53
      %p57 = scmp.eq.s32.totalorder %s17, 0
      %p58 = por %p56, %p57
      %p59 = scmp.ne.s32.totalorder %s51, %s53
      %p60 = scmp.eq.s32.totalorder %s22, 1
      %p61 = por %p59, %p60
      %p62 = scmp.ne.s32.totalorder %s53, %s54
      %p63 = scmp.eq.s32.totalorder %s22, 0
      %p64 = por %p62, %p63
      %p65 = scmp.ne.s32.totalorder %s53, %s54
      %p66 = scmp.eq.s32.totalorder %s23, 1
      %p67 = por %p65, %p66
      %p69 = scmp.ne.s32.totalorder %s54, %s68
      %p70 = scmp.eq.s32.totalorder %s23, 0
      %p71 = por %p69, %p70
      %s73 = sadd.s32 %s72, 1
      %p76 = scmp.eq.s32.totalorder %s17, 1
      %p77 = scmp.ne.s32.totalorder %s72, %s74
      %p78 = scmp.eq.s32.totalorder %s17, 0
      %p79 = por %p77, %p78
      %p80 = scmp.ne.s32.totalorder %s72, %s74
      %p81 = scmp.eq.s32.totalorder %s22, 1
      %p82 = por %p80, %p81
      %p83 = scmp.ne.s32.totalorder %s74, %s75
      %p84 = scmp.eq.s32.totalorder %s22, 0
      %p85 = por %p83, %p84
      %p86 = scmp.ne.s32.totalorder %s74, %s75
      %p87 = scmp.eq.s32.totalorder %s23, 1
      %p88 = por %p86, %p87
      %p90 = scmp.ne.s32.totalorder %s75, %s89
      %p91 = scmp.eq.s32.totalorder %s23, 0
      %p92 = por %p90, %p91
      %s94 = sadd.s32 %s93, 1
      %p97 = scmp.eq.s32.totalorder %s17, 1
      %p98 = scmp.ne.s32.totalorder %s93, %s95
      %p99 = scmp.eq.s32.totalorder %s17, 0
      %p100 = por %p98, %p99
      %p101 = scmp.ne.s32.totalorder %s93, %s95
      %p102 = scmp.eq.s32.totalorder %s22, 1
      %p103 = por %p101, %p102
      %p104 = scmp.ne.s32.totalorder %s95, %s96
      %p105 = scmp.eq.s32.totalorder %s22, 0
      %p106 = por %p104, %p105
      %p107 = scmp.ne.s32.totalorder %s95, %s96
      %p108 = scmp.eq.s32.totalorder %s23, 1
      %p109 = por %p107, %p108
      %p111 = scmp.ne.s32.totalorder %s96, %s110
      %p112 = scmp.eq.s32.totalorder %s23, 0
      %p113 = por %p111, %p112
      %s114 = ssub.s32 %s17, %s24
      %p115 = scmp.eq.s32.totalorder %s114, 0
      %s117 = sadd.s32 %s116, 1
      %s118 = scalar_select %p115, %s116, %s117
      %p121 = pneg %p115
      %p122 = scmp.eq.s32.totalorder %s17, 1
      %p123 = por %p121, %p122
      %p124 = scmp.ne.s32.totalorder %s116, %s119
      %p125 = scmp.eq.s32.totalorder %s17, 0
      %p126 = por %p124, %p125
      %p127 = scmp.ne.s32.totalorder %s116, %s119
      %p128 = scmp.eq.s32.totalorder %s22, 1
      %p129 = por %p127, %p128
      %p130 = scmp.ne.s32.totalorder %s119, %s120
      %p131 = scmp.eq.s32.totalorder %s22, 0
      %p132 = por %p130, %p131
      %p133 = scmp.ne.s32.totalorder %s119, %s120
      %p134 = scmp.eq.s32.totalorder %s23, 1
      %p135 = por %p133, %p134
      %p137 = scmp.ne.s32.totalorder %s120, %s136
      %p138 = scmp.eq.s32.totalorder %s23, 0
      %p139 = por %p137, %p138
      %p140 = scmp.le.s32.totalorder 1, %s17
      %p141 = scmp.lt.s32.totalorder %s17, 3
      %p142 = pnand %p140, %p141
      %p143 = pneg %p142
      // Predicated region
      $region9: #{tpu_custom_call.1} parent=5 // pred_check
        _
      $region10: #{tpu_custom_call.1} parent=5 // pred_check_branch
        %145 = sbr.rel (%p142) target = $region12
      $region11: #{tpu_custom_call.1} parent=5 // pred_region
        %s146 = ssub.s32 %s17, 1
        // Predicated region
        $region13: #{tpu_custom_call.1} parent=11 // pred_check
          %p147 = pneg %p64
        $region14: #{tpu_custom_call.1} parent=11 // pred_check_branch
          %149 = sbr.rel (%p147) target = $region16
        $region15: #{tpu_custom_call.1} parent=11 // pred_region
          %151 = vsyncadd [#allocation8], 0
          %s152 = sshll.u32 %s1, 4
          %s153 = int_to_ptr.hbm [resolvable:$true] %s152
          %s154 = sshll.u32 [#allocation7], 4
          %s155 = int_to_ptr.vmem [resolvable:$true] %s154
          %160 = dma.hbm_to_vmem [thread:$0]  %s153, 12288, %s155, [#allocation8], 384, 384, 24
        $region16: #{tpu_custom_call.1} parent=11 // pred_fallthru
          _
        // Predicated region
        $region17: #{tpu_custom_call.1} parent=11 // pred_check
          %p161 = pneg %p85
        $region18: #{tpu_custom_call.1} parent=11 // pred_check_branch
          %163 = sbr.rel (%p161) target = $region20
        $region19: #{tpu_custom_call.1} parent=11 // pred_region
          %165 = vsyncadd [#allocation8], 0
          %s166 = sshll.u32 %s2, 4
          %s167 = int_to_ptr.hbm [resolvable:$true] %s166
          %s168 = sshll.u32 [#allocation9], 4
          %s169 = int_to_ptr.vmem [resolvable:$true] %s168
          %174 = dma.hbm_to_vmem [thread:$0]  %s167, 4096, %s169, [#allocation8], 128, 128, 8
        $region20: #{tpu_custom_call.1} parent=11 // pred_fallthru
          _
        // Predicated region
        $region21: #{tpu_custom_call.1} parent=11 // pred_check
          %p175 = pneg %p106
        $region22: #{tpu_custom_call.1} parent=11 // pred_check_branch
          %177 = sbr.rel (%p175) target = $region24
        $region23: #{tpu_custom_call.1} parent=11 // pred_region
          _
        $region24: #{tpu_custom_call.1} parent=11 // pred_fallthru
          _
      $region12: #{tpu_custom_call.1} parent=5 // pred_fallthru
        _
      %p178 = scmp.lt.s32.totalorder %s17, 2
      // Predicated region
      $region25: #{tpu_custom_call.1} parent=5 // pred_check
        %p179 = pneg %p178
      $region26: #{tpu_custom_call.1} parent=5 // pred_check_branch
        %181 = sbr.rel (%p179) target = $region28
      $region27: #{tpu_custom_call.1} parent=5 // pred_region
        // Predicated region
        $region29: #{tpu_custom_call.1} parent=27 // pred_check
          %p182 = pneg %p37
        $region30: #{tpu_custom_call.1} parent=27 // pred_check_branch
          %184 = sbr.rel (%p182) target = $region32
        $region31: #{tpu_custom_call.1} parent=27 // pred_region
          %s185 = sand.u32 %s27, 1
          %s186 = scalar_lea.sflag [#allocation5], %s185
          %s187 = sand.u32 %s27, 1
          %s188 = smul.addr %s187, 256
          %s189 = scalar_lea.vmem [#allocation4], %s188
          %191 = vsyncadd %s186, 0
          %s192 = smul.addr %s17, 32
          %s193 = smul.addr %s192, 8
          %s194 = scalar_lea.hbm %s0, %s193
          %s195 = sshll.u32 %s194, 4
          %s196 = int_to_ptr.hbm [resolvable:$true] %s195
          %s197 = sshll.u32 %s189, 4
          %s198 = int_to_ptr.vmem [resolvable:$true] %s197
          %203 = dma.hbm_to_vmem [thread:$0]  %s196, 4096, %s198, %s186, 256, 256, 16
        $region32: #{tpu_custom_call.1} parent=27 // pred_fallthru
          _
      $region28: #{tpu_custom_call.1} parent=5 // pred_fallthru
        _
      %p204 = scmp.le.s32.totalorder 1, %s17
      %p205 = scmp.lt.s32.totalorder %s17, 3
      %p206 = pnand %p204, %p205
      %p207 = pneg %p206
      // Predicated region
      $region33: #{tpu_custom_call.1} parent=5 // pred_check
        _
      $region34: #{tpu_custom_call.1} parent=5 // pred_check_branch
        %209 = sbr.rel (%p206) target = $region36
      $region35: #{tpu_custom_call.1} parent=5 // pred_region
        %s210 = ssub.s32 %s17, 1
        %s211 = sand.u32 %s30, 1
        %s212 = scalar_lea.sflag [#allocation5], %s211
        %s213 = sand.u32 %s30, 1
        %s214 = smul.addr %s213, 256
        %s215 = scalar_lea.vmem [#allocation4], %s214
        // Predicated region
        $region37: #{tpu_custom_call.1} parent=35 // pred_check
          %p216 = pneg %p43
        $region38: #{tpu_custom_call.1} parent=35 // pred_check_branch
          %218 = sbr.rel (%p216) target = $region40
        $region39: #{tpu_custom_call.1} parent=35 // pred_region
          %220 = dma.done %s212, 4096
        $region40: #{tpu_custom_call.1} parent=35 // pred_fallthru
          _
        // Predicated region
        $region41: #{tpu_custom_call.1} parent=35 // pred_check
          %p221 = pneg %p64
        $region42: #{tpu_custom_call.1} parent=35 // pred_check_branch
          %223 = sbr.rel (%p221) target = $region44
        $region43: #{tpu_custom_call.1} parent=35 // pred_region
          %225 = dma.done [#allocation8], 12288
        $region44: #{tpu_custom_call.1} parent=35 // pred_fallthru
          _
        // Predicated region
        $region45: #{tpu_custom_call.1} parent=35 // pred_check
          %p226 = pneg %p85
        $region46: #{tpu_custom_call.1} parent=35 // pred_check_branch
          %228 = sbr.rel (%p226) target = $region48
        $region47: #{tpu_custom_call.1} parent=35 // pred_region
          %230 = dma.done [#allocation8], 4096
        $region48: #{tpu_custom_call.1} parent=35 // pred_fallthru
          _
        %s231 = sand.u32 %s30, 1
        %s232 = scalar_lea.sflag [#allocation5], %s231
        %s233 = sand.u32 %s30, 1
        %s234 = smul.addr %s233, 256
        %s235 = scalar_lea.vmem [#allocation4], %s234
        %p236 = pneg %p43
        %p237 = pneg %p40
        %p238 = pneg %p64
        %p239 = pneg %p61
        %p240 = pneg %p85
        %p241 = pneg %p82
        %p242 = pneg %p106
        %p243 = pneg %p103
        %p244 = pneg %p132
        %p245 = pneg %p129
        %s246 = sand.u32 %s119, 1
        %s247 = scalar_lea.sflag [#allocation6], %s246
        %s248 = sand.u32 %s119, 1
        %s249 = smul.addr %s248, 256
        %s250 = scalar_lea.vmem [#allocation10], %s249
        %v251 = vld [vmem:[%s215] sm:$0xff]
        %v252 = vld [vmem:[%s215 + $0x8] sm:$0xff]
        %v253 = vld [vmem:[%s215 + $0x10] sm:$0xff]
        %v254 = vld [vmem:[%s215 + $0x18] sm:$0xff]
        %v255 = vld [vmem:[%s215 + $0x20] sm:$0xff]
        %v256 = vld [vmem:[%s215 + $0x28] sm:$0xff]
        %v257 = vld [vmem:[%s215 + $0x30] sm:$0xff]
        %v258 = vld [vmem:[%s215 + $0x38] sm:$0xff]
        %v259 = vld [vmem:[%s215 + $0x40] sm:$0xff]
        %v260 = vld [vmem:[%s215 + $0x48] sm:$0xff]
        %v261 = vld [vmem:[%s215 + $0x50] sm:$0xff]
        %v262 = vld [vmem:[%s215 + $0x58] sm:$0xff]
        %v263 = vld [vmem:[%s215 + $0x60] sm:$0xff]
        %v264 = vld [vmem:[%s215 + $0x68] sm:$0xff]
        %v265 = vld [vmem:[%s215 + $0x70] sm:$0xff]
        %v266 = vld [vmem:[%s215 + $0x78] sm:$0xff]
        %v267 = vld [vmem:[%s215 + $0x80] sm:$0xff]
        %v268 = vld [vmem:[%s215 + $0x88] sm:$0xff]
        %v269 = vld [vmem:[%s215 + $0x90] sm:$0xff]
        %v270 = vld [vmem:[%s215 + $0x98] sm:$0xff]
        %v271 = vld [vmem:[%s215 + $0xa0] sm:$0xff]
        %v272 = vld [vmem:[%s215 + $0xa8] sm:$0xff]
        %v273 = vld [vmem:[%s215 + $0xb0] sm:$0xff]
        %v274 = vld [vmem:[%s215 + $0xb8] sm:$0xff]
        %v275 = vld [vmem:[%s215 + $0xc0] sm:$0xff]
        %v276 = vld [vmem:[%s215 + $0xc8] sm:$0xff]
        %v277 = vld [vmem:[%s215 + $0xd0] sm:$0xff]
        %v278 = vld [vmem:[%s215 + $0xd8] sm:$0xff]
        %v279 = vld [vmem:[%s215 + $0xe0] sm:$0xff]
        %v280 = vld [vmem:[%s215 + $0xe8] sm:$0xff]
        %v281 = vld [vmem:[%s215 + $0xf0] sm:$0xff]
        %v282 = vld [vmem:[%s215 + $0xf8] sm:$0xff]
        %v283 = vpack.c.bf16 %v253, %v251
        %v284 = vpack.c.bf16 %v254, %v252
        %v285 = vpack.c.bf16 %v257, %v255
        %v286 = vpack.c.bf16 %v258, %v256
        %v287 = vpack.c.bf16 %v261, %v259
        %v288 = vpack.c.bf16 %v262, %v260
        %v289 = vpack.c.bf16 %v265, %v263
        %v290 = vpack.c.bf16 %v266, %v264
        %v291 = vpack.c.bf16 %v269, %v267
        %v292 = vpack.c.bf16 %v270, %v268
        %v293 = vpack.c.bf16 %v273, %v271
        %v294 = vpack.c.bf16 %v274, %v272
        %v295 = vpack.c.bf16 %v277, %v275
        %v296 = vpack.c.bf16 %v278, %v276
        %v297 = vpack.c.bf16 %v281, %v279
        %v298 = vpack.c.bf16 %v282, %v280
        %v299 = vld [vmem:[#allocation7] sm:$0xff]
        %v300 = vld [vmem:[#allocation7 + $0x8] sm:$0xff]
        %v301 = vld [vmem:[#allocation7 + $0x10] sm:$0xff]
        %v302 = vld [vmem:[#allocation7 + $0x18] sm:$0xff]
        %v303 = vld [vmem:[#allocation7 + $0x20] sm:$0xff]
        %v304 = vld [vmem:[#allocation7 + $0x28] sm:$0xff]
        %v305 = vld [vmem:[#allocation7 + $0x30] sm:$0xff]
        %v306 = vld [vmem:[#allocation7 + $0x38] sm:$0xff]
        %v307 = vld [vmem:[#allocation7 + $0x40] sm:$0xff]
        %v308 = vld [vmem:[#allocation7 + $0x48] sm:$0xff]
        %v309 = vld [vmem:[#allocation7 + $0x50] sm:$0xff]
        %v310 = vld [vmem:[#allocation7 + $0x58] sm:$0xff]
        %v311 = vld [vmem:[#allocation7 + $0x60] sm:$0xff]
        %v312 = vld [vmem:[#allocation7 + $0x68] sm:$0xff]
        %v313 = vld [vmem:[#allocation7 + $0x70] sm:$0xff]
        %v314 = vld [vmem:[#allocation7 + $0x78] sm:$0xff]
        %v315 = vld [vmem:[#allocation7 + $0x80] sm:$0xff]
        %v316 = vld [vmem:[#allocation7 + $0x88] sm:$0xff]
        %v317 = vld [vmem:[#allocation7 + $0x90] sm:$0xff]
        %v318 = vld [vmem:[#allocation7 + $0x98] sm:$0xff]
        %v319 = vld [vmem:[#allocation7 + $0xa0] sm:$0xff]
        %v320 = vld [vmem:[#allocation7 + $0xa8] sm:$0xff]
        %v321 = vld [vmem:[#allocation7 + $0xb0] sm:$0xff]
        %v322 = vld [vmem:[#allocation7 + $0xb8] sm:$0xff]
        %v323 = vld [vmem:[#allocation7 + $0xc0] sm:$0xff]
        %v324 = vld [vmem:[#allocation7 + $0xc8] sm:$0xff]
        %v325 = vld [vmem:[#allocation7 + $0xd0] sm:$0xff]
        %v326 = vld [vmem:[#allocation7 + $0xd8] sm:$0xff]
        %v327 = vld [vmem:[#allocation7 + $0xe0] sm:$0xff]
        %v328 = vld [vmem:[#allocation7 + $0xe8] sm:$0xff]
        %v329 = vld [vmem:[#allocation7 + $0xf0] sm:$0xff]
        %v330 = vld [vmem:[#allocation7 + $0xf8] sm:$0xff]
        %v331 = vld [vmem:[#allocation7 + $0x100] sm:$0xff]
        %v332 = vld [vmem:[#allocation7 + $0x108] sm:$0xff]
        %v333 = vld [vmem:[#allocation7 + $0x110] sm:$0xff]
        %v334 = vld [vmem:[#allocation7 + $0x118] sm:$0xff]
        %v335 = vld [vmem:[#allocation7 + $0x120] sm:$0xff]
        %v336 = vld [vmem:[#allocation7 + $0x128] sm:$0xff]
        %v337 = vld [vmem:[#allocation7 + $0x130] sm:$0xff]
        %v338 = vld [vmem:[#allocation7 + $0x138] sm:$0xff]
        %v339 = vld [vmem:[#allocation7 + $0x140] sm:$0xff]
        %v340 = vld [vmem:[#allocation7 + $0x148] sm:$0xff]
        %v341 = vld [vmem:[#allocation7 + $0x150] sm:$0xff]
        %v342 = vld [vmem:[#allocation7 + $0x158] sm:$0xff]
        %v343 = vld [vmem:[#allocation7 + $0x160] sm:$0xff]
        %v344 = vld [vmem:[#allocation7 + $0x168] sm:$0xff]
        %v345 = vld [vmem:[#allocation7 + $0x170] sm:$0xff]
        %v346 = vld [vmem:[#allocation7 + $0x178] sm:$0xff]
        %v347 = vld [vmem:[#allocation7 + $0x180] sm:$0xff]
        %v348 = vld [vmem:[#allocation7 + $0x188] sm:$0xff]
        %v349 = vld [vmem:[#allocation7 + $0x190] sm:$0xff]
        %v350 = vld [vmem:[#allocation7 + $0x198] sm:$0xff]
        %v351 = vld [vmem:[#allocation7 + $0x1a0] sm:$0xff]
        %v352 = vld [vmem:[#allocation7 + $0x1a8] sm:$0xff]
        %v353 = vld [vmem:[#allocation7 + $0x1b0] sm:$0xff]
        %v354 = vld [vmem:[#allocation7 + $0x1b8] sm:$0xff]
        %v355 = vld [vmem:[#allocation7 + $0x1c0] sm:$0xff]
        %v356 = vld [vmem:[#allocation7 + $0x1c8] sm:$0xff]
        %v357 = vld [vmem:[#allocation7 + $0x1d0] sm:$0xff]
        %v358 = vld [vmem:[#allocation7 + $0x1d8] sm:$0xff]
        %v359 = vld [vmem:[#allocation7 + $0x1e0] sm:$0xff]
        %v360 = vld [vmem:[#allocation7 + $0x1e8] sm:$0xff]
        %v361 = vld [vmem:[#allocation7 + $0x1f0] sm:$0xff]
        %v362 = vld [vmem:[#allocation7 + $0x1f8] sm:$0xff]
        %v363 = vld [vmem:[#allocation7 + $0x200] sm:$0xff]
        %v364 = vld [vmem:[#allocation7 + $0x208] sm:$0xff]
        %v365 = vld [vmem:[#allocation7 + $0x210] sm:$0xff]
        %v366 = vld [vmem:[#allocation7 + $0x218] sm:$0xff]
        %v367 = vld [vmem:[#allocation7 + $0x220] sm:$0xff]
        %v368 = vld [vmem:[#allocation7 + $0x228] sm:$0xff]
        %v369 = vld [vmem:[#allocation7 + $0x230] sm:$0xff]
        %v370 = vld [vmem:[#allocation7 + $0x238] sm:$0xff]
        %v371 = vld [vmem:[#allocation7 + $0x240] sm:$0xff]
        %v372 = vld [vmem:[#allocation7 + $0x248] sm:$0xff]
        %v373 = vld [vmem:[#allocation7 + $0x250] sm:$0xff]
        %v374 = vld [vmem:[#allocation7 + $0x258] sm:$0xff]
        %v375 = vld [vmem:[#allocation7 + $0x260] sm:$0xff]
        %v376 = vld [vmem:[#allocation7 + $0x268] sm:$0xff]
        %v377 = vld [vmem:[#allocation7 + $0x270] sm:$0xff]
        %v378 = vld [vmem:[#allocation7 + $0x278] sm:$0xff]
        %v379 = vld [vmem:[#allocation7 + $0x280] sm:$0xff]
        %v380 = vld [vmem:[#allocation7 + $0x288] sm:$0xff]
        %v381 = vld [vmem:[#allocation7 + $0x290] sm:$0xff]
        %v382 = vld [vmem:[#allocation7 + $0x298] sm:$0xff]
        %v383 = vld [vmem:[#allocation7 + $0x2a0] sm:$0xff]
        %v384 = vld [vmem:[#allocation7 + $0x2a8] sm:$0xff]
        %v385 = vld [vmem:[#allocation7 + $0x2b0] sm:$0xff]
        %v386 = vld [vmem:[#allocation7 + $0x2b8] sm:$0xff]
        %v387 = vld [vmem:[#allocation7 + $0x2c0] sm:$0xff]
        %v388 = vld [vmem:[#allocation7 + $0x2c8] sm:$0xff]
        %v389 = vld [vmem:[#allocation7 + $0x2d0] sm:$0xff]
        %v390 = vld [vmem:[#allocation7 + $0x2d8] sm:$0xff]
        %v391 = vld [vmem:[#allocation7 + $0x2e0] sm:$0xff]
        %v392 = vld [vmem:[#allocation7 + $0x2e8] sm:$0xff]
        %v393 = vld [vmem:[#allocation7 + $0x2f0] sm:$0xff]
        %v394 = vld [vmem:[#allocation7 + $0x2f8] sm:$0xff]
        %v491 = vunpack.c.l.b16 %v299
        %v492 = vunpack.c.h.b16 %v299
        %v493 = vunpack.c.l.b16 %v300
        %v494 = vunpack.c.h.b16 %v300
        %v495 = vunpack.c.l.b16 %v301
        %v496 = vunpack.c.h.b16 %v301
        %v497 = vunpack.c.l.b16 %v302
        %v498 = vunpack.c.h.b16 %v302
        %v499 = vunpack.c.l.b16 %v303
        %v500 = vunpack.c.h.b16 %v303
        %v501 = vunpack.c.l.b16 %v304
        %v502 = vunpack.c.h.b16 %v304
        %v503 = vunpack.c.l.b16 %v305
        %v504 = vunpack.c.h.b16 %v305
        %v505 = vunpack.c.l.b16 %v306
        %v506 = vunpack.c.h.b16 %v306
        %v507 = vunpack.c.l.b16 %v307
        %v508 = vunpack.c.h.b16 %v307
        %v509 = vunpack.c.l.b16 %v308
        %v510 = vunpack.c.h.b16 %v308
        %v511 = vunpack.c.l.b16 %v309
        %v512 = vunpack.c.h.b16 %v309
        %v513 = vunpack.c.l.b16 %v310
        %v514 = vunpack.c.h.b16 %v310
        %v515 = vunpack.c.l.b16 %v311
        %v516 = vunpack.c.h.b16 %v311
        %v517 = vunpack.c.l.b16 %v312
        %v518 = vunpack.c.h.b16 %v312
        %v519 = vunpack.c.l.b16 %v313
        %v520 = vunpack.c.h.b16 %v313
        %v521 = vunpack.c.l.b16 %v314
        %v522 = vunpack.c.h.b16 %v314
        %v523 = vunpack.c.l.b16 %v315
        %v524 = vunpack.c.h.b16 %v315
        %v525 = vunpack.c.l.b16 %v316
        %v526 = vunpack.c.h.b16 %v316
        %v527 = vunpack.c.l.b16 %v317
        %v528 = vunpack.c.h.b16 %v317
        %v529 = vunpack.c.l.b16 %v318
        %v530 = vunpack.c.h.b16 %v318
        %v531 = vunpack.c.l.b16 %v319
        %v532 = vunpack.c.h.b16 %v319
        %v533 = vunpack.c.l.b16 %v320
        %v534 = vunpack.c.h.b16 %v320
        %v535 = vunpack.c.l.b16 %v321
        %v536 = vunpack.c.h.b16 %v321
        %v537 = vunpack.c.l.b16 %v322
        %v538 = vunpack.c.h.b16 %v322
        %v539 = vunpack.c.l.b16 %v323
        %v540 = vunpack.c.h.b16 %v323
        %v541 = vunpack.c.l.b16 %v324
        %v542 = vunpack.c.h.b16 %v324
        %v543 = vunpack.c.l.b16 %v325
        %v544 = vunpack.c.h.b16 %v325
        %v545 = vunpack.c.l.b16 %v326
        %v546 = vunpack.c.h.b16 %v326
        %v547 = vunpack.c.l.b16 %v327
        %v548 = vunpack.c.h.b16 %v327
        %v549 = vunpack.c.l.b16 %v328
        %v550 = vunpack.c.h.b16 %v328
        %v551 = vunpack.c.l.b16 %v329
        %v552 = vunpack.c.h.b16 %v329
        %v553 = vunpack.c.l.b16 %v330
        %v554 = vunpack.c.h.b16 %v330
        %v555 = vunpack.c.l.b16 %v331
        %v556 = vunpack.c.h.b16 %v331
        %v557 = vunpack.c.l.b16 %v332
        %v558 = vunpack.c.h.b16 %v332
        %v559 = vunpack.c.l.b16 %v333
        %v560 = vunpack.c.h.b16 %v333
        %v561 = vunpack.c.l.b16 %v334
        %v562 = vunpack.c.h.b16 %v334
        %v563 = vunpack.c.l.b16 %v335
        %v564 = vunpack.c.h.b16 %v335
        %v565 = vunpack.c.l.b16 %v336
        %v566 = vunpack.c.h.b16 %v336
        %v567 = vunpack.c.l.b16 %v337
        %v568 = vunpack.c.h.b16 %v337
        %v569 = vunpack.c.l.b16 %v338
        %v570 = vunpack.c.h.b16 %v338
        %v571 = vunpack.c.l.b16 %v339
        %v572 = vunpack.c.h.b16 %v339
        %v573 = vunpack.c.l.b16 %v340
        %v574 = vunpack.c.h.b16 %v340
        %v575 = vunpack.c.l.b16 %v341
        %v576 = vunpack.c.h.b16 %v341
        %v577 = vunpack.c.l.b16 %v342
        %v578 = vunpack.c.h.b16 %v342
        %v579 = vunpack.c.l.b16 %v343
        %v580 = vunpack.c.h.b16 %v343
        %v581 = vunpack.c.l.b16 %v344
        %v582 = vunpack.c.h.b16 %v344
        %v583 = vunpack.c.l.b16 %v345
        %v584 = vunpack.c.h.b16 %v345
        %v585 = vunpack.c.l.b16 %v346
        %v586 = vunpack.c.h.b16 %v346
        %v587 = vunpack.c.l.b16 %v347
        %v588 = vunpack.c.h.b16 %v347
        %v589 = vunpack.c.l.b16 %v348
        %v590 = vunpack.c.h.b16 %v348
        %v591 = vunpack.c.l.b16 %v349
        %v592 = vunpack.c.h.b16 %v349
        %v593 = vunpack.c.l.b16 %v350
        %v594 = vunpack.c.h.b16 %v350
        %v595 = vunpack.c.l.b16 %v351
        %v596 = vunpack.c.h.b16 %v351
        %v597 = vunpack.c.l.b16 %v352
        %v598 = vunpack.c.h.b16 %v352
        %v599 = vunpack.c.l.b16 %v353
        %v600 = vunpack.c.h.b16 %v353
        %v601 = vunpack.c.l.b16 %v354
        %v602 = vunpack.c.h.b16 %v354
        %v603 = vunpack.c.l.b16 %v355
        %v604 = vunpack.c.h.b16 %v355
        %v605 = vunpack.c.l.b16 %v356
        %v606 = vunpack.c.h.b16 %v356
        %v607 = vunpack.c.l.b16 %v357
        %v608 = vunpack.c.h.b16 %v357
        %v609 = vunpack.c.l.b16 %v358
        %v610 = vunpack.c.h.b16 %v358
        %v611 = vunpack.c.l.b16 %v359
        %v612 = vunpack.c.h.b16 %v359
        %v613 = vunpack.c.l.b16 %v360
        %v614 = vunpack.c.h.b16 %v360
        %v615 = vunpack.c.l.b16 %v361
        %v616 = vunpack.c.h.b16 %v361
        %v617 = vunpack.c.l.b16 %v362
        %v618 = vunpack.c.h.b16 %v362
        %v619 = vunpack.c.l.b16 %v363
        %v620 = vunpack.c.h.b16 %v363
        %v621 = vunpack.c.l.b16 %v364
        %v622 = vunpack.c.h.b16 %v364
        %v623 = vunpack.c.l.b16 %v365
        %v624 = vunpack.c.h.b16 %v365
        %v625 = vunpack.c.l.b16 %v366
        %v626 = vunpack.c.h.b16 %v366
        %v627 = vunpack.c.l.b16 %v367
        %v628 = vunpack.c.h.b16 %v367
        %v629 = vunpack.c.l.b16 %v368
        %v630 = vunpack.c.h.b16 %v368
        %v631 = vunpack.c.l.b16 %v369
        %v632 = vunpack.c.h.b16 %v369
        %v633 = vunpack.c.l.b16 %v370
        %v634 = vunpack.c.h.b16 %v370
        %v635 = vunpack.c.l.b16 %v371
        %v636 = vunpack.c.h.b16 %v371
        %v637 = vunpack.c.l.b16 %v372
        %v638 = vunpack.c.h.b16 %v372
        %v639 = vunpack.c.l.b16 %v373
        %v640 = vunpack.c.h.b16 %v373
        %v641 = vunpack.c.l.b16 %v374
        %v642 = vunpack.c.h.b16 %v374
        %v643 = vunpack.c.l.b16 %v375
        %v644 = vunpack.c.h.b16 %v375
        %v645 = vunpack.c.l.b16 %v376
        %v646 = vunpack.c.h.b16 %v376
        %v647 = vunpack.c.l.b16 %v377
        %v648 = vunpack.c.h.b16 %v377
        %v649 = vunpack.c.l.b16 %v378
        %v650 = vunpack.c.h.b16 %v378
        %v651 = vunpack.c.l.b16 %v379
        %v652 = vunpack.c.h.b16 %v379
        %v653 = vunpack.c.l.b16 %v380
        %v654 = vunpack.c.h.b16 %v380
        %v655 = vunpack.c.l.b16 %v381
        %v656 = vunpack.c.h.b16 %v381
        %v657 = vunpack.c.l.b16 %v382
        %v658 = vunpack.c.h.b16 %v382
        %v659 = vunpack.c.l.b16 %v383
        %v660 = vunpack.c.h.b16 %v383
        %v661 = vunpack.c.l.b16 %v384
        %v662 = vunpack.c.h.b16 %v384
        %v663 = vunpack.c.l.b16 %v385
        %v664 = vunpack.c.h.b16 %v385
        %v665 = vunpack.c.l.b16 %v386
        %v666 = vunpack.c.h.b16 %v386
        %v667 = vunpack.c.l.b16 %v387
        %v668 = vunpack.c.h.b16 %v387
        %v669 = vunpack.c.l.b16 %v388
        %v670 = vunpack.c.h.b16 %v388
        %v671 = vunpack.c.l.b16 %v389
        %v672 = vunpack.c.h.b16 %v389
        %v673 = vunpack.c.l.b16 %v390
        %v674 = vunpack.c.h.b16 %v390
        %v675 = vunpack.c.l.b16 %v391
        %v676 = vunpack.c.h.b16 %v391
        %v677 = vunpack.c.l.b16 %v392
        %v678 = vunpack.c.h.b16 %v392
        %v679 = vunpack.c.l.b16 %v393
        %v680 = vunpack.c.h.b16 %v393
        %v681 = vunpack.c.l.b16 %v394
        %v682 = vunpack.c.h.b16 %v394
        %v683 = vpack.c.b16 %v497, %v491
        %v684 = vpack.c.b16 %v498, %v492
        %v685 = vpack.c.b16 %v499, %v493
        %v686 = vpack.c.b16 %v500, %v494
        %v687 = vpack.c.b16 %v501, %v495
        %v688 = vpack.c.b16 %v502, %v496
        %v689 = vpack.c.b16 %v509, %v503
        %v690 = vpack.c.b16 %v510, %v504
        %v691 = vpack.c.b16 %v511, %v505
        %v692 = vpack.c.b16 %v512, %v506
        %v693 = vpack.c.b16 %v513, %v507
        %v694 = vpack.c.b16 %v514, %v508
        %v695 = vpack.c.b16 %v521, %v515
        %v696 = vpack.c.b16 %v522, %v516
        %v697 = vpack.c.b16 %v523, %v517
        %v698 = vpack.c.b16 %v524, %v518
        %v699 = vpack.c.b16 %v525, %v519
        %v700 = vpack.c.b16 %v526, %v520
        %v701 = vpack.c.b16 %v533, %v527
        %v702 = vpack.c.b16 %v534, %v528
        %v703 = vpack.c.b16 %v535, %v529
        %v704 = vpack.c.b16 %v536, %v530
        %v705 = vpack.c.b16 %v537, %v531
        %v706 = vpack.c.b16 %v538, %v532
        %v707 = vpack.c.b16 %v545, %v539
        %v708 = vpack.c.b16 %v546, %v540
        %v709 = vpack.c.b16 %v547, %v541
        %v710 = vpack.c.b16 %v548, %v542
        %v711 = vpack.c.b16 %v549, %v543
        %v712 = vpack.c.b16 %v550, %v544
        %v713 = vpack.c.b16 %v557, %v551
        %v714 = vpack.c.b16 %v558, %v552
        %v715 = vpack.c.b16 %v559, %v553
        %v716 = vpack.c.b16 %v560, %v554
        %v717 = vpack.c.b16 %v561, %v555
        %v718 = vpack.c.b16 %v562, %v556
        %v719 = vpack.c.b16 %v569, %v563
        %v720 = vpack.c.b16 %v570, %v564
        %v721 = vpack.c.b16 %v571, %v565
        %v722 = vpack.c.b16 %v572, %v566
        %v723 = vpack.c.b16 %v573, %v567
        %v724 = vpack.c.b16 %v574, %v568
        %v725 = vpack.c.b16 %v581, %v575
        %v726 = vpack.c.b16 %v582, %v576
        %v727 = vpack.c.b16 %v583, %v577
        %v728 = vpack.c.b16 %v584, %v578
        %v729 = vpack.c.b16 %v585, %v579
        %v730 = vpack.c.b16 %v586, %v580
        %v731 = vpack.c.b16 %v593, %v587
        %v732 = vpack.c.b16 %v594, %v588
        %v733 = vpack.c.b16 %v595, %v589
        %v734 = vpack.c.b16 %v596, %v590
        %v735 = vpack.c.b16 %v597, %v591
        %v736 = vpack.c.b16 %v598, %v592
        %v737 = vpack.c.b16 %v605, %v599
        %v738 = vpack.c.b16 %v606, %v600
        %v739 = vpack.c.b16 %v607, %v601
        %v740 = vpack.c.b16 %v608, %v602
        %v741 = vpack.c.b16 %v609, %v603
        %v742 = vpack.c.b16 %v610, %v604
        %v743 = vpack.c.b16 %v617, %v611
        %v744 = vpack.c.b16 %v618, %v612
        %v745 = vpack.c.b16 %v619, %v613
        %v746 = vpack.c.b16 %v620, %v614
        %v747 = vpack.c.b16 %v621, %v615
        %v748 = vpack.c.b16 %v622, %v616
        %v749 = vpack.c.b16 %v629, %v623
        %v750 = vpack.c.b16 %v630, %v624
        %v751 = vpack.c.b16 %v631, %v625
        %v752 = vpack.c.b16 %v632, %v626
        %v753 = vpack.c.b16 %v633, %v627
        %v754 = vpack.c.b16 %v634, %v628
        %v755 = vpack.c.b16 %v641, %v635
        %v756 = vpack.c.b16 %v642, %v636
        %v757 = vpack.c.b16 %v643, %v637
        %v758 = vpack.c.b16 %v644, %v638
        %v759 = vpack.c.b16 %v645, %v639
        %v760 = vpack.c.b16 %v646, %v640
        %v761 = vpack.c.b16 %v653, %v647
        %v762 = vpack.c.b16 %v654, %v648
        %v763 = vpack.c.b16 %v655, %v649
        %v764 = vpack.c.b16 %v656, %v650
        %v765 = vpack.c.b16 %v657, %v651
        %v766 = vpack.c.b16 %v658, %v652
        %v767 = vpack.c.b16 %v665, %v659
        %v768 = vpack.c.b16 %v666, %v660
        %v769 = vpack.c.b16 %v667, %v661
        %v770 = vpack.c.b16 %v668, %v662
        %v771 = vpack.c.b16 %v669, %v663
        %v772 = vpack.c.b16 %v670, %v664
        %v773 = vpack.c.b16 %v677, %v671
        %v774 = vpack.c.b16 %v678, %v672
        %v775 = vpack.c.b16 %v679, %v673
        %v776 = vpack.c.b16 %v680, %v674
        %v777 = vpack.c.b16 %v681, %v675
        %v778 = vpack.c.b16 %v682, %v676
        %875 = vmatpush.bf16.msra.mxu0 %v725
        %876 = vmatpush.bf16.msra.mxu0 %v719
        %877 = vmatpush.bf16.msra.mxu0 %v713
        %878 = vmatpush.bf16.msra.mxu0 %v707
        %879 = vmatpush.bf16.msra.mxu0 %v701
        %880 = vmatpush.bf16.msra.mxu0 %v695
        %881 = vmatpush.bf16.msra.mxu0 %v689
        %882 = vmatpush.bf16.msra.mxu0 %v683
        %883 = vmatmul.bf16.gmra.mxu0 %v283
        %v884 = vpop.f32.mrf.mxu0
        %v885 = vadd.f32 0.0, %v884
        %v886 = vpop.f32.mrf.mxu0
        %v887 = vadd.f32 0.0, %v886
        %888 = vmatmul.bf16.gmra.mxu0 %v285
        %v889 = vpop.f32.mrf.mxu0
        %v890 = vadd.f32 0.0, %v889
        %v891 = vpop.f32.mrf.mxu0
        %v892 = vadd.f32 0.0, %v891
        %893 = vmatmul.bf16.gmra.mxu0 %v287
        %v894 = vpop.f32.mrf.mxu0
        %v895 = vadd.f32 0.0, %v894
        %v896 = vpop.f32.mrf.mxu0
        %v897 = vadd.f32 0.0, %v896
        %898 = vmatmul.bf16.gmra.mxu0 %v289
        %v899 = vpop.f32.mrf.mxu0
        %v900 = vadd.f32 0.0, %v899
        %v901 = vpop.f32.mrf.mxu0
        %v902 = vadd.f32 0.0, %v901
        %903 = vmatmul.bf16.gmra.mxu0 %v291
        %v904 = vpop.f32.mrf.mxu0
        %v905 = vadd.f32 0.0, %v904
        %v906 = vpop.f32.mrf.mxu0
        %v907 = vadd.f32 0.0, %v906
        %908 = vmatmul.bf16.gmra.mxu0 %v293
        %v909 = vpop.f32.mrf.mxu0
        %v910 = vadd.f32 0.0, %v909
        %v911 = vpop.f32.mrf.mxu0
        %v912 = vadd.f32 0.0, %v911
        %913 = vmatmul.bf16.gmra.mxu0 %v295
        %v914 = vpop.f32.mrf.mxu0
        %v915 = vadd.f32 0.0, %v914
        %v916 = vpop.f32.mrf.mxu0
        %v917 = vadd.f32 0.0, %v916
        %918 = vmatmul.bf16.gmra.mxu0 %v297
        %v919 = vpop.f32.mrf.mxu0
        %v920 = vadd.f32 0.0, %v919
        %v921 = vpop.f32.mrf.mxu0
        %v922 = vadd.f32 0.0, %v921
        %923 = vdwg.mxu0
        %924 = vmatpush.bf16.msra.mxu0 %v773
        %925 = vmatpush.bf16.msra.mxu0 %v767
        %926 = vmatpush.bf16.msra.mxu0 %v761
        %927 = vmatpush.bf16.msra.mxu0 %v755
        %928 = vmatpush.bf16.msra.mxu0 %v749
        %929 = vmatpush.bf16.msra.mxu0 %v743
        %930 = vmatpush.bf16.msra.mxu0 %v737
        %931 = vmatpush.bf16.msra.mxu0 %v731
        %932 = vmatmul.bf16.gmra.mxu0 %v284
        %v933 = vpop.f32.mrf.mxu0
        %v934 = vadd.f32 %v885, %v933
        %v935 = vpop.f32.mrf.mxu0
        %v936 = vadd.f32 %v887, %v935
        %937 = vmatmul.bf16.gmra.mxu0 %v286
        %v938 = vpop.f32.mrf.mxu0
        %v939 = vadd.f32 %v890, %v938
        %v940 = vpop.f32.mrf.mxu0
        %v941 = vadd.f32 %v892, %v940
        %942 = vmatmul.bf16.gmra.mxu0 %v288
        %v943 = vpop.f32.mrf.mxu0
        %v944 = vadd.f32 %v895, %v943
        %v945 = vpop.f32.mrf.mxu0
        %v946 = vadd.f32 %v897, %v945
        %947 = vmatmul.bf16.gmra.mxu0 %v290
        %v948 = vpop.f32.mrf.mxu0
        %v949 = vadd.f32 %v900, %v948
        %v950 = vpop.f32.mrf.mxu0
        %v951 = vadd.f32 %v902, %v950
        %952 = vmatmul.bf16.gmra.mxu0 %v292
        %v953 = vpop.f32.mrf.mxu0
        %v954 = vadd.f32 %v905, %v953
        %v955 = vpop.f32.mrf.mxu0
        %v956 = vadd.f32 %v907, %v955
        %957 = vmatmul.bf16.gmra.mxu0 %v294
        %v958 = vpop.f32.mrf.mxu0
        %v959 = vadd.f32 %v910, %v958
        %v960 = vpop.f32.mrf.mxu0
        %v961 = vadd.f32 %v912, %v960
        %962 = vmatmul.bf16.gmra.mxu0 %v296
        %v963 = vpop.f32.mrf.mxu0
        %v964 = vadd.f32 %v915, %v963
        %v965 = vpop.f32.mrf.mxu0
        %v966 = vadd.f32 %v917, %v965
        %967 = vmatmul.bf16.gmra.mxu0 %v298
        %v968 = vpop.f32.mrf.mxu0
        %v969 = vadd.f32 %v920, %v968
        %v970 = vpop.f32.mrf.mxu0
        %v971 = vadd.f32 %v922, %v970
        %972 = vdwg.mxu0
        %973 = vmatpush.bf16.msra.mxu0 %v726
        %974 = vmatpush.bf16.msra.mxu0 %v720
        %975 = vmatpush.bf16.msra.mxu0 %v714
        %976 = vmatpush.bf16.msra.mxu0 %v708
        %977 = vmatpush.bf16.msra.mxu0 %v702
        %978 = vmatpush.bf16.msra.mxu0 %v696
        %979 = vmatpush.bf16.msra.mxu0 %v690
        %980 = vmatpush.bf16.msra.mxu0 %v684
        %981 = vmatmul.bf16.gmra.mxu0 %v283
        %v982 = vpop.f32.mrf.mxu0
        %v983 = vadd.f32 0.0, %v982
        %v984 = vpop.f32.mrf.mxu0
        %v985 = vadd.f32 0.0, %v984
        %986 = vmatmul.bf16.gmra.mxu0 %v285
        %v987 = vpop.f32.mrf.mxu0
        %v988 = vadd.f32 0.0, %v987
        %v989 = vpop.f32.mrf.mxu0
        %v990 = vadd.f32 0.0, %v989
        %991 = vmatmul.bf16.gmra.mxu0 %v287
        %v992 = vpop.f32.mrf.mxu0
        %v993 = vadd.f32 0.0, %v992
        %v994 = vpop.f32.mrf.mxu0
        %v995 = vadd.f32 0.0, %v994
        %996 = vmatmul.bf16.gmra.mxu0 %v289
        %v997 = vpop.f32.mrf.mxu0
        %v998 = vadd.f32 0.0, %v997
        %v999 = vpop.f32.mrf.mxu0
        %v1000 = vadd.f32 0.0, %v999
        %1001 = vmatmul.bf16.gmra.mxu0 %v291
        %v1002 = vpop.f32.mrf.mxu0
        %v1003 = vadd.f32 0.0, %v1002
        %v1004 = vpop.f32.mrf.mxu0
        %v1005 = vadd.f32 0.0, %v1004
        %1006 = vmatmul.bf16.gmra.mxu0 %v293
        %v1007 = vpop.f32.mrf.mxu0
        %v1008 = vadd.f32 0.0, %v1007
        %v1009 = vpop.f32.mrf.mxu0
        %v1010 = vadd.f32 0.0, %v1009
        %1011 = vmatmul.bf16.gmra.mxu0 %v295
        %v1012 = vpop.f32.mrf.mxu0
        %v1013 = vadd.f32 0.0, %v1012
        %v1014 = vpop.f32.mrf.mxu0
        %v1015 = vadd.f32 0.0, %v1014
        %1016 = vmatmul.bf16.gmra.mxu0 %v297
        %v1017 = vpop.f32.mrf.mxu0
        %v1018 = vadd.f32 0.0, %v1017
        %v1019 = vpop.f32.mrf.mxu0
        %v1020 = vadd.f32 0.0, %v1019
        %1021 = vdwg.mxu0
        %1022 = vmatpush.bf16.msra.mxu0 %v774
        %1023 = vmatpush.bf16.msra.mxu0 %v768
        %1024 = vmatpush.bf16.msra.mxu0 %v762
        %1025 = vmatpush.bf16.msra.mxu0 %v756
        %1026 = vmatpush.bf16.msra.mxu0 %v750
        %1027 = vmatpush.bf16.msra.mxu0 %v744
        %1028 = vmatpush.bf16.msra.mxu0 %v738
        %1029 = vmatpush.bf16.msra.mxu0 %v732
        %1030 = vmatmul.bf16.gmra.mxu0 %v284
        %v1031 = vpop.f32.mrf.mxu0
        %v1032 = vadd.f32 %v983, %v1031
        %v1033 = vpop.f32.mrf.mxu0
        %v1034 = vadd.f32 %v985, %v1033
        %1035 = vmatmul.bf16.gmra.mxu0 %v286
        %v1036 = vpop.f32.mrf.mxu0
        %v1037 = vadd.f32 %v988, %v1036
        %v1038 = vpop.f32.mrf.mxu0
        %v1039 = vadd.f32 %v990, %v1038
        %1040 = vmatmul.bf16.gmra.mxu0 %v288
        %v1041 = vpop.f32.mrf.mxu0
        %v1042 = vadd.f32 %v993, %v1041
        %v1043 = vpop.f32.mrf.mxu0
        %v1044 = vadd.f32 %v995, %v1043
        %1045 = vmatmul.bf16.gmra.mxu0 %v290
        %v1046 = vpop.f32.mrf.mxu0
        %v1047 = vadd.f32 %v998, %v1046
        %v1048 = vpop.f32.mrf.mxu0
        %v1049 = vadd.f32 %v1000, %v1048
        %1050 = vmatmul.bf16.gmra.mxu0 %v292
        %v1051 = vpop.f32.mrf.mxu0
        %v1052 = vadd.f32 %v1003, %v1051
        %v1053 = vpop.f32.mrf.mxu0
        %v1054 = vadd.f32 %v1005, %v1053
        %1055 = vmatmul.bf16.gmra.mxu0 %v294
        %v1056 = vpop.f32.mrf.mxu0
        %v1057 = vadd.f32 %v1008, %v1056
        %v1058 = vpop.f32.mrf.mxu0
        %v1059 = vadd.f32 %v1010, %v1058
        %1060 = vmatmul.bf16.gmra.mxu0 %v296
        %v1061 = vpop.f32.mrf.mxu0
        %v1062 = vadd.f32 %v1013, %v1061
        %v1063 = vpop.f32.mrf.mxu0
        %v1064 = vadd.f32 %v1015, %v1063
        %1065 = vmatmul.bf16.gmra.mxu0 %v298
        %v1066 = vpop.f32.mrf.mxu0
        %v1067 = vadd.f32 %v1018, %v1066
        %v1068 = vpop.f32.mrf.mxu0
        %v1069 = vadd.f32 %v1020, %v1068
        %1070 = vdwg.mxu0
        %1071 = vmatpush.bf16.msra.mxu0 %v727
        %1072 = vmatpush.bf16.msra.mxu0 %v721
        %1073 = vmatpush.bf16.msra.mxu0 %v715
        %1074 = vmatpush.bf16.msra.mxu0 %v709
        %1075 = vmatpush.bf16.msra.mxu0 %v703
        %1076 = vmatpush.bf16.msra.mxu0 %v697
        %1077 = vmatpush.bf16.msra.mxu0 %v691
        %1078 = vmatpush.bf16.msra.mxu0 %v685
        %1079 = vmatmul.bf16.gmra.mxu0 %v283
        %v1080 = vpop.f32.mrf.mxu0
        %v1081 = vadd.f32 0.0, %v1080
        %v1082 = vpop.f32.mrf.mxu0
        %v1083 = vadd.f32 0.0, %v1082
        %1084 = vmatmul.bf16.gmra.mxu0 %v285
        %v1085 = vpop.f32.mrf.mxu0
        %v1086 = vadd.f32 0.0, %v1085
        %v1087 = vpop.f32.mrf.mxu0
        %v1088 = vadd.f32 0.0, %v1087
        %1089 = vmatmul.bf16.gmra.mxu0 %v287
        %v1090 = vpop.f32.mrf.mxu0
        %v1091 = vadd.f32 0.0, %v1090
        %v1092 = vpop.f32.mrf.mxu0
        %v1093 = vadd.f32 0.0, %v1092
        %1094 = vmatmul.bf16.gmra.mxu0 %v289
        %v1095 = vpop.f32.mrf.mxu0
        %v1096 = vadd.f32 0.0, %v1095
        %v1097 = vpop.f32.mrf.mxu0
        %v1098 = vadd.f32 0.0, %v1097
        %1099 = vmatmul.bf16.gmra.mxu0 %v291
        %v1100 = vpop.f32.mrf.mxu0
        %v1101 = vadd.f32 0.0, %v1100
        %v1102 = vpop.f32.mrf.mxu0
        %v1103 = vadd.f32 0.0, %v1102
        %1104 = vmatmul.bf16.gmra.mxu0 %v293
        %v1105 = vpop.f32.mrf.mxu0
        %v1106 = vadd.f32 0.0, %v1105
        %v1107 = vpop.f32.mrf.mxu0
        %v1108 = vadd.f32 0.0, %v1107
        %1109 = vmatmul.bf16.gmra.mxu0 %v295
        %v1110 = vpop.f32.mrf.mxu0
        %v1111 = vadd.f32 0.0, %v1110
        %v1112 = vpop.f32.mrf.mxu0
        %v1113 = vadd.f32 0.0, %v1112
        %1114 = vmatmul.bf16.gmra.mxu0 %v297
        %v1115 = vpop.f32.mrf.mxu0
        %v1116 = vadd.f32 0.0, %v1115
        %v1117 = vpop.f32.mrf.mxu0
        %v1118 = vadd.f32 0.0, %v1117
        %1119 = vdwg.mxu0
        %1120 = vmatpush.bf16.msra.mxu0 %v775
        %1121 = vmatpush.bf16.msra.mxu0 %v769
        %1122 = vmatpush.bf16.msra.mxu0 %v763
        %1123 = vmatpush.bf16.msra.mxu0 %v757
        %1124 = vmatpush.bf16.msra.mxu0 %v751
        %1125 = vmatpush.bf16.msra.mxu0 %v745
        %1126 = vmatpush.bf16.msra.mxu0 %v739
        %1127 = vmatpush.bf16.msra.mxu0 %v733
        %1128 = vmatmul.bf16.gmra.mxu0 %v284
        %v1129 = vpop.f32.mrf.mxu0
        %v1130 = vadd.f32 %v1081, %v1129
        %v1131 = vpop.f32.mrf.mxu0
        %v1132 = vadd.f32 %v1083, %v1131
        %1133 = vmatmul.bf16.gmra.mxu0 %v286
        %v1134 = vpop.f32.mrf.mxu0
        %v1135 = vadd.f32 %v1086, %v1134
        %v1136 = vpop.f32.mrf.mxu0
        %v1137 = vadd.f32 %v1088, %v1136
        %1138 = vmatmul.bf16.gmra.mxu0 %v288
        %v1139 = vpop.f32.mrf.mxu0
        %v1140 = vadd.f32 %v1091, %v1139
        %v1141 = vpop.f32.mrf.mxu0
        %v1142 = vadd.f32 %v1093, %v1141
        %1143 = vmatmul.bf16.gmra.mxu0 %v290
        %v1144 = vpop.f32.mrf.mxu0
        %v1145 = vadd.f32 %v1096, %v1144
        %v1146 = vpop.f32.mrf.mxu0
        %v1147 = vadd.f32 %v1098, %v1146
        %1148 = vmatmul.bf16.gmra.mxu0 %v292
        %v1149 = vpop.f32.mrf.mxu0
        %v1150 = vadd.f32 %v1101, %v1149
        %v1151 = vpop.f32.mrf.mxu0
        %v1152 = vadd.f32 %v1103, %v1151
        %1153 = vmatmul.bf16.gmra.mxu0 %v294
        %v1154 = vpop.f32.mrf.mxu0
        %v1155 = vadd.f32 %v1106, %v1154
        %v1156 = vpop.f32.mrf.mxu0
        %v1157 = vadd.f32 %v1108, %v1156
        %1158 = vmatmul.bf16.gmra.mxu0 %v296
        %v1159 = vpop.f32.mrf.mxu0
        %v1160 = vadd.f32 %v1111, %v1159
        %v1161 = vpop.f32.mrf.mxu0
        %v1162 = vadd.f32 %v1113, %v1161
        %1163 = vmatmul.bf16.gmra.mxu0 %v298
        %v1164 = vpop.f32.mrf.mxu0
        %v1165 = vadd.f32 %v1116, %v1164
        %v1166 = vpop.f32.mrf.mxu0
        %v1167 = vadd.f32 %v1118, %v1166
        %1168 = vdwg.mxu0
        %1169 = vmatpush.bf16.msra.mxu0 %v728
        %1170 = vmatpush.bf16.msra.mxu0 %v722
        %1171 = vmatpush.bf16.msra.mxu0 %v716
        %1172 = vmatpush.bf16.msra.mxu0 %v710
        %1173 = vmatpush.bf16.msra.mxu0 %v704
        %1174 = vmatpush.bf16.msra.mxu0 %v698
        %1175 = vmatpush.bf16.msra.mxu0 %v692
        %1176 = vmatpush.bf16.msra.mxu0 %v686
        %1177 = vmatmul.bf16.gmra.mxu0 %v283
        %v1178 = vpop.f32.mrf.mxu0
        %v1179 = vadd.f32 0.0, %v1178
        %v1180 = vpop.f32.mrf.mxu0
        %v1181 = vadd.f32 0.0, %v1180
        %1182 = vmatmul.bf16.gmra.mxu0 %v285
        %v1183 = vpop.f32.mrf.mxu0
        %v1184 = vadd.f32 0.0, %v1183
        %v1185 = vpop.f32.mrf.mxu0
        %v1186 = vadd.f32 0.0, %v1185
        %1187 = vmatmul.bf16.gmra.mxu0 %v287
        %v1188 = vpop.f32.mrf.mxu0
        %v1189 = vadd.f32 0.0, %v1188
        %v1190 = vpop.f32.mrf.mxu0
        %v1191 = vadd.f32 0.0, %v1190
        %1192 = vmatmul.bf16.gmra.mxu0 %v289
        %v1193 = vpop.f32.mrf.mxu0
        %v1194 = vadd.f32 0.0, %v1193
        %v1195 = vpop.f32.mrf.mxu0
        %v1196 = vadd.f32 0.0, %v1195
        %1197 = vmatmul.bf16.gmra.mxu0 %v291
        %v1198 = vpop.f32.mrf.mxu0
        %v1199 = vadd.f32 0.0, %v1198
        %v1200 = vpop.f32.mrf.mxu0
        %v1201 = vadd.f32 0.0, %v1200
        %1202 = vmatmul.bf16.gmra.mxu0 %v293
        %v1203 = vpop.f32.mrf.mxu0
        %v1204 = vadd.f32 0.0, %v1203
        %v1205 = vpop.f32.mrf.mxu0
        %v1206 = vadd.f32 0.0, %v1205
        %1207 = vmatmul.bf16.gmra.mxu0 %v295
        %v1208 = vpop.f32.mrf.mxu0
        %v1209 = vadd.f32 0.0, %v1208
        %v1210 = vpop.f32.mrf.mxu0
        %v1211 = vadd.f32 0.0, %v1210
        %1212 = vmatmul.bf16.gmra.mxu0 %v297
        %v1213 = vpop.f32.mrf.mxu0
        %v1214 = vadd.f32 0.0, %v1213
        %v1215 = vpop.f32.mrf.mxu0
        %v1216 = vadd.f32 0.0, %v1215
        %1217 = vdwg.mxu0
        %1218 = vmatpush.bf16.msra.mxu0 %v776
        %1219 = vmatpush.bf16.msra.mxu0 %v770
        %1220 = vmatpush.bf16.msra.mxu0 %v764
        %1221 = vmatpush.bf16.msra.mxu0 %v758
        %1222 = vmatpush.bf16.msra.mxu0 %v752
        %1223 = vmatpush.bf16.msra.mxu0 %v746
        %1224 = vmatpush.bf16.msra.mxu0 %v740
        %1225 = vmatpush.bf16.msra.mxu0 %v734
        %1226 = vmatmul.bf16.gmra.mxu0 %v284
        %v1227 = vpop.f32.mrf.mxu0
        %v1228 = vadd.f32 %v1179, %v1227
        %v1229 = vpop.f32.mrf.mxu0
        %v1230 = vadd.f32 %v1181, %v1229
        %1231 = vmatmul.bf16.gmra.mxu0 %v286
        %v1232 = vpop.f32.mrf.mxu0
        %v1233 = vadd.f32 %v1184, %v1232
        %v1234 = vpop.f32.mrf.mxu0
        %v1235 = vadd.f32 %v1186, %v1234
        %1236 = vmatmul.bf16.gmra.mxu0 %v288
        %v1237 = vpop.f32.mrf.mxu0
        %v1238 = vadd.f32 %v1189, %v1237
        %v1239 = vpop.f32.mrf.mxu0
        %v1240 = vadd.f32 %v1191, %v1239
        %1241 = vmatmul.bf16.gmra.mxu0 %v290
        %v1242 = vpop.f32.mrf.mxu0
        %v1243 = vadd.f32 %v1194, %v1242
        %v1244 = vpop.f32.mrf.mxu0
        %v1245 = vadd.f32 %v1196, %v1244
        %1246 = vmatmul.bf16.gmra.mxu0 %v292
        %v1247 = vpop.f32.mrf.mxu0
        %v1248 = vadd.f32 %v1199, %v1247
        %v1249 = vpop.f32.mrf.mxu0
        %v1250 = vadd.f32 %v1201, %v1249
        %1251 = vmatmul.bf16.gmra.mxu0 %v294
        %v1252 = vpop.f32.mrf.mxu0
        %v1253 = vadd.f32 %v1204, %v1252
        %v1254 = vpop.f32.mrf.mxu0
        %v1255 = vadd.f32 %v1206, %v1254
        %1256 = vmatmul.bf16.gmra.mxu0 %v296
        %v1257 = vpop.f32.mrf.mxu0
        %v1258 = vadd.f32 %v1209, %v1257
        %v1259 = vpop.f32.mrf.mxu0
        %v1260 = vadd.f32 %v1211, %v1259
        %1261 = vmatmul.bf16.gmra.mxu0 %v298
        %v1262 = vpop.f32.mrf.mxu0
        %v1263 = vadd.f32 %v1214, %v1262
        %v1264 = vpop.f32.mrf.mxu0
        %v1265 = vadd.f32 %v1216, %v1264
        %1266 = vdwg.mxu0
        %1267 = vmatpush.bf16.msra.mxu0 %v729
        %1268 = vmatpush.bf16.msra.mxu0 %v723
        %1269 = vmatpush.bf16.msra.mxu0 %v717
        %1270 = vmatpush.bf16.msra.mxu0 %v711
        %1271 = vmatpush.bf16.msra.mxu0 %v705
        %1272 = vmatpush.bf16.msra.mxu0 %v699
        %1273 = vmatpush.bf16.msra.mxu0 %v693
        %1274 = vmatpush.bf16.msra.mxu0 %v687
        %1275 = vmatmul.bf16.gmra.mxu0 %v283
        %v1276 = vpop.f32.mrf.mxu0
        %v1277 = vadd.f32 0.0, %v1276
        %v1278 = vpop.f32.mrf.mxu0
        %v1279 = vadd.f32 0.0, %v1278
        %1280 = vmatmul.bf16.gmra.mxu0 %v285
        %v1281 = vpop.f32.mrf.mxu0
        %v1282 = vadd.f32 0.0, %v1281
        %v1283 = vpop.f32.mrf.mxu0
        %v1284 = vadd.f32 0.0, %v1283
        %1285 = vmatmul.bf16.gmra.mxu0 %v287
        %v1286 = vpop.f32.mrf.mxu0
        %v1287 = vadd.f32 0.0, %v1286
        %v1288 = vpop.f32.mrf.mxu0
        %v1289 = vadd.f32 0.0, %v1288
        %1290 = vmatmul.bf16.gmra.mxu0 %v289
        %v1291 = vpop.f32.mrf.mxu0
        %v1292 = vadd.f32 0.0, %v1291
        %v1293 = vpop.f32.mrf.mxu0
        %v1294 = vadd.f32 0.0, %v1293
        %1295 = vmatmul.bf16.gmra.mxu0 %v291
        %v1296 = vpop.f32.mrf.mxu0
        %v1297 = vadd.f32 0.0, %v1296
        %v1298 = vpop.f32.mrf.mxu0
        %v1299 = vadd.f32 0.0, %v1298
        %1300 = vmatmul.bf16.gmra.mxu0 %v293
        %v1301 = vpop.f32.mrf.mxu0
        %v1302 = vadd.f32 0.0, %v1301
        %v1303 = vpop.f32.mrf.mxu0
        %v1304 = vadd.f32 0.0, %v1303
        %1305 = vmatmul.bf16.gmra.mxu0 %v295
        %v1306 = vpop.f32.mrf.mxu0
        %v1307 = vadd.f32 0.0, %v1306
        %v1308 = vpop.f32.mrf.mxu0
        %v1309 = vadd.f32 0.0, %v1308
        %1310 = vmatmul.bf16.gmra.mxu0 %v297
        %v1311 = vpop.f32.mrf.mxu0
        %v1312 = vadd.f32 0.0, %v1311
        %v1313 = vpop.f32.mrf.mxu0
        %v1314 = vadd.f32 0.0, %v1313
        %1315 = vdwg.mxu0
        %1316 = vmatpush.bf16.msra.mxu0 %v777
        %1317 = vmatpush.bf16.msra.mxu0 %v771
        %1318 = vmatpush.bf16.msra.mxu0 %v765
        %1319 = vmatpush.bf16.msra.mxu0 %v759
        %1320 = vmatpush.bf16.msra.mxu0 %v753
        %1321 = vmatpush.bf16.msra.mxu0 %v747
        %1322 = vmatpush.bf16.msra.mxu0 %v741
        %1323 = vmatpush.bf16.msra.mxu0 %v735
        %1324 = vmatmul.bf16.gmra.mxu0 %v284
        %v1325 = vpop.f32.mrf.mxu0
        %v1326 = vadd.f32 %v1277, %v1325
        %v1327 = vpop.f32.mrf.mxu0
        %v1328 = vadd.f32 %v1279, %v1327
        %1329 = vmatmul.bf16.gmra.mxu0 %v286
        %v1330 = vpop.f32.mrf.mxu0
        %v1331 = vadd.f32 %v1282, %v1330
        %v1332 = vpop.f32.mrf.mxu0
        %v1333 = vadd.f32 %v1284, %v1332
        %1334 = vmatmul.bf16.gmra.mxu0 %v288
        %v1335 = vpop.f32.mrf.mxu0
        %v1336 = vadd.f32 %v1287, %v1335
        %v1337 = vpop.f32.mrf.mxu0
        %v1338 = vadd.f32 %v1289, %v1337
        %1339 = vmatmul.bf16.gmra.mxu0 %v290
        %v1340 = vpop.f32.mrf.mxu0
        %v1341 = vadd.f32 %v1292, %v1340
        %v1342 = vpop.f32.mrf.mxu0
        %v1343 = vadd.f32 %v1294, %v1342
        %1344 = vmatmul.bf16.gmra.mxu0 %v292
        %v1345 = vpop.f32.mrf.mxu0
        %v1346 = vadd.f32 %v1297, %v1345
        %v1347 = vpop.f32.mrf.mxu0
        %v1348 = vadd.f32 %v1299, %v1347
        %1349 = vmatmul.bf16.gmra.mxu0 %v294
        %v1350 = vpop.f32.mrf.mxu0
        %v1351 = vadd.f32 %v1302, %v1350
        %v1352 = vpop.f32.mrf.mxu0
        %v1353 = vadd.f32 %v1304, %v1352
        %1354 = vmatmul.bf16.gmra.mxu0 %v296
        %v1355 = vpop.f32.mrf.mxu0
        %v1356 = vadd.f32 %v1307, %v1355
        %v1357 = vpop.f32.mrf.mxu0
        %v1358 = vadd.f32 %v1309, %v1357
        %1359 = vmatmul.bf16.gmra.mxu0 %v298
        %v1360 = vpop.f32.mrf.mxu0
        %v1361 = vadd.f32 %v1312, %v1360
        %v1362 = vpop.f32.mrf.mxu0
        %v1363 = vadd.f32 %v1314, %v1362
        %1364 = vdwg.mxu0
        %1365 = vmatpush.bf16.msra.mxu0 %v730
        %1366 = vmatpush.bf16.msra.mxu0 %v724
        %1367 = vmatpush.bf16.msra.mxu0 %v718
        %1368 = vmatpush.bf16.msra.mxu0 %v712
        %1369 = vmatpush.bf16.msra.mxu0 %v706
        %1370 = vmatpush.bf16.msra.mxu0 %v700
        %1371 = vmatpush.bf16.msra.mxu0 %v694
        %1372 = vmatpush.bf16.msra.mxu0 %v688
        %1373 = vmatmul.bf16.gmra.mxu0 %v283
        %v1374 = vpop.f32.mrf.mxu0
        %v1375 = vadd.f32 0.0, %v1374
        %v1376 = vpop.f32.mrf.mxu0
        %v1377 = vadd.f32 0.0, %v1376
        %1378 = vmatmul.bf16.gmra.mxu0 %v285
        %v1379 = vpop.f32.mrf.mxu0
        %v1380 = vadd.f32 0.0, %v1379
        %v1381 = vpop.f32.mrf.mxu0
        %v1382 = vadd.f32 0.0, %v1381
        %1383 = vmatmul.bf16.gmra.mxu0 %v287
        %v1384 = vpop.f32.mrf.mxu0
        %v1385 = vadd.f32 0.0, %v1384
        %v1386 = vpop.f32.mrf.mxu0
        %v1387 = vadd.f32 0.0, %v1386
        %1388 = vmatmul.bf16.gmra.mxu0 %v289
        %v1389 = vpop.f32.mrf.mxu0
        %v1390 = vadd.f32 0.0, %v1389
        %v1391 = vpop.f32.mrf.mxu0
        %v1392 = vadd.f32 0.0, %v1391
        %1393 = vmatmul.bf16.gmra.mxu0 %v291
        %v1394 = vpop.f32.mrf.mxu0
        %v1395 = vadd.f32 0.0, %v1394
        %v1396 = vpop.f32.mrf.mxu0
        %v1397 = vadd.f32 0.0, %v1396
        %1398 = vmatmul.bf16.gmra.mxu0 %v293
        %v1399 = vpop.f32.mrf.mxu0
        %v1400 = vadd.f32 0.0, %v1399
        %v1401 = vpop.f32.mrf.mxu0
        %v1402 = vadd.f32 0.0, %v1401
        %1403 = vmatmul.bf16.gmra.mxu0 %v295
        %v1404 = vpop.f32.mrf.mxu0
        %v1405 = vadd.f32 0.0, %v1404
        %v1406 = vpop.f32.mrf.mxu0
        %v1407 = vadd.f32 0.0, %v1406
        %1408 = vmatmul.bf16.gmra.mxu0 %v297
        %v1409 = vpop.f32.mrf.mxu0
        %v1410 = vadd.f32 0.0, %v1409
        %v1411 = vpop.f32.mrf.mxu0
        %v1412 = vadd.f32 0.0, %v1411
        %1413 = vdwg.mxu0
        %1414 = vmatpush.bf16.msra.mxu0 %v778
        %1415 = vmatpush.bf16.msra.mxu0 %v772
        %1416 = vmatpush.bf16.msra.mxu0 %v766
        %1417 = vmatpush.bf16.msra.mxu0 %v760
        %1418 = vmatpush.bf16.msra.mxu0 %v754
        %1419 = vmatpush.bf16.msra.mxu0 %v748
        %1420 = vmatpush.bf16.msra.mxu0 %v742
        %1421 = vmatpush.bf16.msra.mxu0 %v736
        %1422 = vmatmul.bf16.gmra.mxu0 %v284
        %v1423 = vpop.f32.mrf.mxu0
        %v1424 = vadd.f32 %v1375, %v1423
        %v1425 = vpop.f32.mrf.mxu0
        %v1426 = vadd.f32 %v1377, %v1425
        %1427 = vmatmul.bf16.gmra.mxu0 %v286
        %v1428 = vpop.f32.mrf.mxu0
        %v1429 = vadd.f32 %v1380, %v1428
        %v1430 = vpop.f32.mrf.mxu0
        %v1431 = vadd.f32 %v1382, %v1430
        %1432 = vmatmul.bf16.gmra.mxu0 %v288
        %v1433 = vpop.f32.mrf.mxu0
        %v1434 = vadd.f32 %v1385, %v1433
        %v1435 = vpop.f32.mrf.mxu0
        %v1436 = vadd.f32 %v1387, %v1435
        %1437 = vmatmul.bf16.gmra.mxu0 %v290
        %v1438 = vpop.f32.mrf.mxu0
        %v1439 = vadd.f32 %v1390, %v1438
        %v1440 = vpop.f32.mrf.mxu0
        %v1441 = vadd.f32 %v1392, %v1440
        %1442 = vmatmul.bf16.gmra.mxu0 %v292
        %v1443 = vpop.f32.mrf.mxu0
        %v1444 = vadd.f32 %v1395, %v1443
        %v1445 = vpop.f32.mrf.mxu0
        %v1446 = vadd.f32 %v1397, %v1445
        %1447 = vmatmul.bf16.gmra.mxu0 %v294
        %v1448 = vpop.f32.mrf.mxu0
        %v1449 = vadd.f32 %v1400, %v1448
        %v1450 = vpop.f32.mrf.mxu0
        %v1451 = vadd.f32 %v1402, %v1450
        %1452 = vmatmul.bf16.gmra.mxu0 %v296
        %v1453 = vpop.f32.mrf.mxu0
        %v1454 = vadd.f32 %v1405, %v1453
        %v1455 = vpop.f32.mrf.mxu0
        %v1456 = vadd.f32 %v1407, %v1455
        %1457 = vmatmul.bf16.gmra.mxu0 %v298
        %v1458 = vpop.f32.mrf.mxu0
        %v1459 = vadd.f32 %v1410, %v1458
        %v1460 = vpop.f32.mrf.mxu0
        %v1461 = vadd.f32 %v1412, %v1460
        %1462 = vdwg.mxu0
        %v1463 = vpack.c.bf16 %v1032, %v934
        %v1464 = vpack.c.bf16 %v1228, %v1130
        %v1465 = vpack.c.bf16 %v1424, %v1326
        %v1466 = vpack.c.bf16 %v1034, %v936
        %v1467 = vpack.c.bf16 %v1230, %v1132
        %v1468 = vpack.c.bf16 %v1426, %v1328
        %v1469 = vpack.c.bf16 %v1037, %v939
        %v1470 = vpack.c.bf16 %v1233, %v1135
        %v1471 = vpack.c.bf16 %v1429, %v1331
        %v1472 = vpack.c.bf16 %v1039, %v941
        %v1473 = vpack.c.bf16 %v1235, %v1137
        %v1474 = vpack.c.bf16 %v1431, %v1333
        %v1475 = vpack.c.bf16 %v1042, %v944
        %v1476 = vpack.c.bf16 %v1238, %v1140
        %v1477 = vpack.c.bf16 %v1434, %v1336
        %v1478 = vpack.c.bf16 %v1044, %v946
        %v1479 = vpack.c.bf16 %v1240, %v1142
        %v1480 = vpack.c.bf16 %v1436, %v1338
        %v1481 = vpack.c.bf16 %v1047, %v949
        %v1482 = vpack.c.bf16 %v1243, %v1145
        %v1483 = vpack.c.bf16 %v1439, %v1341
        %v1484 = vpack.c.bf16 %v1049, %v951
        %v1485 = vpack.c.bf16 %v1245, %v1147
        %v1486 = vpack.c.bf16 %v1441, %v1343
        %v1487 = vpack.c.bf16 %v1052, %v954
        %v1488 = vpack.c.bf16 %v1248, %v1150
        %v1489 = vpack.c.bf16 %v1444, %v1346
        %v1490 = vpack.c.bf16 %v1054, %v956
        %v1491 = vpack.c.bf16 %v1250, %v1152
        %v1492 = vpack.c.bf16 %v1446, %v1348
        %v1493 = vpack.c.bf16 %v1057, %v959
        %v1494 = vpack.c.bf16 %v1253, %v1155
        %v1495 = vpack.c.bf16 %v1449, %v1351
        %v1496 = vpack.c.bf16 %v1059, %v961
        %v1497 = vpack.c.bf16 %v1255, %v1157
        %v1498 = vpack.c.bf16 %v1451, %v1353
        %v1499 = vpack.c.bf16 %v1062, %v964
        %v1500 = vpack.c.bf16 %v1258, %v1160
        %v1501 = vpack.c.bf16 %v1454, %v1356
        %v1502 = vpack.c.bf16 %v1064, %v966
        %v1503 = vpack.c.bf16 %v1260, %v1162
        %v1504 = vpack.c.bf16 %v1456, %v1358
        %v1505 = vpack.c.bf16 %v1067, %v969
        %v1506 = vpack.c.bf16 %v1263, %v1165
        %v1507 = vpack.c.bf16 %v1459, %v1361
        %v1508 = vpack.c.bf16 %v1069, %v971
        %v1509 = vpack.c.bf16 %v1265, %v1167
        %v1510 = vpack.c.bf16 %v1461, %v1363
        %1511 = vst [vmem:[#allocation2] sm:$0xff] %v1463
        %1512 = vst [vmem:[#allocation2 + $0x8] sm:$0xff] %v1464
        %1513 = vst [vmem:[#allocation2 + $0x10] sm:$0xff] %v1465
        %1514 = vst [vmem:[#allocation2 + $0x18] sm:$0xff] %v1466
        %1515 = vst [vmem:[#allocation2 + $0x20] sm:$0xff] %v1467
        %1516 = vst [vmem:[#allocation2 + $0x28] sm:$0xff] %v1468
        %1517 = vst [vmem:[#allocation2 + $0x30] sm:$0xff] %v1469
        %1518 = vst [vmem:[#allocation2 + $0x38] sm:$0xff] %v1470
        %1519 = vst [vmem:[#allocation2 + $0x40] sm:$0xff] %v1471
        %1520 = vst [vmem:[#allocation2 + $0x48] sm:$0xff] %v1472
        %1521 = vst [vmem:[#allocation2 + $0x50] sm:$0xff] %v1473
        %1522 = vst [vmem:[#allocation2 + $0x58] sm:$0xff] %v1474
        %1523 = vst [vmem:[#allocation2 + $0x60] sm:$0xff] %v1475
        %1524 = vst [vmem:[#allocation2 + $0x68] sm:$0xff] %v1476
        %1525 = vst [vmem:[#allocation2 + $0x70] sm:$0xff] %v1477
        %1526 = vst [vmem:[#allocation2 + $0x78] sm:$0xff] %v1478
        %1527 = vst [vmem:[#allocation2 + $0x80] sm:$0xff] %v1479
        %1528 = vst [vmem:[#allocation2 + $0x88] sm:$0xff] %v1480
        %1529 = vst [vmem:[#allocation2 + $0x90] sm:$0xff] %v1481
        %1530 = vst [vmem:[#allocation2 + $0x98] sm:$0xff] %v1482
        %1531 = vst [vmem:[#allocation2 + $0xa0] sm:$0xff] %v1483
        %1532 = vst [vmem:[#allocation2 + $0xa8] sm:$0xff] %v1484
        %1533 = vst [vmem:[#allocation2 + $0xb0] sm:$0xff] %v1485
        %1534 = vst [vmem:[#allocation2 + $0xb8] sm:$0xff] %v1486
        %1535 = vst [vmem:[#allocation2 + $0xc0] sm:$0xff] %v1487
        %1536 = vst [vmem:[#allocation2 + $0xc8] sm:$0xff] %v1488
        %1537 = vst [vmem:[#allocation2 + $0xd0] sm:$0xff] %v1489
        %1538 = vst [vmem:[#allocation2 + $0xd8] sm:$0xff] %v1490
        %1539 = vst [vmem:[#allocation2 + $0xe0] sm:$0xff] %v1491
        %1540 = vst [vmem:[#allocation2 + $0xe8] sm:$0xff] %v1492
        %1541 = vst [vmem:[#allocation2 + $0xf0] sm:$0xff] %v1493
        %1542 = vst [vmem:[#allocation2 + $0xf8] sm:$0xff] %v1494
        %1543 = vst [vmem:[#allocation2 + $0x100] sm:$0xff] %v1495
        %1544 = vst [vmem:[#allocation2 + $0x108] sm:$0xff] %v1496
        %1545 = vst [vmem:[#allocation2 + $0x110] sm:$0xff] %v1497
        %1546 = vst [vmem:[#allocation2 + $0x118] sm:$0xff] %v1498
        %1547 = vst [vmem:[#allocation2 + $0x120] sm:$0xff] %v1499
        %1548 = vst [vmem:[#allocation2 + $0x128] sm:$0xff] %v1500
        %1549 = vst [vmem:[#allocation2 + $0x130] sm:$0xff] %v1501
        %1550 = vst [vmem:[#allocation2 + $0x138] sm:$0xff] %v1502
        %1551 = vst [vmem:[#allocation2 + $0x140] sm:$0xff] %v1503
        %1552 = vst [vmem:[#allocation2 + $0x148] sm:$0xff] %v1504
        %1553 = vst [vmem:[#allocation2 + $0x150] sm:$0xff] %v1505
        %1554 = vst [vmem:[#allocation2 + $0x158] sm:$0xff] %v1506
        %1555 = vst [vmem:[#allocation2 + $0x160] sm:$0xff] %v1507
        %1556 = vst [vmem:[#allocation2 + $0x168] sm:$0xff] %v1508
        %1557 = vst [vmem:[#allocation2 + $0x170] sm:$0xff] %v1509
        %1558 = vst [vmem:[#allocation2 + $0x178] sm:$0xff] %v1510
        %v1559 = vlaneseq
        %v1560 = vshrl.u32 %v1559, 7
        %v1561 = vadd.s32 %v1560, 8
        %v1562 = vadd.s32 %v1560, 16
        %v1563 = vadd.s32 %v1560, 24
        %v1564 = vadd.s32 %v1560, 32
        %v1565 = vadd.s32 %v1560, 40
        %v1566 = vadd.s32 %v1560, 48
        %v1567 = vadd.s32 %v1560, 56
        %v1568 = vadd.s32 %v1560, 64
        %v1569 = vadd.s32 %v1560, 72
        %v1570 = vadd.s32 %v1560, 80
        %v1571 = vadd.s32 %v1560, 88
        %v1572 = vadd.s32 %v1560, 96
        %v1573 = vadd.s32 %v1560, 104
        %v1574 = vadd.s32 %v1560, 112
        %v1575 = vadd.s32 %v1560, 120
        %v1576 = vlaneseq
        %v1577 = vand.u32 %v1576, 127
        %vm1578 = vcmp.ge.s32.totalorder %v1560, %v1577
        %vm1579 = vcmp.ge.s32.totalorder %v1561, %v1577
        %vm1580 = vcmp.ge.s32.totalorder %v1562, %v1577
        %vm1581 = vcmp.ge.s32.totalorder %v1563, %v1577
        %vm1582 = vcmp.ge.s32.totalorder %v1564, %v1577
        %vm1583 = vcmp.ge.s32.totalorder %v1565, %v1577
        %vm1584 = vcmp.ge.s32.totalorder %v1566, %v1577
        %vm1585 = vcmp.ge.s32.totalorder %v1567, %v1577
        %vm1586 = vcmp.ge.s32.totalorder %v1568, %v1577
        %vm1587 = vcmp.ge.s32.totalorder %v1569, %v1577
        %vm1588 = vcmp.ge.s32.totalorder %v1570, %v1577
        %vm1589 = vcmp.ge.s32.totalorder %v1571, %v1577
        %vm1590 = vcmp.ge.s32.totalorder %v1572, %v1577
        %vm1591 = vcmp.ge.s32.totalorder %v1573, %v1577
        %vm1592 = vcmp.ge.s32.totalorder %v1574, %v1577
        %vm1593 = vcmp.ge.s32.totalorder %v1575, %v1577
        %v1594 = vld [vmem:[#allocation2] sm:$0xf]
        %v1595 = vld [vmem:[#allocation2 + $0x18] sm:$0xf]
        %v1596 = vld [vmem:[#allocation2 + $0x30] sm:$0xf]
        %v1597 = vld [vmem:[#allocation2 + $0x48] sm:$0xf]
        %v1598 = vld [vmem:[#allocation2 + $0x60] sm:$0xf]
        %v1599 = vld [vmem:[#allocation2 + $0x78] sm:$0xf]
        %v1600 = vld [vmem:[#allocation2 + $0x90] sm:$0xf]
        %v1601 = vld [vmem:[#allocation2 + $0xa8] sm:$0xf]
        %v1602 = vld [vmem:[#allocation2 + $0xc0] sm:$0xf]
        %v1603 = vld [vmem:[#allocation2 + $0xd8] sm:$0xf]
        %v1604 = vld [vmem:[#allocation2 + $0xf0] sm:$0xf]
        %v1605 = vld [vmem:[#allocation2 + $0x108] sm:$0xf]
        %v1606 = vld [vmem:[#allocation2 + $0x120] sm:$0xf]
        %v1607 = vld [vmem:[#allocation2 + $0x138] sm:$0xf]
        %v1608 = vld [vmem:[#allocation2 + $0x150] sm:$0xf]
        %v1609 = vld [vmem:[#allocation2 + $0x168] sm:$0xf]
        %v1610 = vld [vmem:[#allocation2 + $0x8] sm:$0xf]
        %v1611 = vld [vmem:[#allocation2 + $0x20] sm:$0xf]
        %v1612 = vld [vmem:[#allocation2 + $0x38] sm:$0xf]
        %v1613 = vld [vmem:[#allocation2 + $0x50] sm:$0xf]
        %v1614 = vld [vmem:[#allocation2 + $0x68] sm:$0xf]
        %v1615 = vld [vmem:[#allocation2 + $0x80] sm:$0xf]
        %v1616 = vld [vmem:[#allocation2 + $0x98] sm:$0xf]
        %v1617 = vld [vmem:[#allocation2 + $0xb0] sm:$0xf]
        %v1618 = vld [vmem:[#allocation2 + $0xc8] sm:$0xf]
        %v1619 = vld [vmem:[#allocation2 + $0xe0] sm:$0xf]
        %v1620 = vld [vmem:[#allocation2 + $0xf8] sm:$0xf]
        %v1621 = vld [vmem:[#allocation2 + $0x110] sm:$0xf]
        %v1622 = vld [vmem:[#allocation2 + $0x128] sm:$0xf]
        %v1623 = vld [vmem:[#allocation2 + $0x140] sm:$0xf]
        %v1624 = vld [vmem:[#allocation2 + $0x158] sm:$0xf]
        %v1625 = vld [vmem:[#allocation2 + $0x170] sm:$0xf]
        %v1626 = vld [vmem:[#allocation2 + $0x10] sm:$0xf]
        %v1627 = vld [vmem:[#allocation2 + $0x28] sm:$0xf]
        %v1628 = vld [vmem:[#allocation2 + $0x40] sm:$0xf]
        %v1629 = vld [vmem:[#allocation2 + $0x58] sm:$0xf]
        %v1630 = vld [vmem:[#allocation2 + $0x70] sm:$0xf]
        %v1631 = vld [vmem:[#allocation2 + $0x88] sm:$0xf]
        %v1632 = vld [vmem:[#allocation2 + $0xa0] sm:$0xf]
        %v1633 = vld [vmem:[#allocation2 + $0xb8] sm:$0xf]
        %v1634 = vld [vmem:[#allocation2 + $0xd0] sm:$0xf]
        %v1635 = vld [vmem:[#allocation2 + $0xe8] sm:$0xf]
        %v1636 = vld [vmem:[#allocation2 + $0x100] sm:$0xf]
        %v1637 = vld [vmem:[#allocation2 + $0x118] sm:$0xf]
        %v1638 = vld [vmem:[#allocation2 + $0x130] sm:$0xf]
        %v1639 = vld [vmem:[#allocation2 + $0x148] sm:$0xf]
        %v1640 = vld [vmem:[#allocation2 + $0x160] sm:$0xf]
        %v1641 = vld [vmem:[#allocation2 + $0x178] sm:$0xf]
        %v1658 = vunpack.c.l.b16 %v1594
        %v1659 = vunpack.c.l.b16 %v1595
        %v1660 = vunpack.c.l.b16 %v1596
        %v1661 = vunpack.c.l.b16 %v1597
        %v1662 = vunpack.c.l.b16 %v1598
        %v1663 = vunpack.c.l.b16 %v1599
        %v1664 = vunpack.c.l.b16 %v1600
        %v1665 = vunpack.c.l.b16 %v1601
        %v1666 = vunpack.c.l.b16 %v1602
        %v1667 = vunpack.c.l.b16 %v1603
        %v1668 = vunpack.c.l.b16 %v1604
        %v1669 = vunpack.c.l.b16 %v1605
        %v1670 = vunpack.c.l.b16 %v1606
        %v1671 = vunpack.c.l.b16 %v1607
        %v1672 = vunpack.c.l.b16 %v1608
        %v1673 = vunpack.c.l.b16 %v1609
        %v1674 = vpack.c.b16 %v1659, %v1658
        %v1675 = vpack.c.b16 %v1661, %v1660
        %v1676 = vpack.c.b16 %v1663, %v1662
        %v1677 = vpack.c.b16 %v1665, %v1664
        %v1678 = vpack.c.b16 %v1667, %v1666
        %v1679 = vpack.c.b16 %v1669, %v1668
        %v1680 = vpack.c.b16 %v1671, %v1670
        %v1681 = vpack.c.b16 %v1673, %v1672
        %v1698 = vunpack.c.l.b16 %v1610
        %v1699 = vunpack.c.l.b16 %v1611
        %v1700 = vunpack.c.l.b16 %v1612
        %v1701 = vunpack.c.l.b16 %v1613
        %v1702 = vunpack.c.l.b16 %v1614
        %v1703 = vunpack.c.l.b16 %v1615
        %v1704 = vunpack.c.l.b16 %v1616
        %v1705 = vunpack.c.l.b16 %v1617
        %v1706 = vunpack.c.l.b16 %v1618
        %v1707 = vunpack.c.l.b16 %v1619
        %v1708 = vunpack.c.l.b16 %v1620
        %v1709 = vunpack.c.l.b16 %v1621
        %v1710 = vunpack.c.l.b16 %v1622
        %v1711 = vunpack.c.l.b16 %v1623
        %v1712 = vunpack.c.l.b16 %v1624
        %v1713 = vunpack.c.l.b16 %v1625
        %v1714 = vpack.c.b16 %v1699, %v1698
        %v1715 = vpack.c.b16 %v1701, %v1700
        %v1716 = vpack.c.b16 %v1703, %v1702
        %v1717 = vpack.c.b16 %v1705, %v1704
        %v1718 = vpack.c.b16 %v1707, %v1706
        %v1719 = vpack.c.b16 %v1709, %v1708
        %v1720 = vpack.c.b16 %v1711, %v1710
        %v1721 = vpack.c.b16 %v1713, %v1712
        %vm1722 = vcmask 523264
        %v1724 = vsel %vm1722, %v1674, 0
        %v1727 = vsel %vm1722, %v1675, 0
        %v1730 = vsel %vm1722, %v1676, 0
        %v1733 = vsel %vm1722, %v1677, 0
        %v1736 = vsel %vm1722, %v1678, 0
        %v1739 = vsel %vm1722, %v1679, 0
        %v1742 = vsel %vm1722, %v1680, 0
        %v1745 = vsel %vm1722, %v1681, 0
        %v1748 = vsel %vm1722, %v1714, 0
        %v1751 = vsel %vm1722, %v1715, 0
        %v1754 = vsel %vm1722, %v1716, 0
        %v1757 = vsel %vm1722, %v1717, 0
        %v1760 = vsel %vm1722, %v1718, 0
        %v1763 = vsel %vm1722, %v1719, 0
        %v1766 = vsel %vm1722, %v1720, 0
        %v1769 = vsel %vm1722, %v1721, 0
        %1771 = vmatpush.bf16.xpose.msra.mxu0 %v1769
        %1772 = vmatpush.bf16.xpose.msra.mxu0 %v1766
        %1773 = vmatpush.bf16.xpose.msra.mxu0 %v1763
        %1774 = vmatpush.bf16.xpose.msra.mxu0 %v1760
        %1775 = vmatpush.bf16.xpose.msra.mxu0 %v1757
        %1776 = vmatpush.bf16.xpose.msra.mxu0 %v1754
        %1777 = vmatpush.bf16.xpose.msra.mxu0 %v1751
        %1778 = vmatpush.bf16.xpose.msra.mxu0 %v1748
        %1779 = vmatmul.bf16.gmra.mxu0 %v1724
        %v1780 = vpop.f32.mrf.mxu0
        %v1781 = vadd.f32 0.0, %v1780
        %v1782 = vpop.f32.mrf.mxu0
        %v1783 = vadd.f32 0.0, %v1782
        %1784 = vmatmul.bf16.gmra.mxu0 %v1727
        %v1785 = vpop.f32.mrf.mxu0
        %v1786 = vadd.f32 0.0, %v1785
        %v1787 = vpop.f32.mrf.mxu0
        %v1788 = vadd.f32 0.0, %v1787
        %1789 = vmatmul.bf16.gmra.mxu0 %v1730
        %v1790 = vpop.f32.mrf.mxu0
        %v1791 = vadd.f32 0.0, %v1790
        %v1792 = vpop.f32.mrf.mxu0
        %v1793 = vadd.f32 0.0, %v1792
        %1794 = vmatmul.bf16.gmra.mxu0 %v1733
        %v1795 = vpop.f32.mrf.mxu0
        %v1796 = vadd.f32 0.0, %v1795
        %v1797 = vpop.f32.mrf.mxu0
        %v1798 = vadd.f32 0.0, %v1797
        %1799 = vmatmul.bf16.gmra.mxu0 %v1736
        %v1800 = vpop.f32.mrf.mxu0
        %v1801 = vadd.f32 0.0, %v1800
        %v1802 = vpop.f32.mrf.mxu0
        %v1803 = vadd.f32 0.0, %v1802
        %1804 = vmatmul.bf16.gmra.mxu0 %v1739
        %v1805 = vpop.f32.mrf.mxu0
        %v1806 = vadd.f32 0.0, %v1805
        %v1807 = vpop.f32.mrf.mxu0
        %v1808 = vadd.f32 0.0, %v1807
        %1809 = vmatmul.bf16.gmra.mxu0 %v1742
        %v1810 = vpop.f32.mrf.mxu0
        %v1811 = vadd.f32 0.0, %v1810
        %v1812 = vpop.f32.mrf.mxu0
        %v1813 = vadd.f32 0.0, %v1812
        %1814 = vmatmul.bf16.gmra.mxu0 %v1745
        %v1815 = vpop.f32.mrf.mxu0
        %v1816 = vadd.f32 0.0, %v1815
        %v1817 = vpop.f32.mrf.mxu0
        %v1818 = vadd.f32 0.0, %v1817
        %1819 = vdwg.mxu0
        %v1820 = vsel %vm1578, %v1781, -1e+30
        %v1821 = vsel %vm1579, %v1783, -1e+30
        %v1822 = vsel %vm1580, %v1786, -1e+30
        %v1823 = vsel %vm1581, %v1788, -1e+30
        %v1824 = vsel %vm1582, %v1791, -1e+30
        %v1825 = vsel %vm1583, %v1793, -1e+30
        %v1826 = vsel %vm1584, %v1796, -1e+30
        %v1827 = vsel %vm1585, %v1798, -1e+30
        %v1828 = vsel %vm1586, %v1801, -1e+30
        %v1829 = vsel %vm1587, %v1803, -1e+30
        %v1830 = vsel %vm1588, %v1806, -1e+30
        %v1831 = vsel %vm1589, %v1808, -1e+30
        %v1832 = vsel %vm1590, %v1811, -1e+30
        %v1833 = vsel %vm1591, %v1813, -1e+30
        %v1834 = vsel %vm1592, %v1816, -1e+30
        %v1835 = vsel %vm1593, %v1818, -1e+30
        %1836 = vmax.xlane.f32.xlu0 %v1820
        %v1837 = vpop.xlane.xlu0 %1836
        %1838 = vmax.xlane.f32.xlu0 %v1821
        %v1839 = vpop.xlane.xlu0 %1838
        %1840 = vmax.xlane.f32.xlu0 %v1822
        %v1841 = vpop.xlane.xlu0 %1840
        %1842 = vmax.xlane.f32.xlu0 %v1823
        %v1843 = vpop.xlane.xlu0 %1842
        %1844 = vmax.xlane.f32.xlu0 %v1824
        %v1845 = vpop.xlane.xlu0 %1844
        %1846 = vmax.xlane.f32.xlu0 %v1825
        %v1847 = vpop.xlane.xlu0 %1846
        %1848 = vmax.xlane.f32.xlu0 %v1826
        %v1849 = vpop.xlane.xlu0 %1848
        %1850 = vmax.xlane.f32.xlu0 %v1827
        %v1851 = vpop.xlane.xlu0 %1850
        %1852 = vmax.xlane.f32.xlu0 %v1828
        %v1853 = vpop.xlane.xlu0 %1852
        %1854 = vmax.xlane.f32.xlu0 %v1829
        %v1855 = vpop.xlane.xlu0 %1854
        %1856 = vmax.xlane.f32.xlu0 %v1830
        %v1857 = vpop.xlane.xlu0 %1856
        %1858 = vmax.xlane.f32.xlu0 %v1831
        %v1859 = vpop.xlane.xlu0 %1858
        %1860 = vmax.xlane.f32.xlu0 %v1832
        %v1861 = vpop.xlane.xlu0 %1860
        %1862 = vmax.xlane.f32.xlu0 %v1833
        %v1863 = vpop.xlane.xlu0 %1862
        %1864 = vmax.xlane.f32.xlu0 %v1834
        %v1865 = vpop.xlane.xlu0 %1864
        %1866 = vmax.xlane.f32.xlu0 %v1835
        %v1867 = vpop.xlane.xlu0 %1866
        %v1868 = vsub.f32 %v1820, %v1837
        %v1869 = vsub.f32 %v1821, %v1839
        %v1870 = vsub.f32 %v1822, %v1841
        %v1871 = vsub.f32 %v1823, %v1843
        %v1872 = vsub.f32 %v1824, %v1845
        %v1873 = vsub.f32 %v1825, %v1847
        %v1874 = vsub.f32 %v1826, %v1849
        %v1875 = vsub.f32 %v1827, %v1851
        %v1876 = vsub.f32 %v1828, %v1853
        %v1877 = vsub.f32 %v1829, %v1855
        %v1878 = vsub.f32 %v1830, %v1857
        %v1879 = vsub.f32 %v1831, %v1859
        %v1880 = vsub.f32 %v1832, %v1861
        %v1881 = vsub.f32 %v1833, %v1863
        %v1882 = vsub.f32 %v1834, %v1865
        %v1883 = vsub.f32 %v1835, %v1867
        %v1884 = vmul.f32 %v1868, 1.442695
        %v1885 = vpow.pop %v1884
        %v1886 = vmul.f32 %v1869, 1.442695
        %v1887 = vpow.pop %v1886
        %v1888 = vmul.f32 %v1870, 1.442695
        %v1889 = vpow.pop %v1888
        %v1890 = vmul.f32 %v1871, 1.442695
        %v1891 = vpow.pop %v1890
        %v1892 = vmul.f32 %v1872, 1.442695
        %v1893 = vpow.pop %v1892
        %v1894 = vmul.f32 %v1873, 1.442695
        %v1895 = vpow.pop %v1894
        %v1896 = vmul.f32 %v1874, 1.442695
        %v1897 = vpow.pop %v1896
        %v1898 = vmul.f32 %v1875, 1.442695
        %v1899 = vpow.pop %v1898
        %v1900 = vmul.f32 %v1876, 1.442695
        %v1901 = vpow.pop %v1900
        %v1902 = vmul.f32 %v1877, 1.442695
        %v1903 = vpow.pop %v1902
        %v1904 = vmul.f32 %v1878, 1.442695
        %v1905 = vpow.pop %v1904
        %v1906 = vmul.f32 %v1879, 1.442695
        %v1907 = vpow.pop %v1906
        %v1908 = vmul.f32 %v1880, 1.442695
        %v1909 = vpow.pop %v1908
        %v1910 = vmul.f32 %v1881, 1.442695
        %v1911 = vpow.pop %v1910
        %v1912 = vmul.f32 %v1882, 1.442695
        %v1913 = vpow.pop %v1912
        %v1914 = vmul.f32 %v1883, 1.442695
        %v1915 = vpow.pop %v1914
        %1916 = vadd.xlane.f32.xlu0 %v1885
        %v1917 = vpop.xlane.xlu0 %1916
        %1918 = vadd.xlane.f32.xlu0 %v1887
        %v1919 = vpop.xlane.xlu0 %1918
        %1920 = vadd.xlane.f32.xlu0 %v1889
        %v1921 = vpop.xlane.xlu0 %1920
        %1922 = vadd.xlane.f32.xlu0 %v1891
        %v1923 = vpop.xlane.xlu0 %1922
        %1924 = vadd.xlane.f32.xlu0 %v1893
        %v1925 = vpop.xlane.xlu0 %1924
        %1926 = vadd.xlane.f32.xlu0 %v1895
        %v1927 = vpop.xlane.xlu0 %1926
        %1928 = vadd.xlane.f32.xlu0 %v1897
        %v1929 = vpop.xlane.xlu0 %1928
        %1930 = vadd.xlane.f32.xlu0 %v1899
        %v1931 = vpop.xlane.xlu0 %1930
        %1932 = vadd.xlane.f32.xlu0 %v1901
        %v1933 = vpop.xlane.xlu0 %1932
        %1934 = vadd.xlane.f32.xlu0 %v1903
        %v1935 = vpop.xlane.xlu0 %1934
        %1936 = vadd.xlane.f32.xlu0 %v1905
        %v1937 = vpop.xlane.xlu0 %1936
        %1938 = vadd.xlane.f32.xlu0 %v1907
        %v1939 = vpop.xlane.xlu0 %1938
        %1940 = vadd.xlane.f32.xlu0 %v1909
        %v1941 = vpop.xlane.xlu0 %1940
        %1942 = vadd.xlane.f32.xlu0 %v1911
        %v1943 = vpop.xlane.xlu0 %1942
        %1944 = vadd.xlane.f32.xlu0 %v1913
        %v1945 = vpop.xlane.xlu0 %1944
        %1946 = vadd.xlane.f32.xlu0 %v1915
        %v1947 = vpop.xlane.xlu0 %1946
        %v1948 = vpack.c.bf16 %v1887, %v1885
        %v1949 = vpack.c.bf16 %v1891, %v1889
        %v1950 = vpack.c.bf16 %v1895, %v1893
        %v1951 = vpack.c.bf16 %v1899, %v1897
        %v1952 = vpack.c.bf16 %v1903, %v1901
        %v1953 = vpack.c.bf16 %v1907, %v1905
        %v1954 = vpack.c.bf16 %v1911, %v1909
        %v1955 = vpack.c.bf16 %v1915, %v1913
        %v1972 = vunpack.c.l.b16 %v1626
        %v1973 = vunpack.c.l.b16 %v1627
        %v1974 = vunpack.c.l.b16 %v1628
        %v1975 = vunpack.c.l.b16 %v1629
        %v1976 = vunpack.c.l.b16 %v1630
        %v1977 = vunpack.c.l.b16 %v1631
        %v1978 = vunpack.c.l.b16 %v1632
        %v1979 = vunpack.c.l.b16 %v1633
        %v1980 = vunpack.c.l.b16 %v1634
        %v1981 = vunpack.c.l.b16 %v1635
        %v1982 = vunpack.c.l.b16 %v1636
        %v1983 = vunpack.c.l.b16 %v1637
        %v1984 = vunpack.c.l.b16 %v1638
        %v1985 = vunpack.c.l.b16 %v1639
        %v1986 = vunpack.c.l.b16 %v1640
        %v1987 = vunpack.c.l.b16 %v1641
        %v1988 = vpack.c.b16 %v1973, %v1972
        %v1989 = vpack.c.b16 %v1975, %v1974
        %v1990 = vpack.c.b16 %v1977, %v1976
        %v1991 = vpack.c.b16 %v1979, %v1978
        %v1992 = vpack.c.b16 %v1981, %v1980
        %v1993 = vpack.c.b16 %v1983, %v1982
        %v1994 = vpack.c.b16 %v1985, %v1984
        %v1995 = vpack.c.b16 %v1987, %v1986
        %2004 = vmatpush.bf16.msra.mxu0 %v1995
        %2005 = vmatpush.bf16.msra.mxu0 %v1994
        %2006 = vmatpush.bf16.msra.mxu0 %v1993
        %2007 = vmatpush.bf16.msra.mxu0 %v1992
        %2008 = vmatpush.bf16.msra.mxu0 %v1991
        %2009 = vmatpush.bf16.msra.mxu0 %v1990
        %2010 = vmatpush.bf16.msra.mxu0 %v1989
        %2011 = vmatpush.bf16.msra.mxu0 %v1988
        %2012 = vmatmul.bf16.gmra.mxu0 %v1948
        %v2013 = vpop.f32.mrf.mxu0
        %v2014 = vadd.f32 0.0, %v2013
        %v2015 = vpop.f32.mrf.mxu0
        %v2016 = vadd.f32 0.0, %v2015
        %2017 = vmatmul.bf16.gmra.mxu0 %v1949
        %v2018 = vpop.f32.mrf.mxu0
        %v2019 = vadd.f32 0.0, %v2018
        %v2020 = vpop.f32.mrf.mxu0
        %v2021 = vadd.f32 0.0, %v2020
        %2022 = vmatmul.bf16.gmra.mxu0 %v1950
        %v2023 = vpop.f32.mrf.mxu0
        %v2024 = vadd.f32 0.0, %v2023
        %v2025 = vpop.f32.mrf.mxu0
        %v2026 = vadd.f32 0.0, %v2025
        %2027 = vmatmul.bf16.gmra.mxu0 %v1951
        %v2028 = vpop.f32.mrf.mxu0
        %v2029 = vadd.f32 0.0, %v2028
        %v2030 = vpop.f32.mrf.mxu0
        %v2031 = vadd.f32 0.0, %v2030
        %2032 = vmatmul.bf16.gmra.mxu0 %v1952
        %v2033 = vpop.f32.mrf.mxu0
        %v2034 = vadd.f32 0.0, %v2033
        %v2035 = vpop.f32.mrf.mxu0
        %v2036 = vadd.f32 0.0, %v2035
        %2037 = vmatmul.bf16.gmra.mxu0 %v1953
        %v2038 = vpop.f32.mrf.mxu0
        %v2039 = vadd.f32 0.0, %v2038
        %v2040 = vpop.f32.mrf.mxu0
        %v2041 = vadd.f32 0.0, %v2040
        %2042 = vmatmul.bf16.gmra.mxu0 %v1954
        %v2043 = vpop.f32.mrf.mxu0
        %v2044 = vadd.f32 0.0, %v2043
        %v2045 = vpop.f32.mrf.mxu0
        %v2046 = vadd.f32 0.0, %v2045
        %2047 = vmatmul.bf16.gmra.mxu0 %v1955
        %v2048 = vpop.f32.mrf.mxu0
        %v2049 = vadd.f32 0.0, %v2048
        %v2050 = vpop.f32.mrf.mxu0
        %v2051 = vadd.f32 0.0, %v2050
        %2052 = vdwg.mxu0
        %v2053 = vrcp.pop %v1917
        %v2054 = vmul.f32 %v1917, %v2053
        %v2055 = vsub.f32 1.0, %v2054
        %v2056 = vmul.f32 %v2053, %v2055
        %v2057 = vadd.f32 %v2053, %v2056
        %vm2058 = vweird.f32 %v1917
        %vm2059 = vweird.f32 %v2053
        %vm2060 = vmor %vm2058, %vm2059
        %v2061 = vsel %vm2060, %v2053, %v2057
        %v2062 = vand.u32 2147483647, %v1917
        %vm2063 = vcmp.eq.f32.partialorder %v2062, 8.507059e+37
        %v2064 = vand.u32 %v1917, 2147483648
        %v2065 = vor.u32 1.1754944e-38, %v2064
        %v2066 = vsel %vm2063, %v2065, %v2061
        %v2067 = vmul.f32 1.0, %v2066
        %v2068 = vrcp.pop %v1919
        %v2069 = vmul.f32 %v1919, %v2068
        %v2070 = vsub.f32 1.0, %v2069
        %v2071 = vmul.f32 %v2068, %v2070
        %v2072 = vadd.f32 %v2068, %v2071
        %vm2073 = vweird.f32 %v1919
        %vm2074 = vweird.f32 %v2068
        %vm2075 = vmor %vm2073, %vm2074
        %v2076 = vsel %vm2075, %v2068, %v2072
        %v2077 = vand.u32 2147483647, %v1919
        %vm2078 = vcmp.eq.f32.partialorder %v2077, 8.507059e+37
        %v2079 = vand.u32 %v1919, 2147483648
        %v2080 = vor.u32 1.1754944e-38, %v2079
        %v2081 = vsel %vm2078, %v2080, %v2076
        %v2082 = vmul.f32 1.0, %v2081
        %v2083 = vrcp.pop %v1921
        %v2084 = vmul.f32 %v1921, %v2083
        %v2085 = vsub.f32 1.0, %v2084
        %v2086 = vmul.f32 %v2083, %v2085
        %v2087 = vadd.f32 %v2083, %v2086
        %vm2088 = vweird.f32 %v1921
        %vm2089 = vweird.f32 %v2083
        %vm2090 = vmor %vm2088, %vm2089
        %v2091 = vsel %vm2090, %v2083, %v2087
        %v2092 = vand.u32 2147483647, %v1921
        %vm2093 = vcmp.eq.f32.partialorder %v2092, 8.507059e+37
        %v2094 = vand.u32 %v1921, 2147483648
        %v2095 = vor.u32 1.1754944e-38, %v2094
        %v2096 = vsel %vm2093, %v2095, %v2091
        %v2097 = vmul.f32 1.0, %v2096
        %v2098 = vrcp.pop %v1923
        %v2099 = vmul.f32 %v1923, %v2098
        %v2100 = vsub.f32 1.0, %v2099
        %v2101 = vmul.f32 %v2098, %v2100
        %v2102 = vadd.f32 %v2098, %v2101
        %vm2103 = vweird.f32 %v1923
        %vm2104 = vweird.f32 %v2098
        %vm2105 = vmor %vm2103, %vm2104
        %v2106 = vsel %vm2105, %v2098, %v2102
        %v2107 = vand.u32 2147483647, %v1923
        %vm2108 = vcmp.eq.f32.partialorder %v2107, 8.507059e+37
        %v2109 = vand.u32 %v1923, 2147483648
        %v2110 = vor.u32 1.1754944e-38, %v2109
        %v2111 = vsel %vm2108, %v2110, %v2106
        %v2112 = vmul.f32 1.0, %v2111
        %v2113 = vrcp.pop %v1925
        %v2114 = vmul.f32 %v1925, %v2113
        %v2115 = vsub.f32 1.0, %v2114
        %v2116 = vmul.f32 %v2113, %v2115
        %v2117 = vadd.f32 %v2113, %v2116
        %vm2118 = vweird.f32 %v1925
        %vm2119 = vweird.f32 %v2113
        %vm2120 = vmor %vm2118, %vm2119
        %v2121 = vsel %vm2120, %v2113, %v2117
        %v2122 = vand.u32 2147483647, %v1925
        %vm2123 = vcmp.eq.f32.partialorder %v2122, 8.507059e+37
        %v2124 = vand.u32 %v1925, 2147483648
        %v2125 = vor.u32 1.1754944e-38, %v2124
        %v2126 = vsel %vm2123, %v2125, %v2121
        %v2127 = vmul.f32 1.0, %v2126
        %v2128 = vrcp.pop %v1927
        %v2129 = vmul.f32 %v1927, %v2128
        %v2130 = vsub.f32 1.0, %v2129
        %v2131 = vmul.f32 %v2128, %v2130
        %v2132 = vadd.f32 %v2128, %v2131
        %vm2133 = vweird.f32 %v1927
        %vm2134 = vweird.f32 %v2128
        %vm2135 = vmor %vm2133, %vm2134
        %v2136 = vsel %vm2135, %v2128, %v2132
        %v2137 = vand.u32 2147483647, %v1927
        %vm2138 = vcmp.eq.f32.partialorder %v2137, 8.507059e+37
        %v2139 = vand.u32 %v1927, 2147483648
        %v2140 = vor.u32 1.1754944e-38, %v2139
        %v2141 = vsel %vm2138, %v2140, %v2136
        %v2142 = vmul.f32 1.0, %v2141
        %v2143 = vrcp.pop %v1929
        %v2144 = vmul.f32 %v1929, %v2143
        %v2145 = vsub.f32 1.0, %v2144
        %v2146 = vmul.f32 %v2143, %v2145
        %v2147 = vadd.f32 %v2143, %v2146
        %vm2148 = vweird.f32 %v1929
        %vm2149 = vweird.f32 %v2143
        %vm2150 = vmor %vm2148, %vm2149
        %v2151 = vsel %vm2150, %v2143, %v2147
        %v2152 = vand.u32 2147483647, %v1929
        %vm2153 = vcmp.eq.f32.partialorder %v2152, 8.507059e+37
        %v2154 = vand.u32 %v1929, 2147483648
        %v2155 = vor.u32 1.1754944e-38, %v2154
        %v2156 = vsel %vm2153, %v2155, %v2151
        %v2157 = vmul.f32 1.0, %v2156
        %v2158 = vrcp.pop %v1931
        %v2159 = vmul.f32 %v1931, %v2158
        %v2160 = vsub.f32 1.0, %v2159
        %v2161 = vmul.f32 %v2158, %v2160
        %v2162 = vadd.f32 %v2158, %v2161
        %vm2163 = vweird.f32 %v1931
        %vm2164 = vweird.f32 %v2158
        %vm2165 = vmor %vm2163, %vm2164
        %v2166 = vsel %vm2165, %v2158, %v2162
        %v2167 = vand.u32 2147483647, %v1931
        %vm2168 = vcmp.eq.f32.partialorder %v2167, 8.507059e+37
        %v2169 = vand.u32 %v1931, 2147483648
        %v2170 = vor.u32 1.1754944e-38, %v2169
        %v2171 = vsel %vm2168, %v2170, %v2166
        %v2172 = vmul.f32 1.0, %v2171
        %v2173 = vrcp.pop %v1933
        %v2174 = vmul.f32 %v1933, %v2173
        %v2175 = vsub.f32 1.0, %v2174
        %v2176 = vmul.f32 %v2173, %v2175
        %v2177 = vadd.f32 %v2173, %v2176
        %vm2178 = vweird.f32 %v1933
        %vm2179 = vweird.f32 %v2173
        %vm2180 = vmor %vm2178, %vm2179
        %v2181 = vsel %vm2180, %v2173, %v2177
        %v2182 = vand.u32 2147483647, %v1933
        %vm2183 = vcmp.eq.f32.partialorder %v2182, 8.507059e+37
        %v2184 = vand.u32 %v1933, 2147483648
        %v2185 = vor.u32 1.1754944e-38, %v2184
        %v2186 = vsel %vm2183, %v2185, %v2181
        %v2187 = vmul.f32 1.0, %v2186
        %v2188 = vrcp.pop %v1935
        %v2189 = vmul.f32 %v1935, %v2188
        %v2190 = vsub.f32 1.0, %v2189
        %v2191 = vmul.f32 %v2188, %v2190
        %v2192 = vadd.f32 %v2188, %v2191
        %vm2193 = vweird.f32 %v1935
        %vm2194 = vweird.f32 %v2188
        %vm2195 = vmor %vm2193, %vm2194
        %v2196 = vsel %vm2195, %v2188, %v2192
        %v2197 = vand.u32 2147483647, %v1935
        %vm2198 = vcmp.eq.f32.partialorder %v2197, 8.507059e+37
        %v2199 = vand.u32 %v1935, 2147483648
        %v2200 = vor.u32 1.1754944e-38, %v2199
        %v2201 = vsel %vm2198, %v2200, %v2196
        %v2202 = vmul.f32 1.0, %v2201
        %v2203 = vrcp.pop %v1937
        %v2204 = vmul.f32 %v1937, %v2203
        %v2205 = vsub.f32 1.0, %v2204
        %v2206 = vmul.f32 %v2203, %v2205
        %v2207 = vadd.f32 %v2203, %v2206
        %vm2208 = vweird.f32 %v1937
        %vm2209 = vweird.f32 %v2203
        %vm2210 = vmor %vm2208, %vm2209
        %v2211 = vsel %vm2210, %v2203, %v2207
        %v2212 = vand.u32 2147483647, %v1937
        %vm2213 = vcmp.eq.f32.partialorder %v2212, 8.507059e+37
        %v2214 = vand.u32 %v1937, 2147483648
        %v2215 = vor.u32 1.1754944e-38, %v2214
        %v2216 = vsel %vm2213, %v2215, %v2211
        %v2217 = vmul.f32 1.0, %v2216
        %v2218 = vrcp.pop %v1939
        %v2219 = vmul.f32 %v1939, %v2218
        %v2220 = vsub.f32 1.0, %v2219
        %v2221 = vmul.f32 %v2218, %v2220
        %v2222 = vadd.f32 %v2218, %v2221
        %vm2223 = vweird.f32 %v1939
        %vm2224 = vweird.f32 %v2218
        %vm2225 = vmor %vm2223, %vm2224
        %v2226 = vsel %vm2225, %v2218, %v2222
        %v2227 = vand.u32 2147483647, %v1939
        %vm2228 = vcmp.eq.f32.partialorder %v2227, 8.507059e+37
        %v2229 = vand.u32 %v1939, 2147483648
        %v2230 = vor.u32 1.1754944e-38, %v2229
        %v2231 = vsel %vm2228, %v2230, %v2226
        %v2232 = vmul.f32 1.0, %v2231
        %v2233 = vrcp.pop %v1941
        %v2234 = vmul.f32 %v1941, %v2233
        %v2235 = vsub.f32 1.0, %v2234
        %v2236 = vmul.f32 %v2233, %v2235
        %v2237 = vadd.f32 %v2233, %v2236
        %vm2238 = vweird.f32 %v1941
        %vm2239 = vweird.f32 %v2233
        %vm2240 = vmor %vm2238, %vm2239
        %v2241 = vsel %vm2240, %v2233, %v2237
        %v2242 = vand.u32 2147483647, %v1941
        %vm2243 = vcmp.eq.f32.partialorder %v2242, 8.507059e+37
        %v2244 = vand.u32 %v1941, 2147483648
        %v2245 = vor.u32 1.1754944e-38, %v2244
        %v2246 = vsel %vm2243, %v2245, %v2241
        %v2247 = vmul.f32 1.0, %v2246
        %v2248 = vrcp.pop %v1943
        %v2249 = vmul.f32 %v1943, %v2248
        %v2250 = vsub.f32 1.0, %v2249
        %v2251 = vmul.f32 %v2248, %v2250
        %v2252 = vadd.f32 %v2248, %v2251
        %vm2253 = vweird.f32 %v1943
        %vm2254 = vweird.f32 %v2248
        %vm2255 = vmor %vm2253, %vm2254
        %v2256 = vsel %vm2255, %v2248, %v2252
        %v2257 = vand.u32 2147483647, %v1943
        %vm2258 = vcmp.eq.f32.partialorder %v2257, 8.507059e+37
        %v2259 = vand.u32 %v1943, 2147483648
        %v2260 = vor.u32 1.1754944e-38, %v2259
        %v2261 = vsel %vm2258, %v2260, %v2256
        %v2262 = vmul.f32 1.0, %v2261
        %v2263 = vrcp.pop %v1945
        %v2264 = vmul.f32 %v1945, %v2263
        %v2265 = vsub.f32 1.0, %v2264
        %v2266 = vmul.f32 %v2263, %v2265
        %v2267 = vadd.f32 %v2263, %v2266
        %vm2268 = vweird.f32 %v1945
        %vm2269 = vweird.f32 %v2263
        %vm2270 = vmor %vm2268, %vm2269
        %v2271 = vsel %vm2270, %v2263, %v2267
        %v2272 = vand.u32 2147483647, %v1945
        %vm2273 = vcmp.eq.f32.partialorder %v2272, 8.507059e+37
        %v2274 = vand.u32 %v1945, 2147483648
        %v2275 = vor.u32 1.1754944e-38, %v2274
        %v2276 = vsel %vm2273, %v2275, %v2271
        %v2277 = vmul.f32 1.0, %v2276
        %v2278 = vrcp.pop %v1947
        %v2279 = vmul.f32 %v1947, %v2278
        %v2280 = vsub.f32 1.0, %v2279
        %v2281 = vmul.f32 %v2278, %v2280
        %v2282 = vadd.f32 %v2278, %v2281
        %vm2283 = vweird.f32 %v1947
        %vm2284 = vweird.f32 %v2278
        %vm2285 = vmor %vm2283, %vm2284
        %v2286 = vsel %vm2285, %v2278, %v2282
        %v2287 = vand.u32 2147483647, %v1947
        %vm2288 = vcmp.eq.f32.partialorder %v2287, 8.507059e+37
        %v2289 = vand.u32 %v1947, 2147483648
        %v2290 = vor.u32 1.1754944e-38, %v2289
        %v2291 = vsel %vm2288, %v2290, %v2286
        %v2292 = vmul.f32 1.0, %v2291
        %v2293 = vmul.f32 %v2014, %v2067
        %v2294 = vmul.f32 %v2016, %v2082
        %v2295 = vmul.f32 %v2019, %v2097
        %v2296 = vmul.f32 %v2021, %v2112
        %v2297 = vmul.f32 %v2024, %v2127
        %v2298 = vmul.f32 %v2026, %v2142
        %v2299 = vmul.f32 %v2029, %v2157
        %v2300 = vmul.f32 %v2031, %v2172
        %v2301 = vmul.f32 %v2034, %v2187
        %v2302 = vmul.f32 %v2036, %v2202
        %v2303 = vmul.f32 %v2039, %v2217
        %v2304 = vmul.f32 %v2041, %v2232
        %v2305 = vmul.f32 %v2044, %v2247
        %v2306 = vmul.f32 %v2046, %v2262
        %v2307 = vmul.f32 %v2049, %v2277
        %v2308 = vmul.f32 %v2051, %v2292
        %v2309 = vpack.c.bf16 %v2293, %v2293
        %v2310 = vpack.c.bf16 %v2294, %v2294
        %v2311 = vpack.c.bf16 %v2295, %v2295
        %v2312 = vpack.c.bf16 %v2296, %v2296
        %v2313 = vpack.c.bf16 %v2297, %v2297
        %v2314 = vpack.c.bf16 %v2298, %v2298
        %v2315 = vpack.c.bf16 %v2299, %v2299
        %v2316 = vpack.c.bf16 %v2300, %v2300
        %v2317 = vpack.c.bf16 %v2301, %v2301
        %v2318 = vpack.c.bf16 %v2302, %v2302
        %v2319 = vpack.c.bf16 %v2303, %v2303
        %v2320 = vpack.c.bf16 %v2304, %v2304
        %v2321 = vpack.c.bf16 %v2305, %v2305
        %v2322 = vpack.c.bf16 %v2306, %v2306
        %v2323 = vpack.c.bf16 %v2307, %v2307
        %v2324 = vpack.c.bf16 %v2308, %v2308
        %vm2325 = vcmask 519168
        %2326 = vst.msk [vmem:[#allocation3] sm:$0xf] %vm2325, %v2309
        %2327 = vst.msk [vmem:[#allocation3 + $0x8] sm:$0xf] %vm2325, %v2310
        %2328 = vst.msk [vmem:[#allocation3 + $0x10] sm:$0xf] %vm2325, %v2311
        %2329 = vst.msk [vmem:[#allocation3 + $0x18] sm:$0xf] %vm2325, %v2312
        %2330 = vst.msk [vmem:[#allocation3 + $0x20] sm:$0xf] %vm2325, %v2313
        %2331 = vst.msk [vmem:[#allocation3 + $0x28] sm:$0xf] %vm2325, %v2314
        %2332 = vst.msk [vmem:[#allocation3 + $0x30] sm:$0xf] %vm2325, %v2315
        %2333 = vst.msk [vmem:[#allocation3 + $0x38] sm:$0xf] %vm2325, %v2316
        %2334 = vst.msk [vmem:[#allocation3 + $0x40] sm:$0xf] %vm2325, %v2317
        %2335 = vst.msk [vmem:[#allocation3 + $0x48] sm:$0xf] %vm2325, %v2318
        %2336 = vst.msk [vmem:[#allocation3 + $0x50] sm:$0xf] %vm2325, %v2319
        %2337 = vst.msk [vmem:[#allocation3 + $0x58] sm:$0xf] %vm2325, %v2320
        %2338 = vst.msk [vmem:[#allocation3 + $0x60] sm:$0xf] %vm2325, %v2321
        %2339 = vst.msk [vmem:[#allocation3 + $0x68] sm:$0xf] %vm2325, %v2322
        %2340 = vst.msk [vmem:[#allocation3 + $0x70] sm:$0xf] %vm2325, %v2323
        %2341 = vst.msk [vmem:[#allocation3 + $0x78] sm:$0xf] %vm2325, %v2324
        %v2342 = vld [vmem:[#allocation2] sm:$0xf]
        %v2343 = vld [vmem:[#allocation2 + $0x18] sm:$0xf]
        %v2344 = vld [vmem:[#allocation2 + $0x30] sm:$0xf]
        %v2345 = vld [vmem:[#allocation2 + $0x48] sm:$0xf]
        %v2346 = vld [vmem:[#allocation2 + $0x60] sm:$0xf]
        %v2347 = vld [vmem:[#allocation2 + $0x78] sm:$0xf]
        %v2348 = vld [vmem:[#allocation2 + $0x90] sm:$0xf]
        %v2349 = vld [vmem:[#allocation2 + $0xa8] sm:$0xf]
        %v2350 = vld [vmem:[#allocation2 + $0xc0] sm:$0xf]
        %v2351 = vld [vmem:[#allocation2 + $0xd8] sm:$0xf]
        %v2352 = vld [vmem:[#allocation2 + $0xf0] sm:$0xf]
        %v2353 = vld [vmem:[#allocation2 + $0x108] sm:$0xf]
        %v2354 = vld [vmem:[#allocation2 + $0x120] sm:$0xf]
        %v2355 = vld [vmem:[#allocation2 + $0x138] sm:$0xf]
        %v2356 = vld [vmem:[#allocation2 + $0x150] sm:$0xf]
        %v2357 = vld [vmem:[#allocation2 + $0x168] sm:$0xf]
        %v2358 = vld [vmem:[#allocation2 + $0x8] sm:$0xf]
        %v2359 = vld [vmem:[#allocation2 + $0x20] sm:$0xf]
        %v2360 = vld [vmem:[#allocation2 + $0x38] sm:$0xf]
        %v2361 = vld [vmem:[#allocation2 + $0x50] sm:$0xf]
        %v2362 = vld [vmem:[#allocation2 + $0x68] sm:$0xf]
        %v2363 = vld [vmem:[#allocation2 + $0x80] sm:$0xf]
        %v2364 = vld [vmem:[#allocation2 + $0x98] sm:$0xf]
        %v2365 = vld [vmem:[#allocation2 + $0xb0] sm:$0xf]
        %v2366 = vld [vmem:[#allocation2 + $0xc8] sm:$0xf]
        %v2367 = vld [vmem:[#allocation2 + $0xe0] sm:$0xf]
        %v2368 = vld [vmem:[#allocation2 + $0xf8] sm:$0xf]
        %v2369 = vld [vmem:[#allocation2 + $0x110] sm:$0xf]
        %v2370 = vld [vmem:[#allocation2 + $0x128] sm:$0xf]
        %v2371 = vld [vmem:[#allocation2 + $0x140] sm:$0xf]
        %v2372 = vld [vmem:[#allocation2 + $0x158] sm:$0xf]
        %v2373 = vld [vmem:[#allocation2 + $0x170] sm:$0xf]
        %v2374 = vld [vmem:[#allocation2 + $0x10] sm:$0xf]
        %v2375 = vld [vmem:[#allocation2 + $0x28] sm:$0xf]
        %v2376 = vld [vmem:[#allocation2 + $0x40] sm:$0xf]
        %v2377 = vld [vmem:[#allocation2 + $0x58] sm:$0xf]
        %v2378 = vld [vmem:[#allocation2 + $0x70] sm:$0xf]
        %v2379 = vld [vmem:[#allocation2 + $0x88] sm:$0xf]
        %v2380 = vld [vmem:[#allocation2 + $0xa0] sm:$0xf]
        %v2381 = vld [vmem:[#allocation2 + $0xb8] sm:$0xf]
        %v2382 = vld [vmem:[#allocation2 + $0xd0] sm:$0xf]
        %v2383 = vld [vmem:[#allocation2 + $0xe8] sm:$0xf]
        %v2384 = vld [vmem:[#allocation2 + $0x100] sm:$0xf]
        %v2385 = vld [vmem:[#allocation2 + $0x118] sm:$0xf]
        %v2386 = vld [vmem:[#allocation2 + $0x130] sm:$0xf]
        %v2387 = vld [vmem:[#allocation2 + $0x148] sm:$0xf]
        %v2388 = vld [vmem:[#allocation2 + $0x160] sm:$0xf]
        %v2389 = vld [vmem:[#allocation2 + $0x178] sm:$0xf]
        %v2406 = vunpack.c.l.b16 %v2342
        %v2407 = vunpack.c.l.b16 %v2343
        %v2408 = vunpack.c.l.b16 %v2344
        %v2409 = vunpack.c.l.b16 %v2345
        %v2410 = vunpack.c.l.b16 %v2346
        %v2411 = vunpack.c.l.b16 %v2347
        %v2412 = vunpack.c.l.b16 %v2348
        %v2413 = vunpack.c.l.b16 %v2349
        %v2414 = vunpack.c.l.b16 %v2350
        %v2415 = vunpack.c.l.b16 %v2351
        %v2416 = vunpack.c.l.b16 %v2352
        %v2417 = vunpack.c.l.b16 %v2353
        %v2418 = vunpack.c.l.b16 %v2354
        %v2419 = vunpack.c.l.b16 %v2355
        %v2420 = vunpack.c.l.b16 %v2356
        %v2421 = vunpack.c.l.b16 %v2357
        %v2422 = vpack.c.b16 %v2407, %v2406
        %v2423 = vpack.c.b16 %v2409, %v2408
        %v2424 = vpack.c.b16 %v2411, %v2410
        %v2425 = vpack.c.b16 %v2413, %v2412
        %v2426 = vpack.c.b16 %v2415, %v2414
        %v2427 = vpack.c.b16 %v2417, %v2416
        %v2428 = vpack.c.b16 %v2419, %v2418
        %v2429 = vpack.c.b16 %v2421, %v2420
        %2430 = vrot.lane.b32.xlu0 %v2422, 64
        %v2431 = vpop.permute.xlu0 %2430
        %2432 = vrot.lane.b32.xlu0 %v2423, 64
        %v2433 = vpop.permute.xlu0 %2432
        %2434 = vrot.lane.b32.xlu0 %v2424, 64
        %v2435 = vpop.permute.xlu0 %2434
        %2436 = vrot.lane.b32.xlu0 %v2425, 64
        %v2437 = vpop.permute.xlu0 %2436
        %2438 = vrot.lane.b32.xlu0 %v2426, 64
        %v2439 = vpop.permute.xlu0 %2438
        %2440 = vrot.lane.b32.xlu0 %v2427, 64
        %v2441 = vpop.permute.xlu0 %2440
        %2442 = vrot.lane.b32.xlu0 %v2428, 64
        %v2443 = vpop.permute.xlu0 %2442
        %2444 = vrot.lane.b32.xlu0 %v2429, 64
        %v2445 = vpop.permute.xlu0 %2444
        %v2462 = vunpack.c.l.b16 %v2358
        %v2463 = vunpack.c.l.b16 %v2359
        %v2464 = vunpack.c.l.b16 %v2360
        %v2465 = vunpack.c.l.b16 %v2361
        %v2466 = vunpack.c.l.b16 %v2362
        %v2467 = vunpack.c.l.b16 %v2363
        %v2468 = vunpack.c.l.b16 %v2364
        %v2469 = vunpack.c.l.b16 %v2365
        %v2470 = vunpack.c.l.b16 %v2366
        %v2471 = vunpack.c.l.b16 %v2367
        %v2472 = vunpack.c.l.b16 %v2368
        %v2473 = vunpack.c.l.b16 %v2369
        %v2474 = vunpack.c.l.b16 %v2370
        %v2475 = vunpack.c.l.b16 %v2371
        %v2476 = vunpack.c.l.b16 %v2372
        %v2477 = vunpack.c.l.b16 %v2373
        %v2478 = vpack.c.b16 %v2463, %v2462
        %v2479 = vpack.c.b16 %v2465, %v2464
        %v2480 = vpack.c.b16 %v2467, %v2466
        %v2481 = vpack.c.b16 %v2469, %v2468
        %v2482 = vpack.c.b16 %v2471, %v2470
        %v2483 = vpack.c.b16 %v2473, %v2472
        %v2484 = vpack.c.b16 %v2475, %v2474
        %v2485 = vpack.c.b16 %v2477, %v2476
        %2486 = vrot.lane.b32.xlu0 %v2478, 64
        %v2487 = vpop.permute.xlu0 %2486
        %2488 = vrot.lane.b32.xlu0 %v2479, 64
        %v2489 = vpop.permute.xlu0 %2488
        %2490 = vrot.lane.b32.xlu0 %v2480, 64
        %v2491 = vpop.permute.xlu0 %2490
        %2492 = vrot.lane.b32.xlu0 %v2481, 64
        %v2493 = vpop.permute.xlu0 %2492
        %2494 = vrot.lane.b32.xlu0 %v2482, 64
        %v2495 = vpop.permute.xlu0 %2494
        %2496 = vrot.lane.b32.xlu0 %v2483, 64
        %v2497 = vpop.permute.xlu0 %2496
        %2498 = vrot.lane.b32.xlu0 %v2484, 64
        %v2499 = vpop.permute.xlu0 %2498
        %2500 = vrot.lane.b32.xlu0 %v2485, 64
        %v2501 = vpop.permute.xlu0 %2500
        %v2503 = vsel %vm1722, %v2431, 0
        %v2506 = vsel %vm1722, %v2433, 0
        %v2509 = vsel %vm1722, %v2435, 0
        %v2512 = vsel %vm1722, %v2437, 0
        %v2515 = vsel %vm1722, %v2439, 0
        %v2518 = vsel %vm1722, %v2441, 0
        %v2521 = vsel %vm1722, %v2443, 0
        %v2524 = vsel %vm1722, %v2445, 0
        %v2527 = vsel %vm1722, %v2487, 0
        %v2530 = vsel %vm1722, %v2489, 0
        %v2533 = vsel %vm1722, %v2491, 0
        %v2536 = vsel %vm1722, %v2493, 0
        %v2539 = vsel %vm1722, %v2495, 0
        %v2542 = vsel %vm1722, %v2497, 0
        %v2545 = vsel %vm1722, %v2499, 0
        %v2548 = vsel %vm1722, %v2501, 0
        %2550 = vmatpush.bf16.xpose.msra.mxu0 %v2548
        %2551 = vmatpush.bf16.xpose.msra.mxu0 %v2545
        %2552 = vmatpush.bf16.xpose.msra.mxu0 %v2542
        %2553 = vmatpush.bf16.xpose.msra.mxu0 %v2539
        %2554 = vmatpush.bf16.xpose.msra.mxu0 %v2536
        %2555 = vmatpush.bf16.xpose.msra.mxu0 %v2533
        %2556 = vmatpush.bf16.xpose.msra.mxu0 %v2530
        %2557 = vmatpush.bf16.xpose.msra.mxu0 %v2527
        %2558 = vmatmul.bf16.gmra.mxu0 %v2503
        %v2559 = vpop.f32.mrf.mxu0
        %v2560 = vadd.f32 0.0, %v2559
        %v2561 = vpop.f32.mrf.mxu0
        %v2562 = vadd.f32 0.0, %v2561
        %2563 = vmatmul.bf16.gmra.mxu0 %v2506
        %v2564 = vpop.f32.mrf.mxu0
        %v2565 = vadd.f32 0.0, %v2564
        %v2566 = vpop.f32.mrf.mxu0
        %v2567 = vadd.f32 0.0, %v2566
        %2568 = vmatmul.bf16.gmra.mxu0 %v2509
        %v2569 = vpop.f32.mrf.mxu0
        %v2570 = vadd.f32 0.0, %v2569
        %v2571 = vpop.f32.mrf.mxu0
        %v2572 = vadd.f32 0.0, %v2571
        %2573 = vmatmul.bf16.gmra.mxu0 %v2512
        %v2574 = vpop.f32.mrf.mxu0
        %v2575 = vadd.f32 0.0, %v2574
        %v2576 = vpop.f32.mrf.mxu0
        %v2577 = vadd.f32 0.0, %v2576
        %2578 = vmatmul.bf16.gmra.mxu0 %v2515
        %v2579 = vpop.f32.mrf.mxu0
        %v2580 = vadd.f32 0.0, %v2579
        %v2581 = vpop.f32.mrf.mxu0
        %v2582 = vadd.f32 0.0, %v2581
        %2583 = vmatmul.bf16.gmra.mxu0 %v2518
        %v2584 = vpop.f32.mrf.mxu0
        %v2585 = vadd.f32 0.0, %v2584
        %v2586 = vpop.f32.mrf.mxu0
        %v2587 = vadd.f32 0.0, %v2586
        %2588 = vmatmul.bf16.gmra.mxu0 %v2521
        %v2589 = vpop.f32.mrf.mxu0
        %v2590 = vadd.f32 0.0, %v2589
        %v2591 = vpop.f32.mrf.mxu0
        %v2592 = vadd.f32 0.0, %v2591
        %2593 = vmatmul.bf16.gmra.mxu0 %v2524
        %v2594 = vpop.f32.mrf.mxu0
        %v2595 = vadd.f32 0.0, %v2594
        %v2596 = vpop.f32.mrf.mxu0
        %v2597 = vadd.f32 0.0, %v2596
        %2598 = vdwg.mxu0
        %v2599 = vsel %vm1578, %v2560, -1e+30
        %v2600 = vsel %vm1579, %v2562, -1e+30
        %v2601 = vsel %vm1580, %v2565, -1e+30
        %v2602 = vsel %vm1581, %v2567, -1e+30
        %v2603 = vsel %vm1582, %v2570, -1e+30
        %v2604 = vsel %vm1583, %v2572, -1e+30
        %v2605 = vsel %vm1584, %v2575, -1e+30
        %v2606 = vsel %vm1585, %v2577, -1e+30
        %v2607 = vsel %vm1586, %v2580, -1e+30
        %v2608 = vsel %vm1587, %v2582, -1e+30
        %v2609 = vsel %vm1588, %v2585, -1e+30
        %v2610 = vsel %vm1589, %v2587, -1e+30
        %v2611 = vsel %vm1590, %v2590, -1e+30
        %v2612 = vsel %vm1591, %v2592, -1e+30
        %v2613 = vsel %vm1592, %v2595, -1e+30
        %v2614 = vsel %vm1593, %v2597, -1e+30
        %2615 = vmax.xlane.f32.xlu0 %v2599
        %v2616 = vpop.xlane.xlu0 %2615
        %2617 = vmax.xlane.f32.xlu0 %v2600
        %v2618 = vpop.xlane.xlu0 %2617
        %2619 = vmax.xlane.f32.xlu0 %v2601
        %v2620 = vpop.xlane.xlu0 %2619
        %2621 = vmax.xlane.f32.xlu0 %v2602
        %v2622 = vpop.xlane.xlu0 %2621
        %2623 = vmax.xlane.f32.xlu0 %v2603
        %v2624 = vpop.xlane.xlu0 %2623
        %2625 = vmax.xlane.f32.xlu0 %v2604
        %v2626 = vpop.xlane.xlu0 %2625
        %2627 = vmax.xlane.f32.xlu0 %v2605
        %v2628 = vpop.xlane.xlu0 %2627
        %2629 = vmax.xlane.f32.xlu0 %v2606
        %v2630 = vpop.xlane.xlu0 %2629
        %2631 = vmax.xlane.f32.xlu0 %v2607
        %v2632 = vpop.xlane.xlu0 %2631
        %2633 = vmax.xlane.f32.xlu0 %v2608
        %v2634 = vpop.xlane.xlu0 %2633
        %2635 = vmax.xlane.f32.xlu0 %v2609
        %v2636 = vpop.xlane.xlu0 %2635
        %2637 = vmax.xlane.f32.xlu0 %v2610
        %v2638 = vpop.xlane.xlu0 %2637
        %2639 = vmax.xlane.f32.xlu0 %v2611
        %v2640 = vpop.xlane.xlu0 %2639
        %2641 = vmax.xlane.f32.xlu0 %v2612
        %v2642 = vpop.xlane.xlu0 %2641
        %2643 = vmax.xlane.f32.xlu0 %v2613
        %v2644 = vpop.xlane.xlu0 %2643
        %2645 = vmax.xlane.f32.xlu0 %v2614
        %v2646 = vpop.xlane.xlu0 %2645
        %v2647 = vsub.f32 %v2599, %v2616
        %v2648 = vsub.f32 %v2600, %v2618
        %v2649 = vsub.f32 %v2601, %v2620
        %v2650 = vsub.f32 %v2602, %v2622
        %v2651 = vsub.f32 %v2603, %v2624
        %v2652 = vsub.f32 %v2604, %v2626
        %v2653 = vsub.f32 %v2605, %v2628
        %v2654 = vsub.f32 %v2606, %v2630
        %v2655 = vsub.f32 %v2607, %v2632
        %v2656 = vsub.f32 %v2608, %v2634
        %v2657 = vsub.f32 %v2609, %v2636
        %v2658 = vsub.f32 %v2610, %v2638
        %v2659 = vsub.f32 %v2611, %v2640
        %v2660 = vsub.f32 %v2612, %v2642
        %v2661 = vsub.f32 %v2613, %v2644
        %v2662 = vsub.f32 %v2614, %v2646
        %v2663 = vmul.f32 %v2647, 1.442695
        %v2664 = vpow.pop %v2663
        %v2665 = vmul.f32 %v2648, 1.442695
        %v2666 = vpow.pop %v2665
        %v2667 = vmul.f32 %v2649, 1.442695
        %v2668 = vpow.pop %v2667
        %v2669 = vmul.f32 %v2650, 1.442695
        %v2670 = vpow.pop %v2669
        %v2671 = vmul.f32 %v2651, 1.442695
        %v2672 = vpow.pop %v2671
        %v2673 = vmul.f32 %v2652, 1.442695
        %v2674 = vpow.pop %v2673
        %v2675 = vmul.f32 %v2653, 1.442695
        %v2676 = vpow.pop %v2675
        %v2677 = vmul.f32 %v2654, 1.442695
        %v2678 = vpow.pop %v2677
        %v2679 = vmul.f32 %v2655, 1.442695
        %v2680 = vpow.pop %v2679
        %v2681 = vmul.f32 %v2656, 1.442695
        %v2682 = vpow.pop %v2681
        %v2683 = vmul.f32 %v2657, 1.442695
        %v2684 = vpow.pop %v2683
        %v2685 = vmul.f32 %v2658, 1.442695
        %v2686 = vpow.pop %v2685
        %v2687 = vmul.f32 %v2659, 1.442695
        %v2688 = vpow.pop %v2687
        %v2689 = vmul.f32 %v2660, 1.442695
        %v2690 = vpow.pop %v2689
        %v2691 = vmul.f32 %v2661, 1.442695
        %v2692 = vpow.pop %v2691
        %v2693 = vmul.f32 %v2662, 1.442695
        %v2694 = vpow.pop %v2693
        %2695 = vadd.xlane.f32.xlu0 %v2664
        %v2696 = vpop.xlane.xlu0 %2695
        %2697 = vadd.xlane.f32.xlu0 %v2666
        %v2698 = vpop.xlane.xlu0 %2697
        %2699 = vadd.xlane.f32.xlu0 %v2668
        %v2700 = vpop.xlane.xlu0 %2699
        %2701 = vadd.xlane.f32.xlu0 %v2670
        %v2702 = vpop.xlane.xlu0 %2701
        %2703 = vadd.xlane.f32.xlu0 %v2672
        %v2704 = vpop.xlane.xlu0 %2703
        %2705 = vadd.xlane.f32.xlu0 %v2674
        %v2706 = vpop.xlane.xlu0 %2705
        %2707 = vadd.xlane.f32.xlu0 %v2676
        %v2708 = vpop.xlane.xlu0 %2707
        %2709 = vadd.xlane.f32.xlu0 %v2678
        %v2710 = vpop.xlane.xlu0 %2709
        %2711 = vadd.xlane.f32.xlu0 %v2680
        %v2712 = vpop.xlane.xlu0 %2711
        %2713 = vadd.xlane.f32.xlu0 %v2682
        %v2714 = vpop.xlane.xlu0 %2713
        %2715 = vadd.xlane.f32.xlu0 %v2684
        %v2716 = vpop.xlane.xlu0 %2715
        %2717 = vadd.xlane.f32.xlu0 %v2686
        %v2718 = vpop.xlane.xlu0 %2717
        %2719 = vadd.xlane.f32.xlu0 %v2688
        %v2720 = vpop.xlane.xlu0 %2719
        %2721 = vadd.xlane.f32.xlu0 %v2690
        %v2722 = vpop.xlane.xlu0 %2721
        %2723 = vadd.xlane.f32.xlu0 %v2692
        %v2724 = vpop.xlane.xlu0 %2723
        %2725 = vadd.xlane.f32.xlu0 %v2694
        %v2726 = vpop.xlane.xlu0 %2725
        %v2727 = vpack.c.bf16 %v2666, %v2664
        %v2728 = vpack.c.bf16 %v2670, %v2668
        %v2729 = vpack.c.bf16 %v2674, %v2672
        %v2730 = vpack.c.bf16 %v2678, %v2676
        %v2731 = vpack.c.bf16 %v2682, %v2680
        %v2732 = vpack.c.bf16 %v2686, %v2684
        %v2733 = vpack.c.bf16 %v2690, %v2688
        %v2734 = vpack.c.bf16 %v2694, %v2692
        %v2751 = vunpack.c.l.b16 %v2374
        %v2752 = vunpack.c.l.b16 %v2375
        %v2753 = vunpack.c.l.b16 %v2376
        %v2754 = vunpack.c.l.b16 %v2377
        %v2755 = vunpack.c.l.b16 %v2378
        %v2756 = vunpack.c.l.b16 %v2379
        %v2757 = vunpack.c.l.b16 %v2380
        %v2758 = vunpack.c.l.b16 %v2381
        %v2759 = vunpack.c.l.b16 %v2382
        %v2760 = vunpack.c.l.b16 %v2383
        %v2761 = vunpack.c.l.b16 %v2384
        %v2762 = vunpack.c.l.b16 %v2385
        %v2763 = vunpack.c.l.b16 %v2386
        %v2764 = vunpack.c.l.b16 %v2387
        %v2765 = vunpack.c.l.b16 %v2388
        %v2766 = vunpack.c.l.b16 %v2389
        %v2767 = vpack.c.b16 %v2752, %v2751
        %v2768 = vpack.c.b16 %v2754, %v2753
        %v2769 = vpack.c.b16 %v2756, %v2755
        %v2770 = vpack.c.b16 %v2758, %v2757
        %v2771 = vpack.c.b16 %v2760, %v2759
        %v2772 = vpack.c.b16 %v2762, %v2761
        %v2773 = vpack.c.b16 %v2764, %v2763
        %v2774 = vpack.c.b16 %v2766, %v2765
        %2775 = vrot.lane.b32.xlu0 %v2767, 64
        %v2776 = vpop.permute.xlu0 %2775
        %2777 = vrot.lane.b32.xlu0 %v2768, 64
        %v2778 = vpop.permute.xlu0 %2777
        %2779 = vrot.lane.b32.xlu0 %v2769, 64
        %v2780 = vpop.permute.xlu0 %2779
        %2781 = vrot.lane.b32.xlu0 %v2770, 64
        %v2782 = vpop.permute.xlu0 %2781
        %2783 = vrot.lane.b32.xlu0 %v2771, 64
        %v2784 = vpop.permute.xlu0 %2783
        %2785 = vrot.lane.b32.xlu0 %v2772, 64
        %v2786 = vpop.permute.xlu0 %2785
        %2787 = vrot.lane.b32.xlu0 %v2773, 64
        %v2788 = vpop.permute.xlu0 %2787
        %2789 = vrot.lane.b32.xlu0 %v2774, 64
        %v2790 = vpop.permute.xlu0 %2789
        %2799 = vmatpush.bf16.msra.mxu0 %v2790
        %2800 = vmatpush.bf16.msra.mxu0 %v2788
        %2801 = vmatpush.bf16.msra.mxu0 %v2786
        %2802 = vmatpush.bf16.msra.mxu0 %v2784
        %2803 = vmatpush.bf16.msra.mxu0 %v2782
        %2804 = vmatpush.bf16.msra.mxu0 %v2780
        %2805 = vmatpush.bf16.msra.mxu0 %v2778
        %2806 = vmatpush.bf16.msra.mxu0 %v2776
        %2807 = vmatmul.bf16.gmra.mxu0 %v2727
        %v2808 = vpop.f32.mrf.mxu0
        %v2809 = vadd.f32 0.0, %v2808
        %v2810 = vpop.f32.mrf.mxu0
        %v2811 = vadd.f32 0.0, %v2810
        %2812 = vmatmul.bf16.gmra.mxu0 %v2728
        %v2813 = vpop.f32.mrf.mxu0
        %v2814 = vadd.f32 0.0, %v2813
        %v2815 = vpop.f32.mrf.mxu0
        %v2816 = vadd.f32 0.0, %v2815
        %2817 = vmatmul.bf16.gmra.mxu0 %v2729
        %v2818 = vpop.f32.mrf.mxu0
        %v2819 = vadd.f32 0.0, %v2818
        %v2820 = vpop.f32.mrf.mxu0
        %v2821 = vadd.f32 0.0, %v2820
        %2822 = vmatmul.bf16.gmra.mxu0 %v2730
        %v2823 = vpop.f32.mrf.mxu0
        %v2824 = vadd.f32 0.0, %v2823
        %v2825 = vpop.f32.mrf.mxu0
        %v2826 = vadd.f32 0.0, %v2825
        %2827 = vmatmul.bf16.gmra.mxu0 %v2731
        %v2828 = vpop.f32.mrf.mxu0
        %v2829 = vadd.f32 0.0, %v2828
        %v2830 = vpop.f32.mrf.mxu0
        %v2831 = vadd.f32 0.0, %v2830
        %2832 = vmatmul.bf16.gmra.mxu0 %v2732
        %v2833 = vpop.f32.mrf.mxu0
        %v2834 = vadd.f32 0.0, %v2833
        %v2835 = vpop.f32.mrf.mxu0
        %v2836 = vadd.f32 0.0, %v2835
        %2837 = vmatmul.bf16.gmra.mxu0 %v2733
        %v2838 = vpop.f32.mrf.mxu0
        %v2839 = vadd.f32 0.0, %v2838
        %v2840 = vpop.f32.mrf.mxu0
        %v2841 = vadd.f32 0.0, %v2840
        %2842 = vmatmul.bf16.gmra.mxu0 %v2734
        %v2843 = vpop.f32.mrf.mxu0
        %v2844 = vadd.f32 0.0, %v2843
        %v2845 = vpop.f32.mrf.mxu0
        %v2846 = vadd.f32 0.0, %v2845
        %2847 = vdwg.mxu0
        %v2848 = vrcp.pop %v2696
        %v2849 = vmul.f32 %v2696, %v2848
        %v2850 = vsub.f32 1.0, %v2849
        %v2851 = vmul.f32 %v2848, %v2850
        %v2852 = vadd.f32 %v2848, %v2851
        %vm2853 = vweird.f32 %v2696
        %vm2854 = vweird.f32 %v2848
        %vm2855 = vmor %vm2853, %vm2854
        %v2856 = vsel %vm2855, %v2848, %v2852
        %v2857 = vand.u32 2147483647, %v2696
        %vm2858 = vcmp.eq.f32.partialorder %v2857, 8.507059e+37
        %v2859 = vand.u32 %v2696, 2147483648
        %v2860 = vor.u32 1.1754944e-38, %v2859
        %v2861 = vsel %vm2858, %v2860, %v2856
        %v2862 = vmul.f32 1.0, %v2861
        %v2863 = vrcp.pop %v2698
        %v2864 = vmul.f32 %v2698, %v2863
        %v2865 = vsub.f32 1.0, %v2864
        %v2866 = vmul.f32 %v2863, %v2865
        %v2867 = vadd.f32 %v2863, %v2866
        %vm2868 = vweird.f32 %v2698
        %vm2869 = vweird.f32 %v2863
        %vm2870 = vmor %vm2868, %vm2869
        %v2871 = vsel %vm2870, %v2863, %v2867
        %v2872 = vand.u32 2147483647, %v2698
        %vm2873 = vcmp.eq.f32.partialorder %v2872, 8.507059e+37
        %v2874 = vand.u32 %v2698, 2147483648
        %v2875 = vor.u32 1.1754944e-38, %v2874
        %v2876 = vsel %vm2873, %v2875, %v2871
        %v2877 = vmul.f32 1.0, %v2876
        %v2878 = vrcp.pop %v2700
        %v2879 = vmul.f32 %v2700, %v2878
        %v2880 = vsub.f32 1.0, %v2879
        %v2881 = vmul.f32 %v2878, %v2880
        %v2882 = vadd.f32 %v2878, %v2881
        %vm2883 = vweird.f32 %v2700
        %vm2884 = vweird.f32 %v2878
        %vm2885 = vmor %vm2883, %vm2884
        %v2886 = vsel %vm2885, %v2878, %v2882
        %v2887 = vand.u32 2147483647, %v2700
        %vm2888 = vcmp.eq.f32.partialorder %v2887, 8.507059e+37
        %v2889 = vand.u32 %v2700, 2147483648
        %v2890 = vor.u32 1.1754944e-38, %v2889
        %v2891 = vsel %vm2888, %v2890, %v2886
        %v2892 = vmul.f32 1.0, %v2891
        %v2893 = vrcp.pop %v2702
        %v2894 = vmul.f32 %v2702, %v2893
        %v2895 = vsub.f32 1.0, %v2894
        %v2896 = vmul.f32 %v2893, %v2895
        %v2897 = vadd.f32 %v2893, %v2896
        %vm2898 = vweird.f32 %v2702
        %vm2899 = vweird.f32 %v2893
        %vm2900 = vmor %vm2898, %vm2899
        %v2901 = vsel %vm2900, %v2893, %v2897
        %v2902 = vand.u32 2147483647, %v2702
        %vm2903 = vcmp.eq.f32.partialorder %v2902, 8.507059e+37
        %v2904 = vand.u32 %v2702, 2147483648
        %v2905 = vor.u32 1.1754944e-38, %v2904
        %v2906 = vsel %vm2903, %v2905, %v2901
        %v2907 = vmul.f32 1.0, %v2906
        %v2908 = vrcp.pop %v2704
        %v2909 = vmul.f32 %v2704, %v2908
        %v2910 = vsub.f32 1.0, %v2909
        %v2911 = vmul.f32 %v2908, %v2910
        %v2912 = vadd.f32 %v2908, %v2911
        %vm2913 = vweird.f32 %v2704
        %vm2914 = vweird.f32 %v2908
        %vm2915 = vmor %vm2913, %vm2914
        %v2916 = vsel %vm2915, %v2908, %v2912
        %v2917 = vand.u32 2147483647, %v2704
        %vm2918 = vcmp.eq.f32.partialorder %v2917, 8.507059e+37
        %v2919 = vand.u32 %v2704, 2147483648
        %v2920 = vor.u32 1.1754944e-38, %v2919
        %v2921 = vsel %vm2918, %v2920, %v2916
        %v2922 = vmul.f32 1.0, %v2921
        %v2923 = vrcp.pop %v2706
        %v2924 = vmul.f32 %v2706, %v2923
        %v2925 = vsub.f32 1.0, %v2924
        %v2926 = vmul.f32 %v2923, %v2925
        %v2927 = vadd.f32 %v2923, %v2926
        %vm2928 = vweird.f32 %v2706
        %vm2929 = vweird.f32 %v2923
        %vm2930 = vmor %vm2928, %vm2929
        %v2931 = vsel %vm2930, %v2923, %v2927
        %v2932 = vand.u32 2147483647, %v2706
        %vm2933 = vcmp.eq.f32.partialorder %v2932, 8.507059e+37
        %v2934 = vand.u32 %v2706, 2147483648
        %v2935 = vor.u32 1.1754944e-38, %v2934
        %v2936 = vsel %vm2933, %v2935, %v2931
        %v2937 = vmul.f32 1.0, %v2936
        %v2938 = vrcp.pop %v2708
        %v2939 = vmul.f32 %v2708, %v2938
        %v2940 = vsub.f32 1.0, %v2939
        %v2941 = vmul.f32 %v2938, %v2940
        %v2942 = vadd.f32 %v2938, %v2941
        %vm2943 = vweird.f32 %v2708
        %vm2944 = vweird.f32 %v2938
        %vm2945 = vmor %vm2943, %vm2944
        %v2946 = vsel %vm2945, %v2938, %v2942
        %v2947 = vand.u32 2147483647, %v2708
        %vm2948 = vcmp.eq.f32.partialorder %v2947, 8.507059e+37
        %v2949 = vand.u32 %v2708, 2147483648
        %v2950 = vor.u32 1.1754944e-38, %v2949
        %v2951 = vsel %vm2948, %v2950, %v2946
        %v2952 = vmul.f32 1.0, %v2951
        %v2953 = vrcp.pop %v2710
        %v2954 = vmul.f32 %v2710, %v2953
        %v2955 = vsub.f32 1.0, %v2954
        %v2956 = vmul.f32 %v2953, %v2955
        %v2957 = vadd.f32 %v2953, %v2956
        %vm2958 = vweird.f32 %v2710
        %vm2959 = vweird.f32 %v2953
        %vm2960 = vmor %vm2958, %vm2959
        %v2961 = vsel %vm2960, %v2953, %v2957
        %v2962 = vand.u32 2147483647, %v2710
        %vm2963 = vcmp.eq.f32.partialorder %v2962, 8.507059e+37
        %v2964 = vand.u32 %v2710, 2147483648
        %v2965 = vor.u32 1.1754944e-38, %v2964
        %v2966 = vsel %vm2963, %v2965, %v2961
        %v2967 = vmul.f32 1.0, %v2966
        %v2968 = vrcp.pop %v2712
        %v2969 = vmul.f32 %v2712, %v2968
        %v2970 = vsub.f32 1.0, %v2969
        %v2971 = vmul.f32 %v2968, %v2970
        %v2972 = vadd.f32 %v2968, %v2971
        %vm2973 = vweird.f32 %v2712
        %vm2974 = vweird.f32 %v2968
        %vm2975 = vmor %vm2973, %vm2974
        %v2976 = vsel %vm2975, %v2968, %v2972
        %v2977 = vand.u32 2147483647, %v2712
        %vm2978 = vcmp.eq.f32.partialorder %v2977, 8.507059e+37
        %v2979 = vand.u32 %v2712, 2147483648
        %v2980 = vor.u32 1.1754944e-38, %v2979
        %v2981 = vsel %vm2978, %v2980, %v2976
        %v2982 = vmul.f32 1.0, %v2981
        %v2983 = vrcp.pop %v2714
        %v2984 = vmul.f32 %v2714, %v2983
        %v2985 = vsub.f32 1.0, %v2984
        %v2986 = vmul.f32 %v2983, %v2985
        %v2987 = vadd.f32 %v2983, %v2986
        %vm2988 = vweird.f32 %v2714
        %vm2989 = vweird.f32 %v2983
        %vm2990 = vmor %vm2988, %vm2989
        %v2991 = vsel %vm2990, %v2983, %v2987
        %v2992 = vand.u32 2147483647, %v2714
        %vm2993 = vcmp.eq.f32.partialorder %v2992, 8.507059e+37
        %v2994 = vand.u32 %v2714, 2147483648
        %v2995 = vor.u32 1.1754944e-38, %v2994
        %v2996 = vsel %vm2993, %v2995, %v2991
        %v2997 = vmul.f32 1.0, %v2996
        %v2998 = vrcp.pop %v2716
        %v2999 = vmul.f32 %v2716, %v2998
        %v3000 = vsub.f32 1.0, %v2999
        %v3001 = vmul.f32 %v2998, %v3000
        %v3002 = vadd.f32 %v2998, %v3001
        %vm3003 = vweird.f32 %v2716
        %vm3004 = vweird.f32 %v2998
        %vm3005 = vmor %vm3003, %vm3004
        %v3006 = vsel %vm3005, %v2998, %v3002
        %v3007 = vand.u32 2147483647, %v2716
        %vm3008 = vcmp.eq.f32.partialorder %v3007, 8.507059e+37
        %v3009 = vand.u32 %v2716, 2147483648
        %v3010 = vor.u32 1.1754944e-38, %v3009
        %v3011 = vsel %vm3008, %v3010, %v3006
        %v3012 = vmul.f32 1.0, %v3011
        %v3013 = vrcp.pop %v2718
        %v3014 = vmul.f32 %v2718, %v3013
        %v3015 = vsub.f32 1.0, %v3014
        %v3016 = vmul.f32 %v3013, %v3015
        %v3017 = vadd.f32 %v3013, %v3016
        %vm3018 = vweird.f32 %v2718
        %vm3019 = vweird.f32 %v3013
        %vm3020 = vmor %vm3018, %vm3019
        %v3021 = vsel %vm3020, %v3013, %v3017
        %v3022 = vand.u32 2147483647, %v2718
        %vm3023 = vcmp.eq.f32.partialorder %v3022, 8.507059e+37
        %v3024 = vand.u32 %v2718, 2147483648
        %v3025 = vor.u32 1.1754944e-38, %v3024
        %v3026 = vsel %vm3023, %v3025, %v3021
        %v3027 = vmul.f32 1.0, %v3026
        %v3028 = vrcp.pop %v2720
        %v3029 = vmul.f32 %v2720, %v3028
        %v3030 = vsub.f32 1.0, %v3029
        %v3031 = vmul.f32 %v3028, %v3030
        %v3032 = vadd.f32 %v3028, %v3031
        %vm3033 = vweird.f32 %v2720
        %vm3034 = vweird.f32 %v3028
        %vm3035 = vmor %vm3033, %vm3034
        %v3036 = vsel %vm3035, %v3028, %v3032
        %v3037 = vand.u32 2147483647, %v2720
        %vm3038 = vcmp.eq.f32.partialorder %v3037, 8.507059e+37
        %v3039 = vand.u32 %v2720, 2147483648
        %v3040 = vor.u32 1.1754944e-38, %v3039
        %v3041 = vsel %vm3038, %v3040, %v3036
        %v3042 = vmul.f32 1.0, %v3041
        %v3043 = vrcp.pop %v2722
        %v3044 = vmul.f32 %v2722, %v3043
        %v3045 = vsub.f32 1.0, %v3044
        %v3046 = vmul.f32 %v3043, %v3045
        %v3047 = vadd.f32 %v3043, %v3046
        %vm3048 = vweird.f32 %v2722
        %vm3049 = vweird.f32 %v3043
        %vm3050 = vmor %vm3048, %vm3049
        %v3051 = vsel %vm3050, %v3043, %v3047
        %v3052 = vand.u32 2147483647, %v2722
        %vm3053 = vcmp.eq.f32.partialorder %v3052, 8.507059e+37
        %v3054 = vand.u32 %v2722, 2147483648
        %v3055 = vor.u32 1.1754944e-38, %v3054
        %v3056 = vsel %vm3053, %v3055, %v3051
        %v3057 = vmul.f32 1.0, %v3056
        %v3058 = vrcp.pop %v2724
        %v3059 = vmul.f32 %v2724, %v3058
        %v3060 = vsub.f32 1.0, %v3059
        %v3061 = vmul.f32 %v3058, %v3060
        %v3062 = vadd.f32 %v3058, %v3061
        %vm3063 = vweird.f32 %v2724
        %vm3064 = vweird.f32 %v3058
        %vm3065 = vmor %vm3063, %vm3064
        %v3066 = vsel %vm3065, %v3058, %v3062
        %v3067 = vand.u32 2147483647, %v2724
        %vm3068 = vcmp.eq.f32.partialorder %v3067, 8.507059e+37
        %v3069 = vand.u32 %v2724, 2147483648
        %v3070 = vor.u32 1.1754944e-38, %v3069
        %v3071 = vsel %vm3068, %v3070, %v3066
        %v3072 = vmul.f32 1.0, %v3071
        %v3073 = vrcp.pop %v2726
        %v3074 = vmul.f32 %v2726, %v3073
        %v3075 = vsub.f32 1.0, %v3074
        %v3076 = vmul.f32 %v3073, %v3075
        %v3077 = vadd.f32 %v3073, %v3076
        %vm3078 = vweird.f32 %v2726
        %vm3079 = vweird.f32 %v3073
        %vm3080 = vmor %vm3078, %vm3079
        %v3081 = vsel %vm3080, %v3073, %v3077
        %v3082 = vand.u32 2147483647, %v2726
        %vm3083 = vcmp.eq.f32.partialorder %v3082, 8.507059e+37
        %v3084 = vand.u32 %v2726, 2147483648
        %v3085 = vor.u32 1.1754944e-38, %v3084
        %v3086 = vsel %vm3083, %v3085, %v3081
        %v3087 = vmul.f32 1.0, %v3086
        %v3088 = vmul.f32 %v2809, %v2862
        %v3089 = vmul.f32 %v2811, %v2877
        %v3090 = vmul.f32 %v2814, %v2892
        %v3091 = vmul.f32 %v2816, %v2907
        %v3092 = vmul.f32 %v2819, %v2922
        %v3093 = vmul.f32 %v2821, %v2937
        %v3094 = vmul.f32 %v2824, %v2952
        %v3095 = vmul.f32 %v2826, %v2967
        %v3096 = vmul.f32 %v2829, %v2982
        %v3097 = vmul.f32 %v2831, %v2997
        %v3098 = vmul.f32 %v2834, %v3012
        %v3099 = vmul.f32 %v2836, %v3027
        %v3100 = vmul.f32 %v2839, %v3042
        %v3101 = vmul.f32 %v2841, %v3057
        %v3102 = vmul.f32 %v2844, %v3072
        %v3103 = vmul.f32 %v2846, %v3087
        %v3104 = vpack.c.bf16 %v3088, %v3088
        %v3105 = vpack.c.bf16 %v3089, %v3089
        %v3106 = vpack.c.bf16 %v3090, %v3090
        %v3107 = vpack.c.bf16 %v3091, %v3091
        %v3108 = vpack.c.bf16 %v3092, %v3092
        %v3109 = vpack.c.bf16 %v3093, %v3093
        %v3110 = vpack.c.bf16 %v3094, %v3094
        %v3111 = vpack.c.bf16 %v3095, %v3095
        %v3112 = vpack.c.bf16 %v3096, %v3096
        %v3113 = vpack.c.bf16 %v3097, %v3097
        %v3114 = vpack.c.bf16 %v3098, %v3098
        %v3115 = vpack.c.bf16 %v3099, %v3099
        %v3116 = vpack.c.bf16 %v3100, %v3100
        %v3117 = vpack.c.bf16 %v3101, %v3101
        %v3118 = vpack.c.bf16 %v3102, %v3102
        %v3119 = vpack.c.bf16 %v3103, %v3103
        %3136 = vrot.lane.b32.xlu0 %v3104, 64
        %v3137 = vpop.permute.xlu0 %3136
        %3138 = vrot.lane.b32.xlu0 %v3105, 64
        %v3139 = vpop.permute.xlu0 %3138
        %3140 = vrot.lane.b32.xlu0 %v3106, 64
        %v3141 = vpop.permute.xlu0 %3140
        %3142 = vrot.lane.b32.xlu0 %v3107, 64
        %v3143 = vpop.permute.xlu0 %3142
        %3144 = vrot.lane.b32.xlu0 %v3108, 64
        %v3145 = vpop.permute.xlu0 %3144
        %3146 = vrot.lane.b32.xlu0 %v3109, 64
        %v3147 = vpop.permute.xlu0 %3146
        %3148 = vrot.lane.b32.xlu0 %v3110, 64
        %v3149 = vpop.permute.xlu0 %3148
        %3150 = vrot.lane.b32.xlu0 %v3111, 64
        %v3151 = vpop.permute.xlu0 %3150
        %3152 = vrot.lane.b32.xlu0 %v3112, 64
        %v3153 = vpop.permute.xlu0 %3152
        %3154 = vrot.lane.b32.xlu0 %v3113, 64
        %v3155 = vpop.permute.xlu0 %3154
        %3156 = vrot.lane.b32.xlu0 %v3114, 64
        %v3157 = vpop.permute.xlu0 %3156
        %3158 = vrot.lane.b32.xlu0 %v3115, 64
        %v3159 = vpop.permute.xlu0 %3158
        %3160 = vrot.lane.b32.xlu0 %v3116, 64
        %v3161 = vpop.permute.xlu0 %3160
        %3162 = vrot.lane.b32.xlu0 %v3117, 64
        %v3163 = vpop.permute.xlu0 %3162
        %3164 = vrot.lane.b32.xlu0 %v3118, 64
        %v3165 = vpop.permute.xlu0 %3164
        %3166 = vrot.lane.b32.xlu0 %v3119, 64
        %v3167 = vpop.permute.xlu0 %3166
        %vm3184 = vcmask 1043968
        %3185 = vst.msk [vmem:[#allocation3] sm:$0xf] %vm3184, %v3137
        %3186 = vst.msk [vmem:[#allocation3 + $0x8] sm:$0xf] %vm3184, %v3139
        %3187 = vst.msk [vmem:[#allocation3 + $0x10] sm:$0xf] %vm3184, %v3141
        %3188 = vst.msk [vmem:[#allocation3 + $0x18] sm:$0xf] %vm3184, %v3143
        %3189 = vst.msk [vmem:[#allocation3 + $0x20] sm:$0xf] %vm3184, %v3145
        %3190 = vst.msk [vmem:[#allocation3 + $0x28] sm:$0xf] %vm3184, %v3147
        %3191 = vst.msk [vmem:[#allocation3 + $0x30] sm:$0xf] %vm3184, %v3149
        %3192 = vst.msk [vmem:[#allocation3 + $0x38] sm:$0xf] %vm3184, %v3151
        %3193 = vst.msk [vmem:[#allocation3 + $0x40] sm:$0xf] %vm3184, %v3153
        %3194 = vst.msk [vmem:[#allocation3 + $0x48] sm:$0xf] %vm3184, %v3155
        %3195 = vst.msk [vmem:[#allocation3 + $0x50] sm:$0xf] %vm3184, %v3157
        %3196 = vst.msk [vmem:[#allocation3 + $0x58] sm:$0xf] %vm3184, %v3159
        %3197 = vst.msk [vmem:[#allocation3 + $0x60] sm:$0xf] %vm3184, %v3161
        %3198 = vst.msk [vmem:[#allocation3 + $0x68] sm:$0xf] %vm3184, %v3163
        %3199 = vst.msk [vmem:[#allocation3 + $0x70] sm:$0xf] %vm3184, %v3165
        %3200 = vst.msk [vmem:[#allocation3 + $0x78] sm:$0xf] %vm3184, %v3167
        %v3201 = vld [vmem:[#allocation2 + $0x4] sm:$0xf]
        %v3202 = vld [vmem:[#allocation2 + $0x1c] sm:$0xf]
        %v3203 = vld [vmem:[#allocation2 + $0x34] sm:$0xf]
        %v3204 = vld [vmem:[#allocation2 + $0x4c] sm:$0xf]
        %v3205 = vld [vmem:[#allocation2 + $0x64] sm:$0xf]
        %v3206 = vld [vmem:[#allocation2 + $0x7c] sm:$0xf]
        %v3207 = vld [vmem:[#allocation2 + $0x94] sm:$0xf]
        %v3208 = vld [vmem:[#allocation2 + $0xac] sm:$0xf]
        %v3209 = vld [vmem:[#allocation2 + $0xc4] sm:$0xf]
        %v3210 = vld [vmem:[#allocation2 + $0xdc] sm:$0xf]
        %v3211 = vld [vmem:[#allocation2 + $0xf4] sm:$0xf]
        %v3212 = vld [vmem:[#allocation2 + $0x10c] sm:$0xf]
        %v3213 = vld [vmem:[#allocation2 + $0x124] sm:$0xf]
        %v3214 = vld [vmem:[#allocation2 + $0x13c] sm:$0xf]
        %v3215 = vld [vmem:[#allocation2 + $0x154] sm:$0xf]
        %v3216 = vld [vmem:[#allocation2 + $0x16c] sm:$0xf]
        %v3217 = vld [vmem:[#allocation2 + $0xc] sm:$0xf]
        %v3218 = vld [vmem:[#allocation2 + $0x24] sm:$0xf]
        %v3219 = vld [vmem:[#allocation2 + $0x3c] sm:$0xf]
        %v3220 = vld [vmem:[#allocation2 + $0x54] sm:$0xf]
        %v3221 = vld [vmem:[#allocation2 + $0x6c] sm:$0xf]
        %v3222 = vld [vmem:[#allocation2 + $0x84] sm:$0xf]
        %v3223 = vld [vmem:[#allocation2 + $0x9c] sm:$0xf]
        %v3224 = vld [vmem:[#allocation2 + $0xb4] sm:$0xf]
        %v3225 = vld [vmem:[#allocation2 + $0xcc] sm:$0xf]
        %v3226 = vld [vmem:[#allocation2 + $0xe4] sm:$0xf]
        %v3227 = vld [vmem:[#allocation2 + $0xfc] sm:$0xf]
        %v3228 = vld [vmem:[#allocation2 + $0x114] sm:$0xf]
        %v3229 = vld [vmem:[#allocation2 + $0x12c] sm:$0xf]
        %v3230 = vld [vmem:[#allocation2 + $0x144] sm:$0xf]
        %v3231 = vld [vmem:[#allocation2 + $0x15c] sm:$0xf]
        %v3232 = vld [vmem:[#allocation2 + $0x174] sm:$0xf]
        %v3233 = vld [vmem:[#allocation2 + $0x14] sm:$0xf]
        %v3234 = vld [vmem:[#allocation2 + $0x2c] sm:$0xf]
        %v3235 = vld [vmem:[#allocation2 + $0x44] sm:$0xf]
        %v3236 = vld [vmem:[#allocation2 + $0x5c] sm:$0xf]
        %v3237 = vld [vmem:[#allocation2 + $0x74] sm:$0xf]
        %v3238 = vld [vmem:[#allocation2 + $0x8c] sm:$0xf]
        %v3239 = vld [vmem:[#allocation2 + $0xa4] sm:$0xf]
        %v3240 = vld [vmem:[#allocation2 + $0xbc] sm:$0xf]
        %v3241 = vld [vmem:[#allocation2 + $0xd4] sm:$0xf]
        %v3242 = vld [vmem:[#allocation2 + $0xec] sm:$0xf]
        %v3243 = vld [vmem:[#allocation2 + $0x104] sm:$0xf]
        %v3244 = vld [vmem:[#allocation2 + $0x11c] sm:$0xf]
        %v3245 = vld [vmem:[#allocation2 + $0x134] sm:$0xf]
        %v3246 = vld [vmem:[#allocation2 + $0x14c] sm:$0xf]
        %v3247 = vld [vmem:[#allocation2 + $0x164] sm:$0xf]
        %v3248 = vld [vmem:[#allocation2 + $0x17c] sm:$0xf]
        %v3265 = vunpack.c.l.b16 %v3201
        %v3266 = vunpack.c.l.b16 %v3202
        %v3267 = vunpack.c.l.b16 %v3203
        %v3268 = vunpack.c.l.b16 %v3204
        %v3269 = vunpack.c.l.b16 %v3205
        %v3270 = vunpack.c.l.b16 %v3206
        %v3271 = vunpack.c.l.b16 %v3207
        %v3272 = vunpack.c.l.b16 %v3208
        %v3273 = vunpack.c.l.b16 %v3209
        %v3274 = vunpack.c.l.b16 %v3210
        %v3275 = vunpack.c.l.b16 %v3211
        %v3276 = vunpack.c.l.b16 %v3212
        %v3277 = vunpack.c.l.b16 %v3213
        %v3278 = vunpack.c.l.b16 %v3214
        %v3279 = vunpack.c.l.b16 %v3215
        %v3280 = vunpack.c.l.b16 %v3216
        %v3281 = vpack.c.b16 %v3266, %v3265
        %v3282 = vpack.c.b16 %v3268, %v3267
        %v3283 = vpack.c.b16 %v3270, %v3269
        %v3284 = vpack.c.b16 %v3272, %v3271
        %v3285 = vpack.c.b16 %v3274, %v3273
        %v3286 = vpack.c.b16 %v3276, %v3275
        %v3287 = vpack.c.b16 %v3278, %v3277
        %v3288 = vpack.c.b16 %v3280, %v3279
        %v3305 = vunpack.c.l.b16 %v3217
        %v3306 = vunpack.c.l.b16 %v3218
        %v3307 = vunpack.c.l.b16 %v3219
        %v3308 = vunpack.c.l.b16 %v3220
        %v3309 = vunpack.c.l.b16 %v3221
        %v3310 = vunpack.c.l.b16 %v3222
        %v3311 = vunpack.c.l.b16 %v3223
        %v3312 = vunpack.c.l.b16 %v3224
        %v3313 = vunpack.c.l.b16 %v3225
        %v3314 = vunpack.c.l.b16 %v3226
        %v3315 = vunpack.c.l.b16 %v3227
        %v3316 = vunpack.c.l.b16 %v3228
        %v3317 = vunpack.c.l.b16 %v3229
        %v3318 = vunpack.c.l.b16 %v3230
        %v3319 = vunpack.c.l.b16 %v3231
        %v3320 = vunpack.c.l.b16 %v3232
        %v3321 = vpack.c.b16 %v3306, %v3305
        %v3322 = vpack.c.b16 %v3308, %v3307
        %v3323 = vpack.c.b16 %v3310, %v3309
        %v3324 = vpack.c.b16 %v3312, %v3311
        %v3325 = vpack.c.b16 %v3314, %v3313
        %v3326 = vpack.c.b16 %v3316, %v3315
        %v3327 = vpack.c.b16 %v3318, %v3317
        %v3328 = vpack.c.b16 %v3320, %v3319
        %v3330 = vsel %vm1722, %v3281, 0
        %v3333 = vsel %vm1722, %v3282, 0
        %v3336 = vsel %vm1722, %v3283, 0
        %v3339 = vsel %vm1722, %v3284, 0
        %v3342 = vsel %vm1722, %v3285, 0
        %v3345 = vsel %vm1722, %v3286, 0
        %v3348 = vsel %vm1722, %v3287, 0
        %v3351 = vsel %vm1722, %v3288, 0
        %v3354 = vsel %vm1722, %v3321, 0
        %v3357 = vsel %vm1722, %v3322, 0
        %v3360 = vsel %vm1722, %v3323, 0
        %v3363 = vsel %vm1722, %v3324, 0
        %v3366 = vsel %vm1722, %v3325, 0
        %v3369 = vsel %vm1722, %v3326, 0
        %v3372 = vsel %vm1722, %v3327, 0
        %v3375 = vsel %vm1722, %v3328, 0
        %3377 = vmatpush.bf16.xpose.msra.mxu0 %v3375
        %3378 = vmatpush.bf16.xpose.msra.mxu0 %v3372
        %3379 = vmatpush.bf16.xpose.msra.mxu0 %v3369
        %3380 = vmatpush.bf16.xpose.msra.mxu0 %v3366
        %3381 = vmatpush.bf16.xpose.msra.mxu0 %v3363
        %3382 = vmatpush.bf16.xpose.msra.mxu0 %v3360
        %3383 = vmatpush.bf16.xpose.msra.mxu0 %v3357
        %3384 = vmatpush.bf16.xpose.msra.mxu0 %v3354
        %3385 = vmatmul.bf16.gmra.mxu0 %v3330
        %v3386 = vpop.f32.mrf.mxu0
        %v3387 = vadd.f32 0.0, %v3386
        %v3388 = vpop.f32.mrf.mxu0
        %v3389 = vadd.f32 0.0, %v3388
        %3390 = vmatmul.bf16.gmra.mxu0 %v3333
        %v3391 = vpop.f32.mrf.mxu0
        %v3392 = vadd.f32 0.0, %v3391
        %v3393 = vpop.f32.mrf.mxu0
        %v3394 = vadd.f32 0.0, %v3393
        %3395 = vmatmul.bf16.gmra.mxu0 %v3336
        %v3396 = vpop.f32.mrf.mxu0
        %v3397 = vadd.f32 0.0, %v3396
        %v3398 = vpop.f32.mrf.mxu0
        %v3399 = vadd.f32 0.0, %v3398
        %3400 = vmatmul.bf16.gmra.mxu0 %v3339
        %v3401 = vpop.f32.mrf.mxu0
        %v3402 = vadd.f32 0.0, %v3401
        %v3403 = vpop.f32.mrf.mxu0
        %v3404 = vadd.f32 0.0, %v3403
        %3405 = vmatmul.bf16.gmra.mxu0 %v3342
        %v3406 = vpop.f32.mrf.mxu0
        %v3407 = vadd.f32 0.0, %v3406
        %v3408 = vpop.f32.mrf.mxu0
        %v3409 = vadd.f32 0.0, %v3408
        %3410 = vmatmul.bf16.gmra.mxu0 %v3345
        %v3411 = vpop.f32.mrf.mxu0
        %v3412 = vadd.f32 0.0, %v3411
        %v3413 = vpop.f32.mrf.mxu0
        %v3414 = vadd.f32 0.0, %v3413
        %3415 = vmatmul.bf16.gmra.mxu0 %v3348
        %v3416 = vpop.f32.mrf.mxu0
        %v3417 = vadd.f32 0.0, %v3416
        %v3418 = vpop.f32.mrf.mxu0
        %v3419 = vadd.f32 0.0, %v3418
        %3420 = vmatmul.bf16.gmra.mxu0 %v3351
        %v3421 = vpop.f32.mrf.mxu0
        %v3422 = vadd.f32 0.0, %v3421
        %v3423 = vpop.f32.mrf.mxu0
        %v3424 = vadd.f32 0.0, %v3423
        %3425 = vdwg.mxu0
        %v3426 = vsel %vm1578, %v3387, -1e+30
        %v3427 = vsel %vm1579, %v3389, -1e+30
        %v3428 = vsel %vm1580, %v3392, -1e+30
        %v3429 = vsel %vm1581, %v3394, -1e+30
        %v3430 = vsel %vm1582, %v3397, -1e+30
        %v3431 = vsel %vm1583, %v3399, -1e+30
        %v3432 = vsel %vm1584, %v3402, -1e+30
        %v3433 = vsel %vm1585, %v3404, -1e+30
        %v3434 = vsel %vm1586, %v3407, -1e+30
        %v3435 = vsel %vm1587, %v3409, -1e+30
        %v3436 = vsel %vm1588, %v3412, -1e+30
        %v3437 = vsel %vm1589, %v3414, -1e+30
        %v3438 = vsel %vm1590, %v3417, -1e+30
        %v3439 = vsel %vm1591, %v3419, -1e+30
        %v3440 = vsel %vm1592, %v3422, -1e+30
        %v3441 = vsel %vm1593, %v3424, -1e+30
        %3442 = vmax.xlane.f32.xlu0 %v3426
        %v3443 = vpop.xlane.xlu0 %3442
        %3444 = vmax.xlane.f32.xlu0 %v3427
        %v3445 = vpop.xlane.xlu0 %3444
        %3446 = vmax.xlane.f32.xlu0 %v3428
        %v3447 = vpop.xlane.xlu0 %3446
        %3448 = vmax.xlane.f32.xlu0 %v3429
        %v3449 = vpop.xlane.xlu0 %3448
        %3450 = vmax.xlane.f32.xlu0 %v3430
        %v3451 = vpop.xlane.xlu0 %3450
        %3452 = vmax.xlane.f32.xlu0 %v3431
        %v3453 = vpop.xlane.xlu0 %3452
        %3454 = vmax.xlane.f32.xlu0 %v3432
        %v3455 = vpop.xlane.xlu0 %3454
        %3456 = vmax.xlane.f32.xlu0 %v3433
        %v3457 = vpop.xlane.xlu0 %3456
        %3458 = vmax.xlane.f32.xlu0 %v3434
        %v3459 = vpop.xlane.xlu0 %3458
        %3460 = vmax.xlane.f32.xlu0 %v3435
        %v3461 = vpop.xlane.xlu0 %3460
        %3462 = vmax.xlane.f32.xlu0 %v3436
        %v3463 = vpop.xlane.xlu0 %3462
        %3464 = vmax.xlane.f32.xlu0 %v3437
        %v3465 = vpop.xlane.xlu0 %3464
        %3466 = vmax.xlane.f32.xlu0 %v3438
        %v3467 = vpop.xlane.xlu0 %3466
        %3468 = vmax.xlane.f32.xlu0 %v3439
        %v3469 = vpop.xlane.xlu0 %3468
        %3470 = vmax.xlane.f32.xlu0 %v3440
        %v3471 = vpop.xlane.xlu0 %3470
        %3472 = vmax.xlane.f32.xlu0 %v3441
        %v3473 = vpop.xlane.xlu0 %3472
        %v3474 = vsub.f32 %v3426, %v3443
        %v3475 = vsub.f32 %v3427, %v3445
        %v3476 = vsub.f32 %v3428, %v3447
        %v3477 = vsub.f32 %v3429, %v3449
        %v3478 = vsub.f32 %v3430, %v3451
        %v3479 = vsub.f32 %v3431, %v3453
        %v3480 = vsub.f32 %v3432, %v3455
        %v3481 = vsub.f32 %v3433, %v3457
        %v3482 = vsub.f32 %v3434, %v3459
        %v3483 = vsub.f32 %v3435, %v3461
        %v3484 = vsub.f32 %v3436, %v3463
        %v3485 = vsub.f32 %v3437, %v3465
        %v3486 = vsub.f32 %v3438, %v3467
        %v3487 = vsub.f32 %v3439, %v3469
        %v3488 = vsub.f32 %v3440, %v3471
        %v3489 = vsub.f32 %v3441, %v3473
        %v3490 = vmul.f32 %v3474, 1.442695
        %v3491 = vpow.pop %v3490
        %v3492 = vmul.f32 %v3475, 1.442695
        %v3493 = vpow.pop %v3492
        %v3494 = vmul.f32 %v3476, 1.442695
        %v3495 = vpow.pop %v3494
        %v3496 = vmul.f32 %v3477, 1.442695
        %v3497 = vpow.pop %v3496
        %v3498 = vmul.f32 %v3478, 1.442695
        %v3499 = vpow.pop %v3498
        %v3500 = vmul.f32 %v3479, 1.442695
        %v3501 = vpow.pop %v3500
        %v3502 = vmul.f32 %v3480, 1.442695
        %v3503 = vpow.pop %v3502
        %v3504 = vmul.f32 %v3481, 1.442695
        %v3505 = vpow.pop %v3504
        %v3506 = vmul.f32 %v3482, 1.442695
        %v3507 = vpow.pop %v3506
        %v3508 = vmul.f32 %v3483, 1.442695
        %v3509 = vpow.pop %v3508
        %v3510 = vmul.f32 %v3484, 1.442695
        %v3511 = vpow.pop %v3510
        %v3512 = vmul.f32 %v3485, 1.442695
        %v3513 = vpow.pop %v3512
        %v3514 = vmul.f32 %v3486, 1.442695
        %v3515 = vpow.pop %v3514
        %v3516 = vmul.f32 %v3487, 1.442695
        %v3517 = vpow.pop %v3516
        %v3518 = vmul.f32 %v3488, 1.442695
        %v3519 = vpow.pop %v3518
        %v3520 = vmul.f32 %v3489, 1.442695
        %v3521 = vpow.pop %v3520
        %3522 = vadd.xlane.f32.xlu0 %v3491
        %v3523 = vpop.xlane.xlu0 %3522
        %3524 = vadd.xlane.f32.xlu0 %v3493
        %v3525 = vpop.xlane.xlu0 %3524
        %3526 = vadd.xlane.f32.xlu0 %v3495
        %v3527 = vpop.xlane.xlu0 %3526
        %3528 = vadd.xlane.f32.xlu0 %v3497
        %v3529 = vpop.xlane.xlu0 %3528
        %3530 = vadd.xlane.f32.xlu0 %v3499
        %v3531 = vpop.xlane.xlu0 %3530
        %3532 = vadd.xlane.f32.xlu0 %v3501
        %v3533 = vpop.xlane.xlu0 %3532
        %3534 = vadd.xlane.f32.xlu0 %v3503
        %v3535 = vpop.xlane.xlu0 %3534
        %3536 = vadd.xlane.f32.xlu0 %v3505
        %v3537 = vpop.xlane.xlu0 %3536
        %3538 = vadd.xlane.f32.xlu0 %v3507
        %v3539 = vpop.xlane.xlu0 %3538
        %3540 = vadd.xlane.f32.xlu0 %v3509
        %v3541 = vpop.xlane.xlu0 %3540
        %3542 = vadd.xlane.f32.xlu0 %v3511
        %v3543 = vpop.xlane.xlu0 %3542
        %3544 = vadd.xlane.f32.xlu0 %v3513
        %v3545 = vpop.xlane.xlu0 %3544
        %3546 = vadd.xlane.f32.xlu0 %v3515
        %v3547 = vpop.xlane.xlu0 %3546
        %3548 = vadd.xlane.f32.xlu0 %v3517
        %v3549 = vpop.xlane.xlu0 %3548
        %3550 = vadd.xlane.f32.xlu0 %v3519
        %v3551 = vpop.xlane.xlu0 %3550
        %3552 = vadd.xlane.f32.xlu0 %v3521
        %v3553 = vpop.xlane.xlu0 %3552
        %v3554 = vpack.c.bf16 %v3493, %v3491
        %v3555 = vpack.c.bf16 %v3497, %v3495
        %v3556 = vpack.c.bf16 %v3501, %v3499
        %v3557 = vpack.c.bf16 %v3505, %v3503
        %v3558 = vpack.c.bf16 %v3509, %v3507
        %v3559 = vpack.c.bf16 %v3513, %v3511
        %v3560 = vpack.c.bf16 %v3517, %v3515
        %v3561 = vpack.c.bf16 %v3521, %v3519
        %v3578 = vunpack.c.l.b16 %v3233
        %v3579 = vunpack.c.l.b16 %v3234
        %v3580 = vunpack.c.l.b16 %v3235
        %v3581 = vunpack.c.l.b16 %v3236
        %v3582 = vunpack.c.l.b16 %v3237
        %v3583 = vunpack.c.l.b16 %v3238
        %v3584 = vunpack.c.l.b16 %v3239
        %v3585 = vunpack.c.l.b16 %v3240
        %v3586 = vunpack.c.l.b16 %v3241
        %v3587 = vunpack.c.l.b16 %v3242
        %v3588 = vunpack.c.l.b16 %v3243
        %v3589 = vunpack.c.l.b16 %v3244
        %v3590 = vunpack.c.l.b16 %v3245
        %v3591 = vunpack.c.l.b16 %v3246
        %v3592 = vunpack.c.l.b16 %v3247
        %v3593 = vunpack.c.l.b16 %v3248
        %v3594 = vpack.c.b16 %v3579, %v3578
        %v3595 = vpack.c.b16 %v3581, %v3580
        %v3596 = vpack.c.b16 %v3583, %v3582
        %v3597 = vpack.c.b16 %v3585, %v3584
        %v3598 = vpack.c.b16 %v3587, %v3586
        %v3599 = vpack.c.b16 %v3589, %v3588
        %v3600 = vpack.c.b16 %v3591, %v3590
        %v3601 = vpack.c.b16 %v3593, %v3592
        %3610 = vmatpush.bf16.msra.mxu0 %v3601
        %3611 = vmatpush.bf16.msra.mxu0 %v3600
        %3612 = vmatpush.bf16.msra.mxu0 %v3599
        %3613 = vmatpush.bf16.msra.mxu0 %v3598
        %3614 = vmatpush.bf16.msra.mxu0 %v3597
        %3615 = vmatpush.bf16.msra.mxu0 %v3596
        %3616 = vmatpush.bf16.msra.mxu0 %v3595
        %3617 = vmatpush.bf16.msra.mxu0 %v3594
        %3618 = vmatmul.bf16.gmra.mxu0 %v3554
        %v3619 = vpop.f32.mrf.mxu0
        %v3620 = vadd.f32 0.0, %v3619
        %v3621 = vpop.f32.mrf.mxu0
        %v3622 = vadd.f32 0.0, %v3621
        %3623 = vmatmul.bf16.gmra.mxu0 %v3555
        %v3624 = vpop.f32.mrf.mxu0
        %v3625 = vadd.f32 0.0, %v3624
        %v3626 = vpop.f32.mrf.mxu0
        %v3627 = vadd.f32 0.0, %v3626
        %3628 = vmatmul.bf16.gmra.mxu0 %v3556
        %v3629 = vpop.f32.mrf.mxu0
        %v3630 = vadd.f32 0.0, %v3629
        %v3631 = vpop.f32.mrf.mxu0
        %v3632 = vadd.f32 0.0, %v3631
        %3633 = vmatmul.bf16.gmra.mxu0 %v3557
        %v3634 = vpop.f32.mrf.mxu0
        %v3635 = vadd.f32 0.0, %v3634
        %v3636 = vpop.f32.mrf.mxu0
        %v3637 = vadd.f32 0.0, %v3636
        %3638 = vmatmul.bf16.gmra.mxu0 %v3558
        %v3639 = vpop.f32.mrf.mxu0
        %v3640 = vadd.f32 0.0, %v3639
        %v3641 = vpop.f32.mrf.mxu0
        %v3642 = vadd.f32 0.0, %v3641
        %3643 = vmatmul.bf16.gmra.mxu0 %v3559
        %v3644 = vpop.f32.mrf.mxu0
        %v3645 = vadd.f32 0.0, %v3644
        %v3646 = vpop.f32.mrf.mxu0
        %v3647 = vadd.f32 0.0, %v3646
        %3648 = vmatmul.bf16.gmra.mxu0 %v3560
        %v3649 = vpop.f32.mrf.mxu0
        %v3650 = vadd.f32 0.0, %v3649
        %v3651 = vpop.f32.mrf.mxu0
        %v3652 = vadd.f32 0.0, %v3651
        %3653 = vmatmul.bf16.gmra.mxu0 %v3561
        %v3654 = vpop.f32.mrf.mxu0
        %v3655 = vadd.f32 0.0, %v3654
        %v3656 = vpop.f32.mrf.mxu0
        %v3657 = vadd.f32 0.0, %v3656
        %3658 = vdwg.mxu0
        %v3659 = vrcp.pop %v3523
        %v3660 = vmul.f32 %v3523, %v3659
        %v3661 = vsub.f32 1.0, %v3660
        %v3662 = vmul.f32 %v3659, %v3661
        %v3663 = vadd.f32 %v3659, %v3662
        %vm3664 = vweird.f32 %v3523
        %vm3665 = vweird.f32 %v3659
        %vm3666 = vmor %vm3664, %vm3665
        %v3667 = vsel %vm3666, %v3659, %v3663
        %v3668 = vand.u32 2147483647, %v3523
        %vm3669 = vcmp.eq.f32.partialorder %v3668, 8.507059e+37
        %v3670 = vand.u32 %v3523, 2147483648
        %v3671 = vor.u32 1.1754944e-38, %v3670
        %v3672 = vsel %vm3669, %v3671, %v3667
        %v3673 = vmul.f32 1.0, %v3672
        %v3674 = vrcp.pop %v3525
        %v3675 = vmul.f32 %v3525, %v3674
        %v3676 = vsub.f32 1.0, %v3675
        %v3677 = vmul.f32 %v3674, %v3676
        %v3678 = vadd.f32 %v3674, %v3677
        %vm3679 = vweird.f32 %v3525
        %vm3680 = vweird.f32 %v3674
        %vm3681 = vmor %vm3679, %vm3680
        %v3682 = vsel %vm3681, %v3674, %v3678
        %v3683 = vand.u32 2147483647, %v3525
        %vm3684 = vcmp.eq.f32.partialorder %v3683, 8.507059e+37
        %v3685 = vand.u32 %v3525, 2147483648
        %v3686 = vor.u32 1.1754944e-38, %v3685
        %v3687 = vsel %vm3684, %v3686, %v3682
        %v3688 = vmul.f32 1.0, %v3687
        %v3689 = vrcp.pop %v3527
        %v3690 = vmul.f32 %v3527, %v3689
        %v3691 = vsub.f32 1.0, %v3690
        %v3692 = vmul.f32 %v3689, %v3691
        %v3693 = vadd.f32 %v3689, %v3692
        %vm3694 = vweird.f32 %v3527
        %vm3695 = vweird.f32 %v3689
        %vm3696 = vmor %vm3694, %vm3695
        %v3697 = vsel %vm3696, %v3689, %v3693
        %v3698 = vand.u32 2147483647, %v3527
        %vm3699 = vcmp.eq.f32.partialorder %v3698, 8.507059e+37
        %v3700 = vand.u32 %v3527, 2147483648
        %v3701 = vor.u32 1.1754944e-38, %v3700
        %v3702 = vsel %vm3699, %v3701, %v3697
        %v3703 = vmul.f32 1.0, %v3702
        %v3704 = vrcp.pop %v3529
        %v3705 = vmul.f32 %v3529, %v3704
        %v3706 = vsub.f32 1.0, %v3705
        %v3707 = vmul.f32 %v3704, %v3706
        %v3708 = vadd.f32 %v3704, %v3707
        %vm3709 = vweird.f32 %v3529
        %vm3710 = vweird.f32 %v3704
        %vm3711 = vmor %vm3709, %vm3710
        %v3712 = vsel %vm3711, %v3704, %v3708
        %v3713 = vand.u32 2147483647, %v3529
        %vm3714 = vcmp.eq.f32.partialorder %v3713, 8.507059e+37
        %v3715 = vand.u32 %v3529, 2147483648
        %v3716 = vor.u32 1.1754944e-38, %v3715
        %v3717 = vsel %vm3714, %v3716, %v3712
        %v3718 = vmul.f32 1.0, %v3717
        %v3719 = vrcp.pop %v3531
        %v3720 = vmul.f32 %v3531, %v3719
        %v3721 = vsub.f32 1.0, %v3720
        %v3722 = vmul.f32 %v3719, %v3721
        %v3723 = vadd.f32 %v3719, %v3722
        %vm3724 = vweird.f32 %v3531
        %vm3725 = vweird.f32 %v3719
        %vm3726 = vmor %vm3724, %vm3725
        %v3727 = vsel %vm3726, %v3719, %v3723
        %v3728 = vand.u32 2147483647, %v3531
        %vm3729 = vcmp.eq.f32.partialorder %v3728, 8.507059e+37
        %v3730 = vand.u32 %v3531, 2147483648
        %v3731 = vor.u32 1.1754944e-38, %v3730
        %v3732 = vsel %vm3729, %v3731, %v3727
        %v3733 = vmul.f32 1.0, %v3732
        %v3734 = vrcp.pop %v3533
        %v3735 = vmul.f32 %v3533, %v3734
        %v3736 = vsub.f32 1.0, %v3735
        %v3737 = vmul.f32 %v3734, %v3736
        %v3738 = vadd.f32 %v3734, %v3737
        %vm3739 = vweird.f32 %v3533
        %vm3740 = vweird.f32 %v3734
        %vm3741 = vmor %vm3739, %vm3740
        %v3742 = vsel %vm3741, %v3734, %v3738
        %v3743 = vand.u32 2147483647, %v3533
        %vm3744 = vcmp.eq.f32.partialorder %v3743, 8.507059e+37
        %v3745 = vand.u32 %v3533, 2147483648
        %v3746 = vor.u32 1.1754944e-38, %v3745
        %v3747 = vsel %vm3744, %v3746, %v3742
        %v3748 = vmul.f32 1.0, %v3747
        %v3749 = vrcp.pop %v3535
        %v3750 = vmul.f32 %v3535, %v3749
        %v3751 = vsub.f32 1.0, %v3750
        %v3752 = vmul.f32 %v3749, %v3751
        %v3753 = vadd.f32 %v3749, %v3752
        %vm3754 = vweird.f32 %v3535
        %vm3755 = vweird.f32 %v3749
        %vm3756 = vmor %vm3754, %vm3755
        %v3757 = vsel %vm3756, %v3749, %v3753
        %v3758 = vand.u32 2147483647, %v3535
        %vm3759 = vcmp.eq.f32.partialorder %v3758, 8.507059e+37
        %v3760 = vand.u32 %v3535, 2147483648
        %v3761 = vor.u32 1.1754944e-38, %v3760
        %v3762 = vsel %vm3759, %v3761, %v3757
        %v3763 = vmul.f32 1.0, %v3762
        %v3764 = vrcp.pop %v3537
        %v3765 = vmul.f32 %v3537, %v3764
        %v3766 = vsub.f32 1.0, %v3765
        %v3767 = vmul.f32 %v3764, %v3766
        %v3768 = vadd.f32 %v3764, %v3767
        %vm3769 = vweird.f32 %v3537
        %vm3770 = vweird.f32 %v3764
        %vm3771 = vmor %vm3769, %vm3770
        %v3772 = vsel %vm3771, %v3764, %v3768
        %v3773 = vand.u32 2147483647, %v3537
        %vm3774 = vcmp.eq.f32.partialorder %v3773, 8.507059e+37
        %v3775 = vand.u32 %v3537, 2147483648
        %v3776 = vor.u32 1.1754944e-38, %v3775
        %v3777 = vsel %vm3774, %v3776, %v3772
        %v3778 = vmul.f32 1.0, %v3777
        %v3779 = vrcp.pop %v3539
        %v3780 = vmul.f32 %v3539, %v3779
        %v3781 = vsub.f32 1.0, %v3780
        %v3782 = vmul.f32 %v3779, %v3781
        %v3783 = vadd.f32 %v3779, %v3782
        %vm3784 = vweird.f32 %v3539
        %vm3785 = vweird.f32 %v3779
        %vm3786 = vmor %vm3784, %vm3785
        %v3787 = vsel %vm3786, %v3779, %v3783
        %v3788 = vand.u32 2147483647, %v3539
        %vm3789 = vcmp.eq.f32.partialorder %v3788, 8.507059e+37
        %v3790 = vand.u32 %v3539, 2147483648
        %v3791 = vor.u32 1.1754944e-38, %v3790
        %v3792 = vsel %vm3789, %v3791, %v3787
        %v3793 = vmul.f32 1.0, %v3792
        %v3794 = vrcp.pop %v3541
        %v3795 = vmul.f32 %v3541, %v3794
        %v3796 = vsub.f32 1.0, %v3795
        %v3797 = vmul.f32 %v3794, %v3796
        %v3798 = vadd.f32 %v3794, %v3797
        %vm3799 = vweird.f32 %v3541
        %vm3800 = vweird.f32 %v3794
        %vm3801 = vmor %vm3799, %vm3800
        %v3802 = vsel %vm3801, %v3794, %v3798
        %v3803 = vand.u32 2147483647, %v3541
        %vm3804 = vcmp.eq.f32.partialorder %v3803, 8.507059e+37
        %v3805 = vand.u32 %v3541, 2147483648
        %v3806 = vor.u32 1.1754944e-38, %v3805
        %v3807 = vsel %vm3804, %v3806, %v3802
        %v3808 = vmul.f32 1.0, %v3807
        %v3809 = vrcp.pop %v3543
        %v3810 = vmul.f32 %v3543, %v3809
        %v3811 = vsub.f32 1.0, %v3810
        %v3812 = vmul.f32 %v3809, %v3811
        %v3813 = vadd.f32 %v3809, %v3812
        %vm3814 = vweird.f32 %v3543
        %vm3815 = vweird.f32 %v3809
        %vm3816 = vmor %vm3814, %vm3815
        %v3817 = vsel %vm3816, %v3809, %v3813
        %v3818 = vand.u32 2147483647, %v3543
        %vm3819 = vcmp.eq.f32.partialorder %v3818, 8.507059e+37
        %v3820 = vand.u32 %v3543, 2147483648
        %v3821 = vor.u32 1.1754944e-38, %v3820
        %v3822 = vsel %vm3819, %v3821, %v3817
        %v3823 = vmul.f32 1.0, %v3822
        %v3824 = vrcp.pop %v3545
        %v3825 = vmul.f32 %v3545, %v3824
        %v3826 = vsub.f32 1.0, %v3825
        %v3827 = vmul.f32 %v3824, %v3826
        %v3828 = vadd.f32 %v3824, %v3827
        %vm3829 = vweird.f32 %v3545
        %vm3830 = vweird.f32 %v3824
        %vm3831 = vmor %vm3829, %vm3830
        %v3832 = vsel %vm3831, %v3824, %v3828
        %v3833 = vand.u32 2147483647, %v3545
        %vm3834 = vcmp.eq.f32.partialorder %v3833, 8.507059e+37
        %v3835 = vand.u32 %v3545, 2147483648
        %v3836 = vor.u32 1.1754944e-38, %v3835
        %v3837 = vsel %vm3834, %v3836, %v3832
        %v3838 = vmul.f32 1.0, %v3837
        %v3839 = vrcp.pop %v3547
        %v3840 = vmul.f32 %v3547, %v3839
        %v3841 = vsub.f32 1.0, %v3840
        %v3842 = vmul.f32 %v3839, %v3841
        %v3843 = vadd.f32 %v3839, %v3842
        %vm3844 = vweird.f32 %v3547
        %vm3845 = vweird.f32 %v3839
        %vm3846 = vmor %vm3844, %vm3845
        %v3847 = vsel %vm3846, %v3839, %v3843
        %v3848 = vand.u32 2147483647, %v3547
        %vm3849 = vcmp.eq.f32.partialorder %v3848, 8.507059e+37
        %v3850 = vand.u32 %v3547, 2147483648
        %v3851 = vor.u32 1.1754944e-38, %v3850
        %v3852 = vsel %vm3849, %v3851, %v3847
        %v3853 = vmul.f32 1.0, %v3852
        %v3854 = vrcp.pop %v3549
        %v3855 = vmul.f32 %v3549, %v3854
        %v3856 = vsub.f32 1.0, %v3855
        %v3857 = vmul.f32 %v3854, %v3856
        %v3858 = vadd.f32 %v3854, %v3857
        %vm3859 = vweird.f32 %v3549
        %vm3860 = vweird.f32 %v3854
        %vm3861 = vmor %vm3859, %vm3860
        %v3862 = vsel %vm3861, %v3854, %v3858
        %v3863 = vand.u32 2147483647, %v3549
        %vm3864 = vcmp.eq.f32.partialorder %v3863, 8.507059e+37
        %v3865 = vand.u32 %v3549, 2147483648
        %v3866 = vor.u32 1.1754944e-38, %v3865
        %v3867 = vsel %vm3864, %v3866, %v3862
        %v3868 = vmul.f32 1.0, %v3867
        %v3869 = vrcp.pop %v3551
        %v3870 = vmul.f32 %v3551, %v3869
        %v3871 = vsub.f32 1.0, %v3870
        %v3872 = vmul.f32 %v3869, %v3871
        %v3873 = vadd.f32 %v3869, %v3872
        %vm3874 = vweird.f32 %v3551
        %vm3875 = vweird.f32 %v3869
        %vm3876 = vmor %vm3874, %vm3875
        %v3877 = vsel %vm3876, %v3869, %v3873
        %v3878 = vand.u32 2147483647, %v3551
        %vm3879 = vcmp.eq.f32.partialorder %v3878, 8.507059e+37
        %v3880 = vand.u32 %v3551, 2147483648
        %v3881 = vor.u32 1.1754944e-38, %v3880
        %v3882 = vsel %vm3879, %v3881, %v3877
        %v3883 = vmul.f32 1.0, %v3882
        %v3884 = vrcp.pop %v3553
        %v3885 = vmul.f32 %v3553, %v3884
        %v3886 = vsub.f32 1.0, %v3885
        %v3887 = vmul.f32 %v3884, %v3886
        %v3888 = vadd.f32 %v3884, %v3887
        %vm3889 = vweird.f32 %v3553
        %vm3890 = vweird.f32 %v3884
        %vm3891 = vmor %vm3889, %vm3890
        %v3892 = vsel %vm3891, %v3884, %v3888
        %v3893 = vand.u32 2147483647, %v3553
        %vm3894 = vcmp.eq.f32.partialorder %v3893, 8.507059e+37
        %v3895 = vand.u32 %v3553, 2147483648
        %v3896 = vor.u32 1.1754944e-38, %v3895
        %v3897 = vsel %vm3894, %v3896, %v3892
        %v3898 = vmul.f32 1.0, %v3897
        %v3899 = vmul.f32 %v3620, %v3673
        %v3900 = vmul.f32 %v3622, %v3688
        %v3901 = vmul.f32 %v3625, %v3703
        %v3902 = vmul.f32 %v3627, %v3718
        %v3903 = vmul.f32 %v3630, %v3733
        %v3904 = vmul.f32 %v3632, %v3748
        %v3905 = vmul.f32 %v3635, %v3763
        %v3906 = vmul.f32 %v3637, %v3778
        %v3907 = vmul.f32 %v3640, %v3793
        %v3908 = vmul.f32 %v3642, %v3808
        %v3909 = vmul.f32 %v3645, %v3823
        %v3910 = vmul.f32 %v3647, %v3838
        %v3911 = vmul.f32 %v3650, %v3853
        %v3912 = vmul.f32 %v3652, %v3868
        %v3913 = vmul.f32 %v3655, %v3883
        %v3914 = vmul.f32 %v3657, %v3898
        %v3915 = vpack.c.bf16 %v3899, %v3899
        %v3916 = vpack.c.bf16 %v3900, %v3900
        %v3917 = vpack.c.bf16 %v3901, %v3901
        %v3918 = vpack.c.bf16 %v3902, %v3902
        %v3919 = vpack.c.bf16 %v3903, %v3903
        %v3920 = vpack.c.bf16 %v3904, %v3904
        %v3921 = vpack.c.bf16 %v3905, %v3905
        %v3922 = vpack.c.bf16 %v3906, %v3906
        %v3923 = vpack.c.bf16 %v3907, %v3907
        %v3924 = vpack.c.bf16 %v3908, %v3908
        %v3925 = vpack.c.bf16 %v3909, %v3909
        %v3926 = vpack.c.bf16 %v3910, %v3910
        %v3927 = vpack.c.bf16 %v3911, %v3911
        %v3928 = vpack.c.bf16 %v3912, %v3912
        %v3929 = vpack.c.bf16 %v3913, %v3913
        %v3930 = vpack.c.bf16 %v3914, %v3914
        %3931 = vst.msk [vmem:[#allocation3 + $0x4] sm:$0xf] %vm2325, %v3915
        %3932 = vst.msk [vmem:[#allocation3 + $0xc] sm:$0xf] %vm2325, %v3916
        %3933 = vst.msk [vmem:[#allocation3 + $0x14] sm:$0xf] %vm2325, %v3917
        %3934 = vst.msk [vmem:[#allocation3 + $0x1c] sm:$0xf] %vm2325, %v3918
        %3935 = vst.msk [vmem:[#allocation3 + $0x24] sm:$0xf] %vm2325, %v3919
        %3936 = vst.msk [vmem:[#allocation3 + $0x2c] sm:$0xf] %vm2325, %v3920
        %3937 = vst.msk [vmem:[#allocation3 + $0x34] sm:$0xf] %vm2325, %v3921
        %3938 = vst.msk [vmem:[#allocation3 + $0x3c] sm:$0xf] %vm2325, %v3922
        %3939 = vst.msk [vmem:[#allocation3 + $0x44] sm:$0xf] %vm2325, %v3923
        %3940 = vst.msk [vmem:[#allocation3 + $0x4c] sm:$0xf] %vm2325, %v3924
        %3941 = vst.msk [vmem:[#allocation3 + $0x54] sm:$0xf] %vm2325, %v3925
        %3942 = vst.msk [vmem:[#allocation3 + $0x5c] sm:$0xf] %vm2325, %v3926
        %3943 = vst.msk [vmem:[#allocation3 + $0x64] sm:$0xf] %vm2325, %v3927
        %3944 = vst.msk [vmem:[#allocation3 + $0x6c] sm:$0xf] %vm2325, %v3928
        %3945 = vst.msk [vmem:[#allocation3 + $0x74] sm:$0xf] %vm2325, %v3929
        %3946 = vst.msk [vmem:[#allocation3 + $0x7c] sm:$0xf] %vm2325, %v3930
        %v3947 = vld [vmem:[#allocation2 + $0x4] sm:$0xf]
        %v3948 = vld [vmem:[#allocation2 + $0x1c] sm:$0xf]
        %v3949 = vld [vmem:[#allocation2 + $0x34] sm:$0xf]
        %v3950 = vld [vmem:[#allocation2 + $0x4c] sm:$0xf]
        %v3951 = vld [vmem:[#allocation2 + $0x64] sm:$0xf]
        %v3952 = vld [vmem:[#allocation2 + $0x7c] sm:$0xf]
        %v3953 = vld [vmem:[#allocation2 + $0x94] sm:$0xf]
        %v3954 = vld [vmem:[#allocation2 + $0xac] sm:$0xf]
        %v3955 = vld [vmem:[#allocation2 + $0xc4] sm:$0xf]
        %v3956 = vld [vmem:[#allocation2 + $0xdc] sm:$0xf]
        %v3957 = vld [vmem:[#allocation2 + $0xf4] sm:$0xf]
        %v3958 = vld [vmem:[#allocation2 + $0x10c] sm:$0xf]
        %v3959 = vld [vmem:[#allocation2 + $0x124] sm:$0xf]
        %v3960 = vld [vmem:[#allocation2 + $0x13c] sm:$0xf]
        %v3961 = vld [vmem:[#allocation2 + $0x154] sm:$0xf]
        %v3962 = vld [vmem:[#allocation2 + $0x16c] sm:$0xf]
        %v3963 = vld [vmem:[#allocation2 + $0xc] sm:$0xf]
        %v3964 = vld [vmem:[#allocation2 + $0x24] sm:$0xf]
        %v3965 = vld [vmem:[#allocation2 + $0x3c] sm:$0xf]
        %v3966 = vld [vmem:[#allocation2 + $0x54] sm:$0xf]
        %v3967 = vld [vmem:[#allocation2 + $0x6c] sm:$0xf]
        %v3968 = vld [vmem:[#allocation2 + $0x84] sm:$0xf]
        %v3969 = vld [vmem:[#allocation2 + $0x9c] sm:$0xf]
        %v3970 = vld [vmem:[#allocation2 + $0xb4] sm:$0xf]
        %v3971 = vld [vmem:[#allocation2 + $0xcc] sm:$0xf]
        %v3972 = vld [vmem:[#allocation2 + $0xe4] sm:$0xf]
        %v3973 = vld [vmem:[#allocation2 + $0xfc] sm:$0xf]
        %v3974 = vld [vmem:[#allocation2 + $0x114] sm:$0xf]
        %v3975 = vld [vmem:[#allocation2 + $0x12c] sm:$0xf]
        %v3976 = vld [vmem:[#allocation2 + $0x144] sm:$0xf]
        %v3977 = vld [vmem:[#allocation2 + $0x15c] sm:$0xf]
        %v3978 = vld [vmem:[#allocation2 + $0x174] sm:$0xf]
        %v3979 = vld [vmem:[#allocation2 + $0x14] sm:$0xf]
        %v3980 = vld [vmem:[#allocation2 + $0x2c] sm:$0xf]
        %v3981 = vld [vmem:[#allocation2 + $0x44] sm:$0xf]
        %v3982 = vld [vmem:[#allocation2 + $0x5c] sm:$0xf]
        %v3983 = vld [vmem:[#allocation2 + $0x74] sm:$0xf]
        %v3984 = vld [vmem:[#allocation2 + $0x8c] sm:$0xf]
        %v3985 = vld [vmem:[#allocation2 + $0xa4] sm:$0xf]
        %v3986 = vld [vmem:[#allocation2 + $0xbc] sm:$0xf]
        %v3987 = vld [vmem:[#allocation2 + $0xd4] sm:$0xf]
        %v3988 = vld [vmem:[#allocation2 + $0xec] sm:$0xf]
        %v3989 = vld [vmem:[#allocation2 + $0x104] sm:$0xf]
        %v3990 = vld [vmem:[#allocation2 + $0x11c] sm:$0xf]
        %v3991 = vld [vmem:[#allocation2 + $0x134] sm:$0xf]
        %v3992 = vld [vmem:[#allocation2 + $0x14c] sm:$0xf]
        %v3993 = vld [vmem:[#allocation2 + $0x164] sm:$0xf]
        %v3994 = vld [vmem:[#allocation2 + $0x17c] sm:$0xf]
        %v4011 = vunpack.c.l.b16 %v3947
        %v4012 = vunpack.c.l.b16 %v3948
        %v4013 = vunpack.c.l.b16 %v3949
        %v4014 = vunpack.c.l.b16 %v3950
        %v4015 = vunpack.c.l.b16 %v3951
        %v4016 = vunpack.c.l.b16 %v3952
        %v4017 = vunpack.c.l.b16 %v3953
        %v4018 = vunpack.c.l.b16 %v3954
        %v4019 = vunpack.c.l.b16 %v3955
        %v4020 = vunpack.c.l.b16 %v3956
        %v4021 = vunpack.c.l.b16 %v3957
        %v4022 = vunpack.c.l.b16 %v3958
        %v4023 = vunpack.c.l.b16 %v3959
        %v4024 = vunpack.c.l.b16 %v3960
        %v4025 = vunpack.c.l.b16 %v3961
        %v4026 = vunpack.c.l.b16 %v3962
        %v4027 = vpack.c.b16 %v4012, %v4011
        %v4028 = vpack.c.b16 %v4014, %v4013
        %v4029 = vpack.c.b16 %v4016, %v4015
        %v4030 = vpack.c.b16 %v4018, %v4017
        %v4031 = vpack.c.b16 %v4020, %v4019
        %v4032 = vpack.c.b16 %v4022, %v4021
        %v4033 = vpack.c.b16 %v4024, %v4023
        %v4034 = vpack.c.b16 %v4026, %v4025
        %4035 = vrot.lane.b32.xlu0 %v4027, 64
        %v4036 = vpop.permute.xlu0 %4035
        %4037 = vrot.lane.b32.xlu0 %v4028, 64
        %v4038 = vpop.permute.xlu0 %4037
        %4039 = vrot.lane.b32.xlu0 %v4029, 64
        %v4040 = vpop.permute.xlu0 %4039
        %4041 = vrot.lane.b32.xlu0 %v4030, 64
        %v4042 = vpop.permute.xlu0 %4041
        %4043 = vrot.lane.b32.xlu0 %v4031, 64
        %v4044 = vpop.permute.xlu0 %4043
        %4045 = vrot.lane.b32.xlu0 %v4032, 64
        %v4046 = vpop.permute.xlu0 %4045
        %4047 = vrot.lane.b32.xlu0 %v4033, 64
        %v4048 = vpop.permute.xlu0 %4047
        %4049 = vrot.lane.b32.xlu0 %v4034, 64
        %v4050 = vpop.permute.xlu0 %4049
        %v4067 = vunpack.c.l.b16 %v3963
        %v4068 = vunpack.c.l.b16 %v3964
        %v4069 = vunpack.c.l.b16 %v3965
        %v4070 = vunpack.c.l.b16 %v3966
        %v4071 = vunpack.c.l.b16 %v3967
        %v4072 = vunpack.c.l.b16 %v3968
        %v4073 = vunpack.c.l.b16 %v3969
        %v4074 = vunpack.c.l.b16 %v3970
        %v4075 = vunpack.c.l.b16 %v3971
        %v4076 = vunpack.c.l.b16 %v3972
        %v4077 = vunpack.c.l.b16 %v3973
        %v4078 = vunpack.c.l.b16 %v3974
        %v4079 = vunpack.c.l.b16 %v3975
        %v4080 = vunpack.c.l.b16 %v3976
        %v4081 = vunpack.c.l.b16 %v3977
        %v4082 = vunpack.c.l.b16 %v3978
        %v4083 = vpack.c.b16 %v4068, %v4067
        %v4084 = vpack.c.b16 %v4070, %v4069
        %v4085 = vpack.c.b16 %v4072, %v4071
        %v4086 = vpack.c.b16 %v4074, %v4073
        %v4087 = vpack.c.b16 %v4076, %v4075
        %v4088 = vpack.c.b16 %v4078, %v4077
        %v4089 = vpack.c.b16 %v4080, %v4079
        %v4090 = vpack.c.b16 %v4082, %v4081
        %4091 = vrot.lane.b32.xlu0 %v4083, 64
        %v4092 = vpop.permute.xlu0 %4091
        %4093 = vrot.lane.b32.xlu0 %v4084, 64
        %v4094 = vpop.permute.xlu0 %4093
        %4095 = vrot.lane.b32.xlu0 %v4085, 64
        %v4096 = vpop.permute.xlu0 %4095
        %4097 = vrot.lane.b32.xlu0 %v4086, 64
        %v4098 = vpop.permute.xlu0 %4097
        %4099 = vrot.lane.b32.xlu0 %v4087, 64
        %v4100 = vpop.permute.xlu0 %4099
        %4101 = vrot.lane.b32.xlu0 %v4088, 64
        %v4102 = vpop.permute.xlu0 %4101
        %4103 = vrot.lane.b32.xlu0 %v4089, 64
        %v4104 = vpop.permute.xlu0 %4103
        %4105 = vrot.lane.b32.xlu0 %v4090, 64
        %v4106 = vpop.permute.xlu0 %4105
        %v4108 = vsel %vm1722, %v4036, 0
        %v4111 = vsel %vm1722, %v4038, 0
        %v4114 = vsel %vm1722, %v4040, 0
        %v4117 = vsel %vm1722, %v4042, 0
        %v4120 = vsel %vm1722, %v4044, 0
        %v4123 = vsel %vm1722, %v4046, 0
        %v4126 = vsel %vm1722, %v4048, 0
        %v4129 = vsel %vm1722, %v4050, 0
        %v4132 = vsel %vm1722, %v4092, 0
        %v4135 = vsel %vm1722, %v4094, 0
        %v4138 = vsel %vm1722, %v4096, 0
        %v4141 = vsel %vm1722, %v4098, 0
        %v4144 = vsel %vm1722, %v4100, 0
        %v4147 = vsel %vm1722, %v4102, 0
        %v4150 = vsel %vm1722, %v4104, 0
        %v4153 = vsel %vm1722, %v4106, 0
        %4155 = vmatpush.bf16.xpose.msra.mxu0 %v4153
        %4156 = vmatpush.bf16.xpose.msra.mxu0 %v4150
        %4157 = vmatpush.bf16.xpose.msra.mxu0 %v4147
        %4158 = vmatpush.bf16.xpose.msra.mxu0 %v4144
        %4159 = vmatpush.bf16.xpose.msra.mxu0 %v4141
        %4160 = vmatpush.bf16.xpose.msra.mxu0 %v4138
        %4161 = vmatpush.bf16.xpose.msra.mxu0 %v4135
        %4162 = vmatpush.bf16.xpose.msra.mxu0 %v4132
        %4163 = vmatmul.bf16.gmra.mxu0 %v4108
        %v4164 = vpop.f32.mrf.mxu0
        %v4165 = vadd.f32 0.0, %v4164
        %v4166 = vpop.f32.mrf.mxu0
        %v4167 = vadd.f32 0.0, %v4166
        %4168 = vmatmul.bf16.gmra.mxu0 %v4111
        %v4169 = vpop.f32.mrf.mxu0
        %v4170 = vadd.f32 0.0, %v4169
        %v4171 = vpop.f32.mrf.mxu0
        %v4172 = vadd.f32 0.0, %v4171
        %4173 = vmatmul.bf16.gmra.mxu0 %v4114
        %v4174 = vpop.f32.mrf.mxu0
        %v4175 = vadd.f32 0.0, %v4174
        %v4176 = vpop.f32.mrf.mxu0
        %v4177 = vadd.f32 0.0, %v4176
        %4178 = vmatmul.bf16.gmra.mxu0 %v4117
        %v4179 = vpop.f32.mrf.mxu0
        %v4180 = vadd.f32 0.0, %v4179
        %v4181 = vpop.f32.mrf.mxu0
        %v4182 = vadd.f32 0.0, %v4181
        %4183 = vmatmul.bf16.gmra.mxu0 %v4120
        %v4184 = vpop.f32.mrf.mxu0
        %v4185 = vadd.f32 0.0, %v4184
        %v4186 = vpop.f32.mrf.mxu0
        %v4187 = vadd.f32 0.0, %v4186
        %4188 = vmatmul.bf16.gmra.mxu0 %v4123
        %v4189 = vpop.f32.mrf.mxu0
        %v4190 = vadd.f32 0.0, %v4189
        %v4191 = vpop.f32.mrf.mxu0
        %v4192 = vadd.f32 0.0, %v4191
        %4193 = vmatmul.bf16.gmra.mxu0 %v4126
        %v4194 = vpop.f32.mrf.mxu0
        %v4195 = vadd.f32 0.0, %v4194
        %v4196 = vpop.f32.mrf.mxu0
        %v4197 = vadd.f32 0.0, %v4196
        %4198 = vmatmul.bf16.gmra.mxu0 %v4129
        %v4199 = vpop.f32.mrf.mxu0
        %v4200 = vadd.f32 0.0, %v4199
        %v4201 = vpop.f32.mrf.mxu0
        %v4202 = vadd.f32 0.0, %v4201
        %4203 = vdwg.mxu0
        %v4204 = vsel %vm1578, %v4165, -1e+30
        %v4205 = vsel %vm1579, %v4167, -1e+30
        %v4206 = vsel %vm1580, %v4170, -1e+30
        %v4207 = vsel %vm1581, %v4172, -1e+30
        %v4208 = vsel %vm1582, %v4175, -1e+30
        %v4209 = vsel %vm1583, %v4177, -1e+30
        %v4210 = vsel %vm1584, %v4180, -1e+30
        %v4211 = vsel %vm1585, %v4182, -1e+30
        %v4212 = vsel %vm1586, %v4185, -1e+30
        %v4213 = vsel %vm1587, %v4187, -1e+30
        %v4214 = vsel %vm1588, %v4190, -1e+30
        %v4215 = vsel %vm1589, %v4192, -1e+30
        %v4216 = vsel %vm1590, %v4195, -1e+30
        %v4217 = vsel %vm1591, %v4197, -1e+30
        %v4218 = vsel %vm1592, %v4200, -1e+30
        %v4219 = vsel %vm1593, %v4202, -1e+30
        %4220 = vmax.xlane.f32.xlu0 %v4204
        %v4221 = vpop.xlane.xlu0 %4220
        %4222 = vmax.xlane.f32.xlu0 %v4205
        %v4223 = vpop.xlane.xlu0 %4222
        %4224 = vmax.xlane.f32.xlu0 %v4206
        %v4225 = vpop.xlane.xlu0 %4224
        %4226 = vmax.xlane.f32.xlu0 %v4207
        %v4227 = vpop.xlane.xlu0 %4226
        %4228 = vmax.xlane.f32.xlu0 %v4208
        %v4229 = vpop.xlane.xlu0 %4228
        %4230 = vmax.xlane.f32.xlu0 %v4209
        %v4231 = vpop.xlane.xlu0 %4230
        %4232 = vmax.xlane.f32.xlu0 %v4210
        %v4233 = vpop.xlane.xlu0 %4232
        %4234 = vmax.xlane.f32.xlu0 %v4211
        %v4235 = vpop.xlane.xlu0 %4234
        %4236 = vmax.xlane.f32.xlu0 %v4212
        %v4237 = vpop.xlane.xlu0 %4236
        %4238 = vmax.xlane.f32.xlu0 %v4213
        %v4239 = vpop.xlane.xlu0 %4238
        %4240 = vmax.xlane.f32.xlu0 %v4214
        %v4241 = vpop.xlane.xlu0 %4240
        %4242 = vmax.xlane.f32.xlu0 %v4215
        %v4243 = vpop.xlane.xlu0 %4242
        %4244 = vmax.xlane.f32.xlu0 %v4216
        %v4245 = vpop.xlane.xlu0 %4244
        %4246 = vmax.xlane.f32.xlu0 %v4217
        %v4247 = vpop.xlane.xlu0 %4246
        %4248 = vmax.xlane.f32.xlu0 %v4218
        %v4249 = vpop.xlane.xlu0 %4248
        %4250 = vmax.xlane.f32.xlu0 %v4219
        %v4251 = vpop.xlane.xlu0 %4250
        %v4252 = vsub.f32 %v4204, %v4221
        %v4253 = vsub.f32 %v4205, %v4223
        %v4254 = vsub.f32 %v4206, %v4225
        %v4255 = vsub.f32 %v4207, %v4227
        %v4256 = vsub.f32 %v4208, %v4229
        %v4257 = vsub.f32 %v4209, %v4231
        %v4258 = vsub.f32 %v4210, %v4233
        %v4259 = vsub.f32 %v4211, %v4235
        %v4260 = vsub.f32 %v4212, %v4237
        %v4261 = vsub.f32 %v4213, %v4239
        %v4262 = vsub.f32 %v4214, %v4241
        %v4263 = vsub.f32 %v4215, %v4243
        %v4264 = vsub.f32 %v4216, %v4245
        %v4265 = vsub.f32 %v4217, %v4247
        %v4266 = vsub.f32 %v4218, %v4249
        %v4267 = vsub.f32 %v4219, %v4251
        %v4268 = vmul.f32 %v4252, 1.442695
        %v4269 = vpow.pop %v4268
        %v4270 = vmul.f32 %v4253, 1.442695
        %v4271 = vpow.pop %v4270
        %v4272 = vmul.f32 %v4254, 1.442695
        %v4273 = vpow.pop %v4272
        %v4274 = vmul.f32 %v4255, 1.442695
        %v4275 = vpow.pop %v4274
        %v4276 = vmul.f32 %v4256, 1.442695
        %v4277 = vpow.pop %v4276
        %v4278 = vmul.f32 %v4257, 1.442695
        %v4279 = vpow.pop %v4278
        %v4280 = vmul.f32 %v4258, 1.442695
        %v4281 = vpow.pop %v4280
        %v4282 = vmul.f32 %v4259, 1.442695
        %v4283 = vpow.pop %v4282
        %v4284 = vmul.f32 %v4260, 1.442695
        %v4285 = vpow.pop %v4284
        %v4286 = vmul.f32 %v4261, 1.442695
        %v4287 = vpow.pop %v4286
        %v4288 = vmul.f32 %v4262, 1.442695
        %v4289 = vpow.pop %v4288
        %v4290 = vmul.f32 %v4263, 1.442695
        %v4291 = vpow.pop %v4290
        %v4292 = vmul.f32 %v4264, 1.442695
        %v4293 = vpow.pop %v4292
        %v4294 = vmul.f32 %v4265, 1.442695
        %v4295 = vpow.pop %v4294
        %v4296 = vmul.f32 %v4266, 1.442695
        %v4297 = vpow.pop %v4296
        %v4298 = vmul.f32 %v4267, 1.442695
        %v4299 = vpow.pop %v4298
        %4300 = vadd.xlane.f32.xlu0 %v4269
        %v4301 = vpop.xlane.xlu0 %4300
        %4302 = vadd.xlane.f32.xlu0 %v4271
        %v4303 = vpop.xlane.xlu0 %4302
        %4304 = vadd.xlane.f32.xlu0 %v4273
        %v4305 = vpop.xlane.xlu0 %4304
        %4306 = vadd.xlane.f32.xlu0 %v4275
        %v4307 = vpop.xlane.xlu0 %4306
        %4308 = vadd.xlane.f32.xlu0 %v4277
        %v4309 = vpop.xlane.xlu0 %4308
        %4310 = vadd.xlane.f32.xlu0 %v4279
        %v4311 = vpop.xlane.xlu0 %4310
        %4312 = vadd.xlane.f32.xlu0 %v4281
        %v4313 = vpop.xlane.xlu0 %4312
        %4314 = vadd.xlane.f32.xlu0 %v4283
        %v4315 = vpop.xlane.xlu0 %4314
        %4316 = vadd.xlane.f32.xlu0 %v4285
        %v4317 = vpop.xlane.xlu0 %4316
        %4318 = vadd.xlane.f32.xlu0 %v4287
        %v4319 = vpop.xlane.xlu0 %4318
        %4320 = vadd.xlane.f32.xlu0 %v4289
        %v4321 = vpop.xlane.xlu0 %4320
        %4322 = vadd.xlane.f32.xlu0 %v4291
        %v4323 = vpop.xlane.xlu0 %4322
        %4324 = vadd.xlane.f32.xlu0 %v4293
        %v4325 = vpop.xlane.xlu0 %4324
        %4326 = vadd.xlane.f32.xlu0 %v4295
        %v4327 = vpop.xlane.xlu0 %4326
        %4328 = vadd.xlane.f32.xlu0 %v4297
        %v4329 = vpop.xlane.xlu0 %4328
        %4330 = vadd.xlane.f32.xlu0 %v4299
        %v4331 = vpop.xlane.xlu0 %4330
        %v4332 = vpack.c.bf16 %v4271, %v4269
        %v4333 = vpack.c.bf16 %v4275, %v4273
        %v4334 = vpack.c.bf16 %v4279, %v4277
        %v4335 = vpack.c.bf16 %v4283, %v4281
        %v4336 = vpack.c.bf16 %v4287, %v4285
        %v4337 = vpack.c.bf16 %v4291, %v4289
        %v4338 = vpack.c.bf16 %v4295, %v4293
        %v4339 = vpack.c.bf16 %v4299, %v4297
        %v4356 = vunpack.c.l.b16 %v3979
        %v4357 = vunpack.c.l.b16 %v3980
        %v4358 = vunpack.c.l.b16 %v3981
        %v4359 = vunpack.c.l.b16 %v3982
        %v4360 = vunpack.c.l.b16 %v3983
        %v4361 = vunpack.c.l.b16 %v3984
        %v4362 = vunpack.c.l.b16 %v3985
        %v4363 = vunpack.c.l.b16 %v3986
        %v4364 = vunpack.c.l.b16 %v3987
        %v4365 = vunpack.c.l.b16 %v3988
        %v4366 = vunpack.c.l.b16 %v3989
        %v4367 = vunpack.c.l.b16 %v3990
        %v4368 = vunpack.c.l.b16 %v3991
        %v4369 = vunpack.c.l.b16 %v3992
        %v4370 = vunpack.c.l.b16 %v3993
        %v4371 = vunpack.c.l.b16 %v3994
        %v4372 = vpack.c.b16 %v4357, %v4356
        %v4373 = vpack.c.b16 %v4359, %v4358
        %v4374 = vpack.c.b16 %v4361, %v4360
        %v4375 = vpack.c.b16 %v4363, %v4362
        %v4376 = vpack.c.b16 %v4365, %v4364
        %v4377 = vpack.c.b16 %v4367, %v4366
        %v4378 = vpack.c.b16 %v4369, %v4368
        %v4379 = vpack.c.b16 %v4371, %v4370
        %4380 = vrot.lane.b32.xlu0 %v4372, 64
        %v4381 = vpop.permute.xlu0 %4380
        %4382 = vrot.lane.b32.xlu0 %v4373, 64
        %v4383 = vpop.permute.xlu0 %4382
        %4384 = vrot.lane.b32.xlu0 %v4374, 64
        %v4385 = vpop.permute.xlu0 %4384
        %4386 = vrot.lane.b32.xlu0 %v4375, 64
        %v4387 = vpop.permute.xlu0 %4386
        %4388 = vrot.lane.b32.xlu0 %v4376, 64
        %v4389 = vpop.permute.xlu0 %4388
        %4390 = vrot.lane.b32.xlu0 %v4377, 64
        %v4391 = vpop.permute.xlu0 %4390
        %4392 = vrot.lane.b32.xlu0 %v4378, 64
        %v4393 = vpop.permute.xlu0 %4392
        %4394 = vrot.lane.b32.xlu0 %v4379, 64
        %v4395 = vpop.permute.xlu0 %4394
        %4404 = vmatpush.bf16.msra.mxu0 %v4395
        %4405 = vmatpush.bf16.msra.mxu0 %v4393
        %4406 = vmatpush.bf16.msra.mxu0 %v4391
        %4407 = vmatpush.bf16.msra.mxu0 %v4389
        %4408 = vmatpush.bf16.msra.mxu0 %v4387
        %4409 = vmatpush.bf16.msra.mxu0 %v4385
        %4410 = vmatpush.bf16.msra.mxu0 %v4383
        %4411 = vmatpush.bf16.msra.mxu0 %v4381
        %4412 = vmatmul.bf16.gmra.mxu0 %v4332
        %v4413 = vpop.f32.mrf.mxu0
        %v4414 = vadd.f32 0.0, %v4413
        %v4415 = vpop.f32.mrf.mxu0
        %v4416 = vadd.f32 0.0, %v4415
        %4417 = vmatmul.bf16.gmra.mxu0 %v4333
        %v4418 = vpop.f32.mrf.mxu0
        %v4419 = vadd.f32 0.0, %v4418
        %v4420 = vpop.f32.mrf.mxu0
        %v4421 = vadd.f32 0.0, %v4420
        %4422 = vmatmul.bf16.gmra.mxu0 %v4334
        %v4423 = vpop.f32.mrf.mxu0
        %v4424 = vadd.f32 0.0, %v4423
        %v4425 = vpop.f32.mrf.mxu0
        %v4426 = vadd.f32 0.0, %v4425
        %4427 = vmatmul.bf16.gmra.mxu0 %v4335
        %v4428 = vpop.f32.mrf.mxu0
        %v4429 = vadd.f32 0.0, %v4428
        %v4430 = vpop.f32.mrf.mxu0
        %v4431 = vadd.f32 0.0, %v4430
        %4432 = vmatmul.bf16.gmra.mxu0 %v4336
        %v4433 = vpop.f32.mrf.mxu0
        %v4434 = vadd.f32 0.0, %v4433
        %v4435 = vpop.f32.mrf.mxu0
        %v4436 = vadd.f32 0.0, %v4435
        %4437 = vmatmul.bf16.gmra.mxu0 %v4337
        %v4438 = vpop.f32.mrf.mxu0
        %v4439 = vadd.f32 0.0, %v4438
        %v4440 = vpop.f32.mrf.mxu0
        %v4441 = vadd.f32 0.0, %v4440
        %4442 = vmatmul.bf16.gmra.mxu0 %v4338
        %v4443 = vpop.f32.mrf.mxu0
        %v4444 = vadd.f32 0.0, %v4443
        %v4445 = vpop.f32.mrf.mxu0
        %v4446 = vadd.f32 0.0, %v4445
        %4447 = vmatmul.bf16.gmra.mxu0 %v4339
        %v4448 = vpop.f32.mrf.mxu0
        %v4449 = vadd.f32 0.0, %v4448
        %v4450 = vpop.f32.mrf.mxu0
        %v4451 = vadd.f32 0.0, %v4450
        %4452 = vdwg.mxu0
        %v4453 = vrcp.pop %v4301
        %v4454 = vmul.f32 %v4301, %v4453
        %v4455 = vsub.f32 1.0, %v4454
        %v4456 = vmul.f32 %v4453, %v4455
        %v4457 = vadd.f32 %v4453, %v4456
        %vm4458 = vweird.f32 %v4301
        %vm4459 = vweird.f32 %v4453
        %vm4460 = vmor %vm4458, %vm4459
        %v4461 = vsel %vm4460, %v4453, %v4457
        %v4462 = vand.u32 2147483647, %v4301
        %vm4463 = vcmp.eq.f32.partialorder %v4462, 8.507059e+37
        %v4464 = vand.u32 %v4301, 2147483648
        %v4465 = vor.u32 1.1754944e-38, %v4464
        %v4466 = vsel %vm4463, %v4465, %v4461
        %v4467 = vmul.f32 1.0, %v4466
        %v4468 = vrcp.pop %v4303
        %v4469 = vmul.f32 %v4303, %v4468
        %v4470 = vsub.f32 1.0, %v4469
        %v4471 = vmul.f32 %v4468, %v4470
        %v4472 = vadd.f32 %v4468, %v4471
        %vm4473 = vweird.f32 %v4303
        %vm4474 = vweird.f32 %v4468
        %vm4475 = vmor %vm4473, %vm4474
        %v4476 = vsel %vm4475, %v4468, %v4472
        %v4477 = vand.u32 2147483647, %v4303
        %vm4478 = vcmp.eq.f32.partialorder %v4477, 8.507059e+37
        %v4479 = vand.u32 %v4303, 2147483648
        %v4480 = vor.u32 1.1754944e-38, %v4479
        %v4481 = vsel %vm4478, %v4480, %v4476
        %v4482 = vmul.f32 1.0, %v4481
        %v4483 = vrcp.pop %v4305
        %v4484 = vmul.f32 %v4305, %v4483
        %v4485 = vsub.f32 1.0, %v4484
        %v4486 = vmul.f32 %v4483, %v4485
        %v4487 = vadd.f32 %v4483, %v4486
        %vm4488 = vweird.f32 %v4305
        %vm4489 = vweird.f32 %v4483
        %vm4490 = vmor %vm4488, %vm4489
        %v4491 = vsel %vm4490, %v4483, %v4487
        %v4492 = vand.u32 2147483647, %v4305
        %vm4493 = vcmp.eq.f32.partialorder %v4492, 8.507059e+37
        %v4494 = vand.u32 %v4305, 2147483648
        %v4495 = vor.u32 1.1754944e-38, %v4494
        %v4496 = vsel %vm4493, %v4495, %v4491
        %v4497 = vmul.f32 1.0, %v4496
        %v4498 = vrcp.pop %v4307
        %v4499 = vmul.f32 %v4307, %v4498
        %v4500 = vsub.f32 1.0, %v4499
        %v4501 = vmul.f32 %v4498, %v4500
        %v4502 = vadd.f32 %v4498, %v4501
        %vm4503 = vweird.f32 %v4307
        %vm4504 = vweird.f32 %v4498
        %vm4505 = vmor %vm4503, %vm4504
        %v4506 = vsel %vm4505, %v4498, %v4502
        %v4507 = vand.u32 2147483647, %v4307
        %vm4508 = vcmp.eq.f32.partialorder %v4507, 8.507059e+37
        %v4509 = vand.u32 %v4307, 2147483648
        %v4510 = vor.u32 1.1754944e-38, %v4509
        %v4511 = vsel %vm4508, %v4510, %v4506
        %v4512 = vmul.f32 1.0, %v4511
        %v4513 = vrcp.pop %v4309
        %v4514 = vmul.f32 %v4309, %v4513
        %v4515 = vsub.f32 1.0, %v4514
        %v4516 = vmul.f32 %v4513, %v4515
        %v4517 = vadd.f32 %v4513, %v4516
        %vm4518 = vweird.f32 %v4309
        %vm4519 = vweird.f32 %v4513
        %vm4520 = vmor %vm4518, %vm4519
        %v4521 = vsel %vm4520, %v4513, %v4517
        %v4522 = vand.u32 2147483647, %v4309
        %vm4523 = vcmp.eq.f32.partialorder %v4522, 8.507059e+37
        %v4524 = vand.u32 %v4309, 2147483648
        %v4525 = vor.u32 1.1754944e-38, %v4524
        %v4526 = vsel %vm4523, %v4525, %v4521
        %v4527 = vmul.f32 1.0, %v4526
        %v4528 = vrcp.pop %v4311
        %v4529 = vmul.f32 %v4311, %v4528
        %v4530 = vsub.f32 1.0, %v4529
        %v4531 = vmul.f32 %v4528, %v4530
        %v4532 = vadd.f32 %v4528, %v4531
        %vm4533 = vweird.f32 %v4311
        %vm4534 = vweird.f32 %v4528
        %vm4535 = vmor %vm4533, %vm4534
        %v4536 = vsel %vm4535, %v4528, %v4532
        %v4537 = vand.u32 2147483647, %v4311
        %vm4538 = vcmp.eq.f32.partialorder %v4537, 8.507059e+37
        %v4539 = vand.u32 %v4311, 2147483648
        %v4540 = vor.u32 1.1754944e-38, %v4539
        %v4541 = vsel %vm4538, %v4540, %v4536
        %v4542 = vmul.f32 1.0, %v4541
        %v4543 = vrcp.pop %v4313
        %v4544 = vmul.f32 %v4313, %v4543
        %v4545 = vsub.f32 1.0, %v4544
        %v4546 = vmul.f32 %v4543, %v4545
        %v4547 = vadd.f32 %v4543, %v4546
        %vm4548 = vweird.f32 %v4313
        %vm4549 = vweird.f32 %v4543
        %vm4550 = vmor %vm4548, %vm4549
        %v4551 = vsel %vm4550, %v4543, %v4547
        %v4552 = vand.u32 2147483647, %v4313
        %vm4553 = vcmp.eq.f32.partialorder %v4552, 8.507059e+37
        %v4554 = vand.u32 %v4313, 2147483648
        %v4555 = vor.u32 1.1754944e-38, %v4554
        %v4556 = vsel %vm4553, %v4555, %v4551
        %v4557 = vmul.f32 1.0, %v4556
        %v4558 = vrcp.pop %v4315
        %v4559 = vmul.f32 %v4315, %v4558
        %v4560 = vsub.f32 1.0, %v4559
        %v4561 = vmul.f32 %v4558, %v4560
        %v4562 = vadd.f32 %v4558, %v4561
        %vm4563 = vweird.f32 %v4315
        %vm4564 = vweird.f32 %v4558
        %vm4565 = vmor %vm4563, %vm4564
        %v4566 = vsel %vm4565, %v4558, %v4562
        %v4567 = vand.u32 2147483647, %v4315
        %vm4568 = vcmp.eq.f32.partialorder %v4567, 8.507059e+37
        %v4569 = vand.u32 %v4315, 2147483648
        %v4570 = vor.u32 1.1754944e-38, %v4569
        %v4571 = vsel %vm4568, %v4570, %v4566
        %v4572 = vmul.f32 1.0, %v4571
        %v4573 = vrcp.pop %v4317
        %v4574 = vmul.f32 %v4317, %v4573
        %v4575 = vsub.f32 1.0, %v4574
        %v4576 = vmul.f32 %v4573, %v4575
        %v4577 = vadd.f32 %v4573, %v4576
        %vm4578 = vweird.f32 %v4317
        %vm4579 = vweird.f32 %v4573
        %vm4580 = vmor %vm4578, %vm4579
        %v4581 = vsel %vm4580, %v4573, %v4577
        %v4582 = vand.u32 2147483647, %v4317
        %vm4583 = vcmp.eq.f32.partialorder %v4582, 8.507059e+37
        %v4584 = vand.u32 %v4317, 2147483648
        %v4585 = vor.u32 1.1754944e-38, %v4584
        %v4586 = vsel %vm4583, %v4585, %v4581
        %v4587 = vmul.f32 1.0, %v4586
        %v4588 = vrcp.pop %v4319
        %v4589 = vmul.f32 %v4319, %v4588
        %v4590 = vsub.f32 1.0, %v4589
        %v4591 = vmul.f32 %v4588, %v4590
        %v4592 = vadd.f32 %v4588, %v4591
        %vm4593 = vweird.f32 %v4319
        %vm4594 = vweird.f32 %v4588
        %vm4595 = vmor %vm4593, %vm4594
        %v4596 = vsel %vm4595, %v4588, %v4592
        %v4597 = vand.u32 2147483647, %v4319
        %vm4598 = vcmp.eq.f32.partialorder %v4597, 8.507059e+37
        %v4599 = vand.u32 %v4319, 2147483648
        %v4600 = vor.u32 1.1754944e-38, %v4599
        %v4601 = vsel %vm4598, %v4600, %v4596
        %v4602 = vmul.f32 1.0, %v4601
        %v4603 = vrcp.pop %v4321
        %v4604 = vmul.f32 %v4321, %v4603
        %v4605 = vsub.f32 1.0, %v4604
        %v4606 = vmul.f32 %v4603, %v4605
        %v4607 = vadd.f32 %v4603, %v4606
        %vm4608 = vweird.f32 %v4321
        %vm4609 = vweird.f32 %v4603
        %vm4610 = vmor %vm4608, %vm4609
        %v4611 = vsel %vm4610, %v4603, %v4607
        %v4612 = vand.u32 2147483647, %v4321
        %vm4613 = vcmp.eq.f32.partialorder %v4612, 8.507059e+37
        %v4614 = vand.u32 %v4321, 2147483648
        %v4615 = vor.u32 1.1754944e-38, %v4614
        %v4616 = vsel %vm4613, %v4615, %v4611
        %v4617 = vmul.f32 1.0, %v4616
        %v4618 = vrcp.pop %v4323
        %v4619 = vmul.f32 %v4323, %v4618
        %v4620 = vsub.f32 1.0, %v4619
        %v4621 = vmul.f32 %v4618, %v4620
        %v4622 = vadd.f32 %v4618, %v4621
        %vm4623 = vweird.f32 %v4323
        %vm4624 = vweird.f32 %v4618
        %vm4625 = vmor %vm4623, %vm4624
        %v4626 = vsel %vm4625, %v4618, %v4622
        %v4627 = vand.u32 2147483647, %v4323
        %vm4628 = vcmp.eq.f32.partialorder %v4627, 8.507059e+37
        %v4629 = vand.u32 %v4323, 2147483648
        %v4630 = vor.u32 1.1754944e-38, %v4629
        %v4631 = vsel %vm4628, %v4630, %v4626
        %v4632 = vmul.f32 1.0, %v4631
        %v4633 = vrcp.pop %v4325
        %v4634 = vmul.f32 %v4325, %v4633
        %v4635 = vsub.f32 1.0, %v4634
        %v4636 = vmul.f32 %v4633, %v4635
        %v4637 = vadd.f32 %v4633, %v4636
        %vm4638 = vweird.f32 %v4325
        %vm4639 = vweird.f32 %v4633
        %vm4640 = vmor %vm4638, %vm4639
        %v4641 = vsel %vm4640, %v4633, %v4637
        %v4642 = vand.u32 2147483647, %v4325
        %vm4643 = vcmp.eq.f32.partialorder %v4642, 8.507059e+37
        %v4644 = vand.u32 %v4325, 2147483648
        %v4645 = vor.u32 1.1754944e-38, %v4644
        %v4646 = vsel %vm4643, %v4645, %v4641
        %v4647 = vmul.f32 1.0, %v4646
        %v4648 = vrcp.pop %v4327
        %v4649 = vmul.f32 %v4327, %v4648
        %v4650 = vsub.f32 1.0, %v4649
        %v4651 = vmul.f32 %v4648, %v4650
        %v4652 = vadd.f32 %v4648, %v4651
        %vm4653 = vweird.f32 %v4327
        %vm4654 = vweird.f32 %v4648
        %vm4655 = vmor %vm4653, %vm4654
        %v4656 = vsel %vm4655, %v4648, %v4652
        %v4657 = vand.u32 2147483647, %v4327
        %vm4658 = vcmp.eq.f32.partialorder %v4657, 8.507059e+37
        %v4659 = vand.u32 %v4327, 2147483648
        %v4660 = vor.u32 1.1754944e-38, %v4659
        %v4661 = vsel %vm4658, %v4660, %v4656
        %v4662 = vmul.f32 1.0, %v4661
        %v4663 = vrcp.pop %v4329
        %v4664 = vmul.f32 %v4329, %v4663
        %v4665 = vsub.f32 1.0, %v4664
        %v4666 = vmul.f32 %v4663, %v4665
        %v4667 = vadd.f32 %v4663, %v4666
        %vm4668 = vweird.f32 %v4329
        %vm4669 = vweird.f32 %v4663
        %vm4670 = vmor %vm4668, %vm4669
        %v4671 = vsel %vm4670, %v4663, %v4667
        %v4672 = vand.u32 2147483647, %v4329
        %vm4673 = vcmp.eq.f32.partialorder %v4672, 8.507059e+37
        %v4674 = vand.u32 %v4329, 2147483648
        %v4675 = vor.u32 1.1754944e-38, %v4674
        %v4676 = vsel %vm4673, %v4675, %v4671
        %v4677 = vmul.f32 1.0, %v4676
        %v4678 = vrcp.pop %v4331
        %v4679 = vmul.f32 %v4331, %v4678
        %v4680 = vsub.f32 1.0, %v4679
        %v4681 = vmul.f32 %v4678, %v4680
        %v4682 = vadd.f32 %v4678, %v4681
        %vm4683 = vweird.f32 %v4331
        %vm4684 = vweird.f32 %v4678
        %vm4685 = vmor %vm4683, %vm4684
        %v4686 = vsel %vm4685, %v4678, %v4682
        %v4687 = vand.u32 2147483647, %v4331
        %vm4688 = vcmp.eq.f32.partialorder %v4687, 8.507059e+37
        %v4689 = vand.u32 %v4331, 2147483648
        %v4690 = vor.u32 1.1754944e-38, %v4689
        %v4691 = vsel %vm4688, %v4690, %v4686
        %v4692 = vmul.f32 1.0, %v4691
        %v4693 = vmul.f32 %v4414, %v4467
        %v4694 = vmul.f32 %v4416, %v4482
        %v4695 = vmul.f32 %v4419, %v4497
        %v4696 = vmul.f32 %v4421, %v4512
        %v4697 = vmul.f32 %v4424, %v4527
        %v4698 = vmul.f32 %v4426, %v4542
        %v4699 = vmul.f32 %v4429, %v4557
        %v4700 = vmul.f32 %v4431, %v4572
        %v4701 = vmul.f32 %v4434, %v4587
        %v4702 = vmul.f32 %v4436, %v4602
        %v4703 = vmul.f32 %v4439, %v4617
        %v4704 = vmul.f32 %v4441, %v4632
        %v4705 = vmul.f32 %v4444, %v4647
        %v4706 = vmul.f32 %v4446, %v4662
        %v4707 = vmul.f32 %v4449, %v4677
        %v4708 = vmul.f32 %v4451, %v4692
        %v4709 = vpack.c.bf16 %v4693, %v4693
        %v4710 = vpack.c.bf16 %v4694, %v4694
        %v4711 = vpack.c.bf16 %v4695, %v4695
        %v4712 = vpack.c.bf16 %v4696, %v4696
        %v4713 = vpack.c.bf16 %v4697, %v4697
        %v4714 = vpack.c.bf16 %v4698, %v4698
        %v4715 = vpack.c.bf16 %v4699, %v4699
        %v4716 = vpack.c.bf16 %v4700, %v4700
        %v4717 = vpack.c.bf16 %v4701, %v4701
        %v4718 = vpack.c.bf16 %v4702, %v4702
        %v4719 = vpack.c.bf16 %v4703, %v4703
        %v4720 = vpack.c.bf16 %v4704, %v4704
        %v4721 = vpack.c.bf16 %v4705, %v4705
        %v4722 = vpack.c.bf16 %v4706, %v4706
        %v4723 = vpack.c.bf16 %v4707, %v4707
        %v4724 = vpack.c.bf16 %v4708, %v4708
        %4741 = vrot.lane.b32.xlu0 %v4709, 64
        %v4742 = vpop.permute.xlu0 %4741
        %4743 = vrot.lane.b32.xlu0 %v4710, 64
        %v4744 = vpop.permute.xlu0 %4743
        %4745 = vrot.lane.b32.xlu0 %v4711, 64
        %v4746 = vpop.permute.xlu0 %4745
        %4747 = vrot.lane.b32.xlu0 %v4712, 64
        %v4748 = vpop.permute.xlu0 %4747
        %4749 = vrot.lane.b32.xlu0 %v4713, 64
        %v4750 = vpop.permute.xlu0 %4749
        %4751 = vrot.lane.b32.xlu0 %v4714, 64
        %v4752 = vpop.permute.xlu0 %4751
        %4753 = vrot.lane.b32.xlu0 %v4715, 64
        %v4754 = vpop.permute.xlu0 %4753
        %4755 = vrot.lane.b32.xlu0 %v4716, 64
        %v4756 = vpop.permute.xlu0 %4755
        %4757 = vrot.lane.b32.xlu0 %v4717, 64
        %v4758 = vpop.permute.xlu0 %4757
        %4759 = vrot.lane.b32.xlu0 %v4718, 64
        %v4760 = vpop.permute.xlu0 %4759
        %4761 = vrot.lane.b32.xlu0 %v4719, 64
        %v4762 = vpop.permute.xlu0 %4761
        %4763 = vrot.lane.b32.xlu0 %v4720, 64
        %v4764 = vpop.permute.xlu0 %4763
        %4765 = vrot.lane.b32.xlu0 %v4721, 64
        %v4766 = vpop.permute.xlu0 %4765
        %4767 = vrot.lane.b32.xlu0 %v4722, 64
        %v4768 = vpop.permute.xlu0 %4767
        %4769 = vrot.lane.b32.xlu0 %v4723, 64
        %v4770 = vpop.permute.xlu0 %4769
        %4771 = vrot.lane.b32.xlu0 %v4724, 64
        %v4772 = vpop.permute.xlu0 %4771
        %4789 = vst.msk [vmem:[#allocation3 + $0x4] sm:$0xf] %vm3184, %v4742
        %4790 = vst.msk [vmem:[#allocation3 + $0xc] sm:$0xf] %vm3184, %v4744
        %4791 = vst.msk [vmem:[#allocation3 + $0x14] sm:$0xf] %vm3184, %v4746
        %4792 = vst.msk [vmem:[#allocation3 + $0x1c] sm:$0xf] %vm3184, %v4748
        %4793 = vst.msk [vmem:[#allocation3 + $0x24] sm:$0xf] %vm3184, %v4750
        %4794 = vst.msk [vmem:[#allocation3 + $0x2c] sm:$0xf] %vm3184, %v4752
        %4795 = vst.msk [vmem:[#allocation3 + $0x34] sm:$0xf] %vm3184, %v4754
        %4796 = vst.msk [vmem:[#allocation3 + $0x3c] sm:$0xf] %vm3184, %v4756
        %4797 = vst.msk [vmem:[#allocation3 + $0x44] sm:$0xf] %vm3184, %v4758
        %4798 = vst.msk [vmem:[#allocation3 + $0x4c] sm:$0xf] %vm3184, %v4760
        %4799 = vst.msk [vmem:[#allocation3 + $0x54] sm:$0xf] %vm3184, %v4762
        %4800 = vst.msk [vmem:[#allocation3 + $0x5c] sm:$0xf] %vm3184, %v4764
        %4801 = vst.msk [vmem:[#allocation3 + $0x64] sm:$0xf] %vm3184, %v4766
        %4802 = vst.msk [vmem:[#allocation3 + $0x6c] sm:$0xf] %vm3184, %v4768
        %4803 = vst.msk [vmem:[#allocation3 + $0x74] sm:$0xf] %vm3184, %v4770
        %4804 = vst.msk [vmem:[#allocation3 + $0x7c] sm:$0xf] %vm3184, %v4772
        %v4805 = vld [vmem:[#allocation3] sm:$0xff]
        %v4806 = vld [vmem:[#allocation3 + $0x8] sm:$0xff]
        %v4807 = vld [vmem:[#allocation3 + $0x10] sm:$0xff]
        %v4808 = vld [vmem:[#allocation3 + $0x18] sm:$0xff]
        %v4809 = vld [vmem:[#allocation3 + $0x20] sm:$0xff]
        %v4810 = vld [vmem:[#allocation3 + $0x28] sm:$0xff]
        %v4811 = vld [vmem:[#allocation3 + $0x30] sm:$0xff]
        %v4812 = vld [vmem:[#allocation3 + $0x38] sm:$0xff]
        %v4813 = vld [vmem:[#allocation3 + $0x40] sm:$0xff]
        %v4814 = vld [vmem:[#allocation3 + $0x48] sm:$0xff]
        %v4815 = vld [vmem:[#allocation3 + $0x50] sm:$0xff]
        %v4816 = vld [vmem:[#allocation3 + $0x58] sm:$0xff]
        %v4817 = vld [vmem:[#allocation3 + $0x60] sm:$0xff]
        %v4818 = vld [vmem:[#allocation3 + $0x68] sm:$0xff]
        %v4819 = vld [vmem:[#allocation3 + $0x70] sm:$0xff]
        %v4820 = vld [vmem:[#allocation3 + $0x78] sm:$0xff]
        %v4821 = vld [vmem:[#allocation9] sm:$0xff]
        %v4822 = vld [vmem:[#allocation9 + $0x8] sm:$0xff]
        %v4823 = vld [vmem:[#allocation9 + $0x10] sm:$0xff]
        %v4824 = vld [vmem:[#allocation9 + $0x18] sm:$0xff]
        %v4825 = vld [vmem:[#allocation9 + $0x20] sm:$0xff]
        %v4826 = vld [vmem:[#allocation9 + $0x28] sm:$0xff]
        %v4827 = vld [vmem:[#allocation9 + $0x30] sm:$0xff]
        %v4828 = vld [vmem:[#allocation9 + $0x38] sm:$0xff]
        %v4829 = vld [vmem:[#allocation9 + $0x40] sm:$0xff]
        %v4830 = vld [vmem:[#allocation9 + $0x48] sm:$0xff]
        %v4831 = vld [vmem:[#allocation9 + $0x50] sm:$0xff]
        %v4832 = vld [vmem:[#allocation9 + $0x58] sm:$0xff]
        %v4833 = vld [vmem:[#allocation9 + $0x60] sm:$0xff]
        %v4834 = vld [vmem:[#allocation9 + $0x68] sm:$0xff]
        %v4835 = vld [vmem:[#allocation9 + $0x70] sm:$0xff]
        %v4836 = vld [vmem:[#allocation9 + $0x78] sm:$0xff]
        %v4837 = vld [vmem:[#allocation9 + $0x80] sm:$0xff]
        %v4838 = vld [vmem:[#allocation9 + $0x88] sm:$0xff]
        %v4839 = vld [vmem:[#allocation9 + $0x90] sm:$0xff]
        %v4840 = vld [vmem:[#allocation9 + $0x98] sm:$0xff]
        %v4841 = vld [vmem:[#allocation9 + $0xa0] sm:$0xff]
        %v4842 = vld [vmem:[#allocation9 + $0xa8] sm:$0xff]
        %v4843 = vld [vmem:[#allocation9 + $0xb0] sm:$0xff]
        %v4844 = vld [vmem:[#allocation9 + $0xb8] sm:$0xff]
        %v4845 = vld [vmem:[#allocation9 + $0xc0] sm:$0xff]
        %v4846 = vld [vmem:[#allocation9 + $0xc8] sm:$0xff]
        %v4847 = vld [vmem:[#allocation9 + $0xd0] sm:$0xff]
        %v4848 = vld [vmem:[#allocation9 + $0xd8] sm:$0xff]
        %v4849 = vld [vmem:[#allocation9 + $0xe0] sm:$0xff]
        %v4850 = vld [vmem:[#allocation9 + $0xe8] sm:$0xff]
        %v4851 = vld [vmem:[#allocation9 + $0xf0] sm:$0xff]
        %v4852 = vld [vmem:[#allocation9 + $0xf8] sm:$0xff]
        %v4853 = vld [vmem:[%s3] sm:$0x3]
        %v4855 = vperm.slane %v4853, 0
        %v4856 = vperm.slane %v4853, 1
        %v4875 = vunpack.c.l.b16 %v4805
        %v4876 = vunpack.c.h.b16 %v4805
        %v4877 = vunpack.c.l.b16 %v4806
        %v4878 = vunpack.c.h.b16 %v4806
        %v4879 = vunpack.c.l.b16 %v4807
        %v4880 = vunpack.c.h.b16 %v4807
        %v4881 = vunpack.c.l.b16 %v4808
        %v4882 = vunpack.c.h.b16 %v4808
        %v4883 = vunpack.c.l.b16 %v4809
        %v4884 = vunpack.c.h.b16 %v4809
        %v4885 = vunpack.c.l.b16 %v4810
        %v4886 = vunpack.c.h.b16 %v4810
        %v4887 = vunpack.c.l.b16 %v4811
        %v4888 = vunpack.c.h.b16 %v4811
        %v4889 = vunpack.c.l.b16 %v4812
        %v4890 = vunpack.c.h.b16 %v4812
        %v4891 = vunpack.c.l.b16 %v4813
        %v4892 = vunpack.c.h.b16 %v4813
        %v4893 = vunpack.c.l.b16 %v4814
        %v4894 = vunpack.c.h.b16 %v4814
        %v4895 = vunpack.c.l.b16 %v4815
        %v4896 = vunpack.c.h.b16 %v4815
        %v4897 = vunpack.c.l.b16 %v4816
        %v4898 = vunpack.c.h.b16 %v4816
        %v4899 = vunpack.c.l.b16 %v4817
        %v4900 = vunpack.c.h.b16 %v4817
        %v4901 = vunpack.c.l.b16 %v4818
        %v4902 = vunpack.c.h.b16 %v4818
        %v4903 = vunpack.c.l.b16 %v4819
        %v4904 = vunpack.c.h.b16 %v4819
        %v4905 = vunpack.c.l.b16 %v4820
        %v4906 = vunpack.c.h.b16 %v4820
        %v4907 = vpack.c.b16 %v4877, %v4875
        %v4908 = vpack.c.b16 %v4878, %v4876
        %v4909 = vpack.c.b16 %v4881, %v4879
        %v4910 = vpack.c.b16 %v4882, %v4880
        %v4911 = vpack.c.b16 %v4885, %v4883
        %v4912 = vpack.c.b16 %v4886, %v4884
        %v4913 = vpack.c.b16 %v4889, %v4887
        %v4914 = vpack.c.b16 %v4890, %v4888
        %v4915 = vpack.c.b16 %v4893, %v4891
        %v4916 = vpack.c.b16 %v4894, %v4892
        %v4917 = vpack.c.b16 %v4897, %v4895
        %v4918 = vpack.c.b16 %v4898, %v4896
        %v4919 = vpack.c.b16 %v4901, %v4899
        %v4920 = vpack.c.b16 %v4902, %v4900
        %v4921 = vpack.c.b16 %v4905, %v4903
        %v4922 = vpack.c.b16 %v4906, %v4904
        %v4971 = vunpack.c.l.b16 %v4821
        %v4972 = vunpack.c.h.b16 %v4821
        %v4973 = vunpack.c.l.b16 %v4822
        %v4974 = vunpack.c.h.b16 %v4822
        %v4975 = vunpack.c.l.b16 %v4823
        %v4976 = vunpack.c.h.b16 %v4823
        %v4977 = vunpack.c.l.b16 %v4824
        %v4978 = vunpack.c.h.b16 %v4824
        %v4979 = vunpack.c.l.b16 %v4825
        %v4980 = vunpack.c.h.b16 %v4825
        %v4981 = vunpack.c.l.b16 %v4826
        %v4982 = vunpack.c.h.b16 %v4826
        %v4983 = vunpack.c.l.b16 %v4827
        %v4984 = vunpack.c.h.b16 %v4827
        %v4985 = vunpack.c.l.b16 %v4828
        %v4986 = vunpack.c.h.b16 %v4828
        %v4987 = vunpack.c.l.b16 %v4829
        %v4988 = vunpack.c.h.b16 %v4829
        %v4989 = vunpack.c.l.b16 %v4830
        %v4990 = vunpack.c.h.b16 %v4830
        %v4991 = vunpack.c.l.b16 %v4831
        %v4992 = vunpack.c.h.b16 %v4831
        %v4993 = vunpack.c.l.b16 %v4832
        %v4994 = vunpack.c.h.b16 %v4832
        %v4995 = vunpack.c.l.b16 %v4833
        %v4996 = vunpack.c.h.b16 %v4833
        %v4997 = vunpack.c.l.b16 %v4834
        %v4998 = vunpack.c.h.b16 %v4834
        %v4999 = vunpack.c.l.b16 %v4835
        %v5000 = vunpack.c.h.b16 %v4835
        %v5001 = vunpack.c.l.b16 %v4836
        %v5002 = vunpack.c.h.b16 %v4836
        %v5003 = vunpack.c.l.b16 %v4837
        %v5004 = vunpack.c.h.b16 %v4837
        %v5005 = vunpack.c.l.b16 %v4838
        %v5006 = vunpack.c.h.b16 %v4838
        %v5007 = vunpack.c.l.b16 %v4839
        %v5008 = vunpack.c.h.b16 %v4839
        %v5009 = vunpack.c.l.b16 %v4840
        %v5010 = vunpack.c.h.b16 %v4840
        %v5011 = vunpack.c.l.b16 %v4841
        %v5012 = vunpack.c.h.b16 %v4841
        %v5013 = vunpack.c.l.b16 %v4842
        %v5014 = vunpack.c.h.b16 %v4842
        %v5015 = vunpack.c.l.b16 %v4843
        %v5016 = vunpack.c.h.b16 %v4843
        %v5017 = vunpack.c.l.b16 %v4844
        %v5018 = vunpack.c.h.b16 %v4844
        %v5019 = vunpack.c.l.b16 %v4845
        %v5020 = vunpack.c.h.b16 %v4845
        %v5021 = vunpack.c.l.b16 %v4846
        %v5022 = vunpack.c.h.b16 %v4846
        %v5023 = vunpack.c.l.b16 %v4847
        %v5024 = vunpack.c.h.b16 %v4847
        %v5025 = vunpack.c.l.b16 %v4848
        %v5026 = vunpack.c.h.b16 %v4848
        %v5027 = vunpack.c.l.b16 %v4849
        %v5028 = vunpack.c.h.b16 %v4849
        %v5029 = vunpack.c.l.b16 %v4850
        %v5030 = vunpack.c.h.b16 %v4850
        %v5031 = vunpack.c.l.b16 %v4851
        %v5032 = vunpack.c.h.b16 %v4851
        %v5033 = vunpack.c.l.b16 %v4852
        %v5034 = vunpack.c.h.b16 %v4852
        %v5035 = vpack.c.b16 %v4973, %v4971
        %v5036 = vpack.c.b16 %v4974, %v4972
        %v5037 = vpack.c.b16 %v4977, %v4975
        %v5038 = vpack.c.b16 %v4978, %v4976
        %v5039 = vpack.c.b16 %v4981, %v4979
        %v5040 = vpack.c.b16 %v4982, %v4980
        %v5041 = vpack.c.b16 %v4985, %v4983
        %v5042 = vpack.c.b16 %v4986, %v4984
        %v5043 = vpack.c.b16 %v4989, %v4987
        %v5044 = vpack.c.b16 %v4990, %v4988
        %v5045 = vpack.c.b16 %v4993, %v4991
        %v5046 = vpack.c.b16 %v4994, %v4992
        %v5047 = vpack.c.b16 %v4997, %v4995
        %v5048 = vpack.c.b16 %v4998, %v4996
        %v5049 = vpack.c.b16 %v5001, %v4999
        %v5050 = vpack.c.b16 %v5002, %v5000
        %v5051 = vpack.c.b16 %v5005, %v5003
        %v5052 = vpack.c.b16 %v5006, %v5004
        %v5053 = vpack.c.b16 %v5009, %v5007
        %v5054 = vpack.c.b16 %v5010, %v5008
        %v5055 = vpack.c.b16 %v5013, %v5011
        %v5056 = vpack.c.b16 %v5014, %v5012
        %v5057 = vpack.c.b16 %v5017, %v5015
        %v5058 = vpack.c.b16 %v5018, %v5016
        %v5059 = vpack.c.b16 %v5021, %v5019
        %v5060 = vpack.c.b16 %v5022, %v5020
        %v5061 = vpack.c.b16 %v5025, %v5023
        %v5062 = vpack.c.b16 %v5026, %v5024
        %v5063 = vpack.c.b16 %v5029, %v5027
        %v5064 = vpack.c.b16 %v5030, %v5028
        %v5065 = vpack.c.b16 %v5033, %v5031
        %v5066 = vpack.c.b16 %v5034, %v5032
        %5099 = vmatpush.bf16.msra.mxu0 %v5049
        %5100 = vmatpush.bf16.msra.mxu0 %v5047
        %5101 = vmatpush.bf16.msra.mxu0 %v5045
        %5102 = vmatpush.bf16.msra.mxu0 %v5043
        %5103 = vmatpush.bf16.msra.mxu0 %v5041
        %5104 = vmatpush.bf16.msra.mxu0 %v5039
        %5105 = vmatpush.bf16.msra.mxu0 %v5037
        %5106 = vmatpush.bf16.msra.mxu0 %v5035
        %5107 = vmatmul.bf16.gmra.mxu0 %v4907
        %v5108 = vpop.f32.mrf.mxu0
        %v5109 = vadd.f32 %v4855, %v5108
        %v5110 = vpop.f32.mrf.mxu0
        %v5111 = vadd.f32 %v4855, %v5110
        %5112 = vmatmul.bf16.gmra.mxu0 %v4909
        %v5113 = vpop.f32.mrf.mxu0
        %v5114 = vadd.f32 %v4855, %v5113
        %v5115 = vpop.f32.mrf.mxu0
        %v5116 = vadd.f32 %v4855, %v5115
        %5117 = vmatmul.bf16.gmra.mxu0 %v4911
        %v5118 = vpop.f32.mrf.mxu0
        %v5119 = vadd.f32 %v4855, %v5118
        %v5120 = vpop.f32.mrf.mxu0
        %v5121 = vadd.f32 %v4855, %v5120
        %5122 = vmatmul.bf16.gmra.mxu0 %v4913
        %v5123 = vpop.f32.mrf.mxu0
        %v5124 = vadd.f32 %v4855, %v5123
        %v5125 = vpop.f32.mrf.mxu0
        %v5126 = vadd.f32 %v4855, %v5125
        %5127 = vmatmul.bf16.gmra.mxu0 %v4915
        %v5128 = vpop.f32.mrf.mxu0
        %v5129 = vadd.f32 %v4855, %v5128
        %v5130 = vpop.f32.mrf.mxu0
        %v5131 = vadd.f32 %v4855, %v5130
        %5132 = vmatmul.bf16.gmra.mxu0 %v4917
        %v5133 = vpop.f32.mrf.mxu0
        %v5134 = vadd.f32 %v4855, %v5133
        %v5135 = vpop.f32.mrf.mxu0
        %v5136 = vadd.f32 %v4855, %v5135
        %5137 = vmatmul.bf16.gmra.mxu0 %v4919
        %v5138 = vpop.f32.mrf.mxu0
        %v5139 = vadd.f32 %v4855, %v5138
        %v5140 = vpop.f32.mrf.mxu0
        %v5141 = vadd.f32 %v4855, %v5140
        %5142 = vmatmul.bf16.gmra.mxu0 %v4921
        %v5143 = vpop.f32.mrf.mxu0
        %v5144 = vadd.f32 %v4855, %v5143
        %v5145 = vpop.f32.mrf.mxu0
        %v5146 = vadd.f32 %v4855, %v5145
        %5147 = vdwg.mxu0
        %5148 = vmatpush.bf16.msra.mxu0 %v5065
        %5149 = vmatpush.bf16.msra.mxu0 %v5063
        %5150 = vmatpush.bf16.msra.mxu0 %v5061
        %5151 = vmatpush.bf16.msra.mxu0 %v5059
        %5152 = vmatpush.bf16.msra.mxu0 %v5057
        %5153 = vmatpush.bf16.msra.mxu0 %v5055
        %5154 = vmatpush.bf16.msra.mxu0 %v5053
        %5155 = vmatpush.bf16.msra.mxu0 %v5051
        %5156 = vmatmul.bf16.gmra.mxu0 %v4908
        %v5157 = vpop.f32.mrf.mxu0
        %v5158 = vadd.f32 %v5109, %v5157
        %v5159 = vpop.f32.mrf.mxu0
        %v5160 = vadd.f32 %v5111, %v5159
        %5161 = vmatmul.bf16.gmra.mxu0 %v4910
        %v5162 = vpop.f32.mrf.mxu0
        %v5163 = vadd.f32 %v5114, %v5162
        %v5164 = vpop.f32.mrf.mxu0
        %v5165 = vadd.f32 %v5116, %v5164
        %5166 = vmatmul.bf16.gmra.mxu0 %v4912
        %v5167 = vpop.f32.mrf.mxu0
        %v5168 = vadd.f32 %v5119, %v5167
        %v5169 = vpop.f32.mrf.mxu0
        %v5170 = vadd.f32 %v5121, %v5169
        %5171 = vmatmul.bf16.gmra.mxu0 %v4914
        %v5172 = vpop.f32.mrf.mxu0
        %v5173 = vadd.f32 %v5124, %v5172
        %v5174 = vpop.f32.mrf.mxu0
        %v5175 = vadd.f32 %v5126, %v5174
        %5176 = vmatmul.bf16.gmra.mxu0 %v4916
        %v5177 = vpop.f32.mrf.mxu0
        %v5178 = vadd.f32 %v5129, %v5177
        %v5179 = vpop.f32.mrf.mxu0
        %v5180 = vadd.f32 %v5131, %v5179
        %5181 = vmatmul.bf16.gmra.mxu0 %v4918
        %v5182 = vpop.f32.mrf.mxu0
        %v5183 = vadd.f32 %v5134, %v5182
        %v5184 = vpop.f32.mrf.mxu0
        %v5185 = vadd.f32 %v5136, %v5184
        %5186 = vmatmul.bf16.gmra.mxu0 %v4920
        %v5187 = vpop.f32.mrf.mxu0
        %v5188 = vadd.f32 %v5139, %v5187
        %v5189 = vpop.f32.mrf.mxu0
        %v5190 = vadd.f32 %v5141, %v5189
        %5191 = vmatmul.bf16.gmra.mxu0 %v4922
        %v5192 = vpop.f32.mrf.mxu0
        %v5193 = vadd.f32 %v5144, %v5192
        %v5194 = vpop.f32.mrf.mxu0
        %v5195 = vadd.f32 %v5146, %v5194
        %5196 = vdwg.mxu0
        %5197 = vmatpush.bf16.msra.mxu0 %v5050
        %5198 = vmatpush.bf16.msra.mxu0 %v5048
        %5199 = vmatpush.bf16.msra.mxu0 %v5046
        %5200 = vmatpush.bf16.msra.mxu0 %v5044
        %5201 = vmatpush.bf16.msra.mxu0 %v5042
        %5202 = vmatpush.bf16.msra.mxu0 %v5040
        %5203 = vmatpush.bf16.msra.mxu0 %v5038
        %5204 = vmatpush.bf16.msra.mxu0 %v5036
        %5205 = vmatmul.bf16.gmra.mxu0 %v4907
        %v5206 = vpop.f32.mrf.mxu0
        %v5207 = vadd.f32 %v4856, %v5206
        %v5208 = vpop.f32.mrf.mxu0
        %v5209 = vadd.f32 %v4856, %v5208
        %5210 = vmatmul.bf16.gmra.mxu0 %v4909
        %v5211 = vpop.f32.mrf.mxu0
        %v5212 = vadd.f32 %v4856, %v5211
        %v5213 = vpop.f32.mrf.mxu0
        %v5214 = vadd.f32 %v4856, %v5213
        %5215 = vmatmul.bf16.gmra.mxu0 %v4911
        %v5216 = vpop.f32.mrf.mxu0
        %v5217 = vadd.f32 %v4856, %v5216
        %v5218 = vpop.f32.mrf.mxu0
        %v5219 = vadd.f32 %v4856, %v5218
        %5220 = vmatmul.bf16.gmra.mxu0 %v4913
        %v5221 = vpop.f32.mrf.mxu0
        %v5222 = vadd.f32 %v4856, %v5221
        %v5223 = vpop.f32.mrf.mxu0
        %v5224 = vadd.f32 %v4856, %v5223
        %5225 = vmatmul.bf16.gmra.mxu0 %v4915
        %v5226 = vpop.f32.mrf.mxu0
        %v5227 = vadd.f32 %v4856, %v5226
        %v5228 = vpop.f32.mrf.mxu0
        %v5229 = vadd.f32 %v4856, %v5228
        %5230 = vmatmul.bf16.gmra.mxu0 %v4917
        %v5231 = vpop.f32.mrf.mxu0
        %v5232 = vadd.f32 %v4856, %v5231
        %v5233 = vpop.f32.mrf.mxu0
        %v5234 = vadd.f32 %v4856, %v5233
        %5235 = vmatmul.bf16.gmra.mxu0 %v4919
        %v5236 = vpop.f32.mrf.mxu0
        %v5237 = vadd.f32 %v4856, %v5236
        %v5238 = vpop.f32.mrf.mxu0
        %v5239 = vadd.f32 %v4856, %v5238
        %5240 = vmatmul.bf16.gmra.mxu0 %v4921
        %v5241 = vpop.f32.mrf.mxu0
        %v5242 = vadd.f32 %v4856, %v5241
        %v5243 = vpop.f32.mrf.mxu0
        %v5244 = vadd.f32 %v4856, %v5243
        %5245 = vdwg.mxu0
        %5246 = vmatpush.bf16.msra.mxu0 %v5066
        %5247 = vmatpush.bf16.msra.mxu0 %v5064
        %5248 = vmatpush.bf16.msra.mxu0 %v5062
        %5249 = vmatpush.bf16.msra.mxu0 %v5060
        %5250 = vmatpush.bf16.msra.mxu0 %v5058
        %5251 = vmatpush.bf16.msra.mxu0 %v5056
        %5252 = vmatpush.bf16.msra.mxu0 %v5054
        %5253 = vmatpush.bf16.msra.mxu0 %v5052
        %5254 = vmatmul.bf16.gmra.mxu0 %v4908
        %v5255 = vpop.f32.mrf.mxu0
        %v5256 = vadd.f32 %v5207, %v5255
        %v5257 = vpop.f32.mrf.mxu0
        %v5258 = vadd.f32 %v5209, %v5257
        %5259 = vmatmul.bf16.gmra.mxu0 %v4910
        %v5260 = vpop.f32.mrf.mxu0
        %v5261 = vadd.f32 %v5212, %v5260
        %v5262 = vpop.f32.mrf.mxu0
        %v5263 = vadd.f32 %v5214, %v5262
        %5264 = vmatmul.bf16.gmra.mxu0 %v4912
        %v5265 = vpop.f32.mrf.mxu0
        %v5266 = vadd.f32 %v5217, %v5265
        %v5267 = vpop.f32.mrf.mxu0
        %v5268 = vadd.f32 %v5219, %v5267
        %5269 = vmatmul.bf16.gmra.mxu0 %v4914
        %v5270 = vpop.f32.mrf.mxu0
        %v5271 = vadd.f32 %v5222, %v5270
        %v5272 = vpop.f32.mrf.mxu0
        %v5273 = vadd.f32 %v5224, %v5272
        %5274 = vmatmul.bf16.gmra.mxu0 %v4916
        %v5275 = vpop.f32.mrf.mxu0
        %v5276 = vadd.f32 %v5227, %v5275
        %v5277 = vpop.f32.mrf.mxu0
        %v5278 = vadd.f32 %v5229, %v5277
        %5279 = vmatmul.bf16.gmra.mxu0 %v4918
        %v5280 = vpop.f32.mrf.mxu0
        %v5281 = vadd.f32 %v5232, %v5280
        %v5282 = vpop.f32.mrf.mxu0
        %v5283 = vadd.f32 %v5234, %v5282
        %5284 = vmatmul.bf16.gmra.mxu0 %v4920
        %v5285 = vpop.f32.mrf.mxu0
        %v5286 = vadd.f32 %v5237, %v5285
        %v5287 = vpop.f32.mrf.mxu0
        %v5288 = vadd.f32 %v5239, %v5287
        %5289 = vmatmul.bf16.gmra.mxu0 %v4922
        %v5290 = vpop.f32.mrf.mxu0
        %v5291 = vadd.f32 %v5242, %v5290
        %v5292 = vpop.f32.mrf.mxu0
        %v5293 = vadd.f32 %v5244, %v5292
        %5294 = vdwg.mxu0
        %5295 = vst [vmem:[%s250] sm:$0xff] %v5158
        %5296 = vst [vmem:[%s250 + $0x8] sm:$0xff] %v5256
        %5297 = vst [vmem:[%s250 + $0x10] sm:$0xff] %v5160
        %5298 = vst [vmem:[%s250 + $0x18] sm:$0xff] %v5258
        %5299 = vst [vmem:[%s250 + $0x20] sm:$0xff] %v5163
        %5300 = vst [vmem:[%s250 + $0x28] sm:$0xff] %v5261
        %5301 = vst [vmem:[%s250 + $0x30] sm:$0xff] %v5165
        %5302 = vst [vmem:[%s250 + $0x38] sm:$0xff] %v5263
        %5303 = vst [vmem:[%s250 + $0x40] sm:$0xff] %v5168
        %5304 = vst [vmem:[%s250 + $0x48] sm:$0xff] %v5266
        %5305 = vst [vmem:[%s250 + $0x50] sm:$0xff] %v5170
        %5306 = vst [vmem:[%s250 + $0x58] sm:$0xff] %v5268
        %5307 = vst [vmem:[%s250 + $0x60] sm:$0xff] %v5173
        %5308 = vst [vmem:[%s250 + $0x68] sm:$0xff] %v5271
        %5309 = vst [vmem:[%s250 + $0x70] sm:$0xff] %v5175
        %5310 = vst [vmem:[%s250 + $0x78] sm:$0xff] %v5273
        %5311 = vst [vmem:[%s250 + $0x80] sm:$0xff] %v5178
        %5312 = vst [vmem:[%s250 + $0x88] sm:$0xff] %v5276
        %5313 = vst [vmem:[%s250 + $0x90] sm:$0xff] %v5180
        %5314 = vst [vmem:[%s250 + $0x98] sm:$0xff] %v5278
        %5315 = vst [vmem:[%s250 + $0xa0] sm:$0xff] %v5183
        %5316 = vst [vmem:[%s250 + $0xa8] sm:$0xff] %v5281
        %5317 = vst [vmem:[%s250 + $0xb0] sm:$0xff] %v5185
        %5318 = vst [vmem:[%s250 + $0xb8] sm:$0xff] %v5283
        %5319 = vst [vmem:[%s250 + $0xc0] sm:$0xff] %v5188
        %5320 = vst [vmem:[%s250 + $0xc8] sm:$0xff] %v5286
        %5321 = vst [vmem:[%s250 + $0xd0] sm:$0xff] %v5190
        %5322 = vst [vmem:[%s250 + $0xd8] sm:$0xff] %v5288
        %5323 = vst [vmem:[%s250 + $0xe0] sm:$0xff] %v5193
        %5324 = vst [vmem:[%s250 + $0xe8] sm:$0xff] %v5291
        %5325 = vst [vmem:[%s250 + $0xf0] sm:$0xff] %v5195
        %5326 = vst [vmem:[%s250 + $0xf8] sm:$0xff] %v5293
        %s5327 = sand.u32 %s119, 1
        %s5328 = scalar_lea.sflag [#allocation6], %s5327
        %s5329 = sand.u32 %s119, 1
        %s5330 = smul.addr %s5329, 256
        %s5331 = scalar_lea.vmem [#allocation10], %s5330
        // Predicated region
        $region49: #{tpu_custom_call.1} parent=35 // pred_check
          %p5332 = pneg %p129
        $region50: #{tpu_custom_call.1} parent=35 // pred_check_branch
          %5334 = sbr.rel (%p5332) target = $region52
        $region51: #{tpu_custom_call.1} parent=35 // pred_region
          %5336 = vsyncadd %s5328, 0
          %s5337 = smul.addr %s22, 32
          %s5338 = smul.addr %s5337, 8
          %s5339 = scalar_lea.hbm %s4, %s5338
          %s5340 = sshll.u32 %s5331, 4
          %s5341 = int_to_ptr.vmem [resolvable:$true] %s5340
          %s5342 = sshll.u32 %s5339, 4
          %s5343 = int_to_ptr.hbm [resolvable:$true] %s5342
          %5348 = dma.vmem_to_hbm [thread:$0]  %s5341, 4096, %s5343, %s5328, 256, 256, 16
        $region52: #{tpu_custom_call.1} parent=35 // pred_fallthru
          _
      $region36: #{tpu_custom_call.1} parent=5 // pred_fallthru
        _
      %p5349 = scmp.le.s32.totalorder 2, %s17
      // Predicated region
      $region53: #{tpu_custom_call.1} parent=5 // pred_check
        %p5350 = pneg %p5349
      $region54: #{tpu_custom_call.1} parent=5 // pred_check_branch
        %5352 = sbr.rel (%p5350) target = $region56
      $region55: #{tpu_custom_call.1} parent=5 // pred_region
        %s5353 = ssub.s32 %s17, 2
        // Predicated region
        $region57: #{tpu_custom_call.1} parent=55 // pred_check
          %p5354 = pneg %p135
        $region58: #{tpu_custom_call.1} parent=55 // pred_check_branch
          %5356 = sbr.rel (%p5354) target = $region60
        $region59: #{tpu_custom_call.1} parent=55 // pred_region
          %s5357 = sand.u32 %s120, 1
          %s5358 = scalar_lea.sflag [#allocation6], %s5357
          %s5359 = sand.u32 %s120, 1
          %s5360 = smul.addr %s5359, 256
          %s5361 = scalar_lea.vmem [#allocation10], %s5360
          %5363 = dma.done %s5358, 4096
        $region60: #{tpu_custom_call.1} parent=55 // pred_fallthru
          _
      $region56: #{tpu_custom_call.1} parent=5 // pred_fallthru
        _
    $region6: #{tpu_custom_call.1} parent=1 // loop_footer
      %s21 = sadd.s32 1, %s17
    $region7: #{tpu_custom_call.1} parent=1 // loop_footer_branch
      %16 = sbr.rel target = $region3
    $region8: #{tpu_custom_call.1} parent=1 // loop_exit
      _
    %5364 = vsyncpa [#allocation5], 1
    %s5365 = scalar_lea.sflag [#allocation5], 1
    %5366 = vsyncpa %s5365, 1
    %5367 = vsyncpa [#allocation8], 1
    %5368 = vsyncpa [#allocation6], 1
    %s5369 = scalar_lea.sflag [#allocation6], 1
    %5370 = vsyncpa %s5369, 1

</llo_original>
